<compile_context>
chip_gen: v7x
topology: tpu7x:2x2x1
jax: 0.10.0
libtpu: 0.0.40
codegen_flags: <defaults>
</compile_context>

<pallas_src>
import jax
import jax.numpy as jnp
from jax.experimental import pallas as pl
from jax.experimental.pallas import tpu as pltpu

# ---- module config (scaled-down; original uses RESIZED_DIM=672) ----
TILE_FACTOR = 3
RESIZED_DIM = 48                          # original: 672
TILED_DIM = RESIZED_DIM // TILE_FACTOR    # 16  (original: 224)
N_TILE_ROWS = TILE_FACTOR                 # 3
N_TILE_COLS = 2 * TILE_FACTOR             # 6   -> 18 tiles per batch element
HIDDEN1, HIDDEN2, NUM_COEFFS = 64, 32, 4


# ---------------- interpolation matrices (wrapper glue, tiny, shape-static) ----------------
def _interp_matrix(out_size, in_size):
    # PyTorch F.interpolate(mode='bilinear', align_corners=False) source-index formula.
    scale = in_size / out_size
    dst = jnp.arange(out_size)
    src = jnp.maximum((dst.astype(jnp.float32) + 0.5) * scale - 0.5, 0.0)
    i0 = jnp.clip(jnp.floor(src).astype(jnp.int32), 0, in_size - 1)
    i1 = jnp.minimum(i0 + 1, in_size - 1)
    w1 = src - i0.astype(jnp.float32)
    w0 = 1.0 - w1
    M = jnp.zeros((out_size, in_size), jnp.float32)
    M = M.at[dst, i0].add(w0)
    M = M.at[dst, i1].add(w1)
    return M                                               # (out_size, in_size)


def _row_interp_tiled(out_h, in_h, channels):
    # A_big[(i*C + c)*T + p, c'*H + h] = A[i*T + p, h] * delta(c, c')
    # -> one matmul does the row interpolation for all channels at once, with output rows already
    #    ordered (tile_row, channel, row-in-tile): a tile is then a contiguous sublane slice.
    T = TILED_DIM
    A = _interp_matrix(out_h, in_h)                        # (nh*T, H)
    A3 = A.reshape(N_TILE_ROWS, T, in_h)                   # (nh, T, H)
    eye = jnp.eye(channels, dtype=A.dtype)                 # (C, C)
    A_big = jnp.einsum('iph,cd->icpdh', A3, eye)           # (nh, C, T, C, H)
    return A_big.reshape(N_TILE_ROWS * channels * T, channels * in_h)


# ---------------- Pallas kernel 1: log_softmax + bilinear resize + tile extraction ----------------
def _make_preprocess_kernel(C, H):
    T = TILED_DIM

    def kernel(x_ref, t_ref, abig_ref, bt_ref, ti_ref, tt_ref):
        x = x_ref[...]                                     # (C*H, W) f32, channels = row blocks
        # --- log_softmax over the channel dim (dim=1 of NCHW), numerically stable ---
        xs = [x[c * H:(c + 1) * H, :] for c in range(C)]   # static sublane-aligned slices
        m = xs[0]
        for xc in xs[1:]:
            m = jnp.maximum(m, xc)
        sexp = jnp.exp(xs[0] - m)
        for xc in xs[1:]:
            sexp = sexp + jnp.exp(xc - m)
        lse = m + jnp.log(sexp)                            # (H, W)

        # --- assemble [logp ; target] stacked along sublanes (no separate logp materialization) ---
        pieces = [xc - lse for xc in xs] + [t_ref[...]]    # C x (H,W) logp blocks + (C*H,W) target
        stacked = jnp.concatenate(pieces, axis=0).astype(jnp.bfloat16)   # (2*C*H, W)

        # --- column interpolation FIRST: one full-width bf16 matmul for inputs AND targets ---
        col = jnp.dot(stacked, bt_ref[...],
                      preferred_element_type=jnp.float32)  # (2*C*H, nw*T)
        col = col.astype(jnp.bfloat16)

        # --- row interpolation: block-diagonal interp matrix, bf16 operands, f32 accumulation ---
        abig = abig_ref[...]                               # (nh*C*T, C*H) bf16
        r_in = jnp.dot(abig, col[:C * H, :], preferred_element_type=jnp.float32)   # (nh*C*T, nw*T)
        r_tg = jnp.dot(abig, col[C * H:, :], preferred_element_type=jnp.float32)
        r_in = r_in.astype(jnp.bfloat16)                   # bf16 tiles intermediate
        r_tg = r_tg.astype(jnp.bfloat16)

        # --- tile writeback: rows of r_* are ordered (tile_row, channel, row-in-tile), so each
        #     tile is a contiguous sublane block of the per-tile-column lane slice.  The flatten to
        #     per-tile feature rows then happens for free in the wrapper reshape. ---
        for j in range(N_TILE_COLS):
            cin_j = r_in[:, j * T:(j + 1) * T]             # (nh*C*T, T)
            ctg_j = r_tg[:, j * T:(j + 1) * T]
            for i in range(N_TILE_ROWS):
                lo = i * C * T
                ti_ref[i, j, :, :] = cin_j[lo:lo + C * T, :]
                tt_ref[i, j, :, :] = ctg_j[lo:lo + C * T, :]

    return kernel


# ---------------- Pallas kernel 2: InverseNet MLP + per-tile L2 norms (gridded over batch) --------
def _mlp_loss_kernel(fi_ref, ft_ref, w1i_ref, w1t_ref, b1_ref, w2_ref, b2_ref,
                     w3_ref, b3_ref, o_ref):
    # concat(inputs_feats, targets_feats) @ W1  ==  feats_in @ W1_in + feats_tg @ W1_tg
    # feats are already bf16 (stored bf16 by kernel 1); W1 halves are resident bf16.
    h1 = jnp.dot(fi_ref[...], w1i_ref[...], preferred_element_type=jnp.float32)
    h1 = h1 + jnp.dot(ft_ref[...], w1t_ref[...], preferred_element_type=jnp.float32)
    h1 = jnp.maximum(h1 + b1_ref[...], 0.0)                                           # (18, H1)
    h2 = jnp.maximum(
        jnp.dot(h1, w2_ref[...], preferred_element_type=jnp.float32) + b2_ref[...], 0.0)
    coeffs = jnp.dot(h2, w3_ref[...], preferred_element_type=jnp.float32) + b3_ref[...]  # (18, 4)
    # square -> sum over dim=1 -> sqrt   (mean over all 18*B tiles happens in the wrapper)
    o_ref[...] = jnp.sqrt(jnp.sum(coeffs * coeffs, axis=1, keepdims=True))             # (18, 1)


# ---------------- full forward ----------------
@jax.jit
def inverse_transform_2d(inputs, targets, params):
    B, C, H, W = inputs.shape
    R, T, nh, nw = RESIZED_DIM, TILED_DIM, N_TILE_ROWS, N_TILE_COLS
    w1, b1, w2, b2, w3, b3 = params
    feat_dim = C * T * T
    w1_in = w1[:feat_dim].astype(jnp.bfloat16)             # split "concat" weight halves
    w1_tg = w1[feat_dim:].astype(jnp.bfloat16)

    abig = _row_interp_tiled(R, H, C).astype(jnp.bfloat16)          # (nh*C*T, C*H) bf16
    bt = _interp_matrix(2 * R, W).T.astype(jnp.bfloat16)            # (W, nw*T)     bf16

    x = inputs.reshape(B, C * H, W).astype(jnp.float32)    # free row-major reshape
    t = targets.reshape(B, C * H, W).astype(jnp.float32)

    tiles_shape = jax.ShapeDtypeStruct((B, nh, nw, C * T, T), jnp.bfloat16)
    tiles_in, tiles_tg = pl.pallas_call(
        _make_preprocess_kernel(C, H),
        out_shape=(tiles_shape, tiles_shape),
        grid=(B,),
        in_specs=[
            pl.BlockSpec((None, C * H, W), lambda b: (b, 0, 0)),
            pl.BlockSpec((None, C * H, W), lambda b: (b, 0, 0)),
            pl.BlockSpec((nh * C * T, C * H), lambda b: (0, 0)),    # resident across grid
            pl.BlockSpec((W, nw * T), lambda b: (0, 0)),            # resident across grid
        ],
        out_specs=(
            pl.BlockSpec((None, nh, nw, C * T, T), lambda b: (b, 0, 0, 0, 0)),
            pl.BlockSpec((None, nh, nw, C * T, T), lambda b: (b, 0, 0, 0, 0)),
        ),
        compiler_params=pltpu.CompilerParams(dimension_semantics=("parallel",)),
    )(x, t, abig, bt)
    # NOTE: at the original 672x1344 scale the per-batch slabs are ~13.8 MiB (f32) each; add a
    # tile-row grid axis (slab-wise output blocks) and set
    # pltpu.CompilerParams(vmem_limit_bytes=...) to stay inside v7x's 64 MiB VMEM.

    # FREE row-major reshapes: (B, nh, nw, C*T, T) -> (B, 18, C*T*T): one lane-dense feature row
    # per tile, features in PyTorch flatten order (c, p, q).  Row order is (batch, tile) — a
    # permutation of PyTorch's (tile, batch) concat order, which leaves the mean-of-norms loss
    # unchanged.
    feats_in = tiles_in.reshape(B, nh * nw, feat_dim)
    feats_tg = tiles_tg.reshape(B, nh * nw, feat_dim)

    norms = pl.pallas_call(
        _mlp_loss_kernel,
        out_shape=jax.ShapeDtypeStruct((B, nh * nw, 1), jnp.float32),
        grid=(B,),
        in_specs=[
            pl.BlockSpec((None, nh * nw, feat_dim), lambda b: (b, 0, 0)),
            pl.BlockSpec((None, nh * nw, feat_dim), lambda b: (b, 0, 0)),
            pl.BlockSpec((feat_dim, HIDDEN1), lambda b: (0, 0)),    # W1 halves resident
            pl.BlockSpec((feat_dim, HIDDEN1), lambda b: (0, 0)),
            pl.BlockSpec((1, HIDDEN1), lambda b: (0, 0)),
            pl.BlockSpec((HIDDEN1, HIDDEN2), lambda b: (0, 0)),
            pl.BlockSpec((1, HIDDEN2), lambda b: (0, 0)),
            pl.BlockSpec((HIDDEN2, NUM_COEFFS), lambda b: (0, 0)),
            pl.BlockSpec((1, NUM_COEFFS), lambda b: (0, 0)),
        ],
        out_specs=pl.BlockSpec((None, nh * nw, 1), lambda b: (b, 0, 0)),
        compiler_params=pltpu.CompilerParams(dimension_semantics=("parallel",)),
    )(feats_in, feats_tg, w1_in, w1_tg, b1, w2, b2, w3, b3)
    # NOTE: at the original scale feat_dim = C*224*224 and the bf16 W1 halves are ~25.7 MiB each;
    # block the feature (K) axis with an f32 VMEM accumulator + pl.when init/finalize there.

    return jnp.mean(norms)     # mean over all 18*B tiles (tiny XLA reduction)


def init_inversenet_params(key, in_features):
    k1, k2, k3, k4, k5, k6 = jax.random.split(key, 6)
    w1 = jax.random.normal(k1, (in_features, HIDDEN1), jnp.float32) * 0.02
    b1 = jax.random.normal(k2, (1, HIDDEN1), jnp.float32) * 0.01
    w2 = jax.random.normal(k3, (HIDDEN1, HIDDEN2), jnp.float32) * 0.05
    b2 = jax.random.normal(k4, (1, HIDDEN2), jnp.float32) * 0.01
    w3 = jax.random.normal(k5, (HIDDEN2, NUM_COEFFS), jnp.float32) * 0.05
    b3 = jax.random.normal(k6, (1, NUM_COEFFS), jnp.float32) * 0.01
    return (w1, b1, w2, b2, w3, b3)


if __name__ == "__main__":
    key = jax.random.PRNGKey(0)
    kx, kt, kp = jax.random.split(key, 3)
    B, C, H, W = 2, 4, 16, 16
    inputs = jax.random.normal(kx, (B, C, H, W), jnp.float32)
    targets = jax.random.normal(kt, (B, C, H, W), jnp.float32)
    params = init_inversenet_params(kp, 2 * C * TILED_DIM * TILED_DIM)

    loss = inverse_transform_2d(inputs, targets, params)
    jax.block_until_ready(loss)
    assert loss.shape == () and bool(jnp.isfinite(loss))
    print("KERNEL_OK")
</pallas_src>

<mosaic_0001>
module attributes {stable_mosaic.version = 11 : i64} {
  func.func private @main(%arg0: i32) attributes {dimension_semantics = [#tpu.dimension_semantics<core_parallel>], iteration_bounds = array<i64: 2>, tpu.core_type = #tpu.core_type<sc_scalar_subcore>, window_params = []} {
    return
  }
}

module attributes {stable_mosaic.version = 11 : i64} {
  func.func private @main(%arg0: i32) attributes {dimension_semantics = [#tpu.dimension_semantics<core_parallel>], iteration_bounds = array<i64: 2>, tpu.core_type = #tpu.core_type<sc_scalar_subcore>, window_params = []} {
    return
  }
}

module attributes {stable_mosaic.version = 11 : i64} {
  func.func @kernel(%arg0: i32, %arg1: memref<1x64x16xf32, #tpu.memory_space<vmem>>, %arg2: memref<1x64x16xf32, #tpu.memory_space<vmem>>, %arg3: memref<192x64xbf16, #tpu.memory_space<vmem>>, %arg4: memref<16x96xbf16, #tpu.memory_space<vmem>>, %arg5: memref<1x3x6x64x16xbf16, #tpu.memory_space<vmem>>, %arg6: memref<1x3x6x64x16xbf16, #tpu.memory_space<vmem>>) attributes {dimension_semantics = [#tpu.dimension_semantics<parallel>], iteration_bounds = array<i64: 2>, scalar_prefetch = 0 : i64, scratch_operands = 0 : i64, tpu.core_type = #tpu.core_type<tc>, window_params = [{transform_indices = @transform_0, window_bounds = array<i64: 1, 64, 16>}, {transform_indices = @transform_1, window_bounds = array<i64: 1, 64, 16>}, {pipeline_mode = #tpu.pipeline_mode<synchronous>, transform_indices = @transform_2, window_bounds = array<i64: 192, 64>}, {pipeline_mode = #tpu.pipeline_mode<synchronous>, transform_indices = @transform_3, window_bounds = array<i64: 16, 96>}, {transform_indices = @transform_4, window_bounds = array<i64: 1, 3, 6, 64, 16>}, {transform_indices = @transform_5, window_bounds = array<i64: 1, 3, 6, 64, 16>}]} {
    %c0 = arith.constant 0 : index
    %c0_0 = arith.constant 0 : index
    %c0_1 = arith.constant 0 : index
    %0 = vector.load %arg1[%c0, %c0_0, %c0_1] : memref<1x64x16xf32, #tpu.memory_space<vmem>>, vector<1x64x16xf32>
    %1 = vector.shape_cast %0 : vector<1x64x16xf32> to vector<64x16xf32>
    %2 = vector.extract_strided_slice %1 {offsets = [0, 0], sizes = [16, 16], strides = [1, 1]} : vector<64x16xf32> to vector<16x16xf32>
    %3 = vector.extract_strided_slice %1 {offsets = [16, 0], sizes = [16, 16], strides = [1, 1]} : vector<64x16xf32> to vector<16x16xf32>
    %4 = vector.extract_strided_slice %1 {offsets = [32, 0], sizes = [16, 16], strides = [1, 1]} : vector<64x16xf32> to vector<16x16xf32>
    %5 = vector.extract_strided_slice %1 {offsets = [48, 0], sizes = [16, 16], strides = [1, 1]} : vector<64x16xf32> to vector<16x16xf32>
    %6 = arith.maximumf %2, %3 : vector<16x16xf32>
    %7 = arith.maximumf %6, %4 : vector<16x16xf32>
    %8 = arith.maximumf %7, %5 : vector<16x16xf32>
    %9 = arith.subf %2, %8 : vector<16x16xf32>
    %10 = math.exp %9 : vector<16x16xf32>
    %11 = arith.subf %3, %8 : vector<16x16xf32>
    %12 = math.exp %11 : vector<16x16xf32>
    %13 = arith.addf %10, %12 : vector<16x16xf32>
    %14 = arith.subf %4, %8 : vector<16x16xf32>
    %15 = math.exp %14 : vector<16x16xf32>
    %16 = arith.addf %13, %15 : vector<16x16xf32>
    %17 = arith.subf %5, %8 : vector<16x16xf32>
    %18 = math.exp %17 : vector<16x16xf32>
    %19 = arith.addf %16, %18 : vector<16x16xf32>
    %20 = math.log %19 : vector<16x16xf32>
    %21 = arith.addf %8, %20 : vector<16x16xf32>
    %22 = arith.subf %2, %21 : vector<16x16xf32>
    %23 = arith.subf %3, %21 : vector<16x16xf32>
    %24 = arith.subf %4, %21 : vector<16x16xf32>
    %25 = arith.subf %5, %21 : vector<16x16xf32>
    %c0_2 = arith.constant 0 : index
    %c0_3 = arith.constant 0 : index
    %c0_4 = arith.constant 0 : index
    %26 = vector.load %arg2[%c0_2, %c0_3, %c0_4] : memref<1x64x16xf32, #tpu.memory_space<vmem>>, vector<1x64x16xf32>
    %27 = vector.shape_cast %26 : vector<1x64x16xf32> to vector<64x16xf32>
    %28 = tpu.concatenate %22, %23, %24, %25, %27 in 0 : vector<16x16xf32>, vector<16x16xf32>, vector<16x16xf32>, vector<16x16xf32>, vector<64x16xf32> -> vector<128x16xf32>
    %29 = arith.truncf %28 : vector<128x16xf32> to vector<128x16xbf16>
    %c0_5 = arith.constant 0 : index
    %c0_6 = arith.constant 0 : index
    %30 = vector.load %arg4[%c0_5, %c0_6] : memref<16x96xbf16, #tpu.memory_space<vmem>>, vector<16x96xbf16>
    %cst = arith.constant dense<0.000000e+00> : vector<128x96xf32>
    %31 = tpu.matmul %29, %30, %cst {dimension_numbers = #tpu.dot_dimension_numbers<[1], [0], [0], [1], [0, 0, 1, 1], [], []>} : vector<128x16xbf16>, vector<16x96xbf16>, vector<128x96xf32> -> vector<128x96xf32>
    %32 = arith.truncf %31 : vector<128x96xf32> to vector<128x96xbf16>
    %c0_7 = arith.constant 0 : index
    %c0_8 = arith.constant 0 : index
    %33 = vector.load %arg3[%c0_7, %c0_8] : memref<192x64xbf16, #tpu.memory_space<vmem>>, vector<192x64xbf16>
    %34 = vector.extract_strided_slice %32 {offsets = [0, 0], sizes = [64, 96], strides = [1, 1]} : vector<128x96xbf16> to vector<64x96xbf16>
    %cst_9 = arith.constant dense<0.000000e+00> : vector<192x96xf32>
    %35 = tpu.matmul %33, %34, %cst_9 {dimension_numbers = #tpu.dot_dimension_numbers<[1], [0], [0], [1], [0, 0, 1, 1], [], []>} : vector<192x64xbf16>, vector<64x96xbf16>, vector<192x96xf32> -> vector<192x96xf32>
    %36 = vector.extract_strided_slice %32 {offsets = [64, 0], sizes = [64, 96], strides = [1, 1]} : vector<128x96xbf16> to vector<64x96xbf16>
    %cst_10 = arith.constant dense<0.000000e+00> : vector<192x96xf32>
    %37 = tpu.matmul %33, %36, %cst_10 {dimension_numbers = #tpu.dot_dimension_numbers<[1], [0], [0], [1], [0, 0, 1, 1], [], []>} : vector<192x64xbf16>, vector<64x96xbf16>, vector<192x96xf32> -> vector<192x96xf32>
    %38 = arith.truncf %35 : vector<192x96xf32> to vector<192x96xbf16>
    %39 = arith.truncf %37 : vector<192x96xf32> to vector<192x96xbf16>
    %40 = vector.extract_strided_slice %38 {offsets = [0, 0], sizes = [192, 16], strides = [1, 1]} : vector<192x96xbf16> to vector<192x16xbf16>
    %41 = vector.extract_strided_slice %39 {offsets = [0, 0], sizes = [192, 16], strides = [1, 1]} : vector<192x96xbf16> to vector<192x16xbf16>
    %42 = vector.extract_strided_slice %40 {offsets = [0, 0], sizes = [64, 16], strides = [1, 1]} : vector<192x16xbf16> to vector<64x16xbf16>
    %c0_11 = arith.constant 0 : index
    %c0_12 = arith.constant 0 : index
    %c0_13 = arith.constant 0 : index
    %c0_14 = arith.constant 0 : index
    %c0_15 = arith.constant 0 : index
    %43 = vector.load %arg5[%c0_11, %c0_12, %c0_13, %c0_14, %c0_15] : memref<1x3x6x64x16xbf16, #tpu.memory_space<vmem>>, vector<1x1x1x64x16xbf16>
    %44 = vector.shape_cast %43 : vector<1x1x1x64x16xbf16> to vector<64x16xbf16>
    %45 = vector.shape_cast %42 : vector<64x16xbf16> to vector<1x1x1x64x16xbf16>
    tpu.vector_store %arg5[%c0_11, %c0_12, %c0_13, %c0_14, %c0_15], %45 {strides = array<i32>} : memref<1x3x6x64x16xbf16, #tpu.memory_space<vmem>>, vector<1x1x1x64x16xbf16>,
    %46 = vector.extract_strided_slice %41 {offsets = [0, 0], sizes = [64, 16], strides = [1, 1]} : vector<192x16xbf16> to vector<64x16xbf16>
    %c0_16 = arith.constant 0 : index
    %c0_17 = arith.constant 0 : index
    %c0_18 = arith.constant 0 : index
    %c0_19 = arith.constant 0 : index
    %c0_20 = arith.constant 0 : index
    %47 = vector.load %arg6[%c0_16, %c0_17, %c0_18, %c0_19, %c0_20] : memref<1x3x6x64x16xbf16, #tpu.memory_space<vmem>>, vector<1x1x1x64x16xbf16>
    %48 = vector.shape_cast %47 : vector<1x1x1x64x16xbf16> to vector<64x16xbf16>
    %49 = vector.shape_cast %46 : vector<64x16xbf16> to vector<1x1x1x64x16xbf16>
    tpu.vector_store %arg6[%c0_16, %c0_17, %c0_18, %c0_19, %c0_20], %49 {strides = array<i32>} : memref<1x3x6x64x16xbf16, #tpu.memory_space<vmem>>, vector<1x1x1x64x16xbf16>,
    %50 = vector.extract_strided_slice %40 {offsets = [64, 0], sizes = [64, 16], strides = [1, 1]} : vector<192x16xbf16> to vector<64x16xbf16>
    %c0_21 = arith.constant 0 : index
    %c1 = arith.constant 1 : index
    %c0_22 = arith.constant 0 : index
    %c0_23 = arith.constant 0 : index
    %c0_24 = arith.constant 0 : index
    %51 = vector.load %arg5[%c0_21, %c1, %c0_22, %c0_23, %c0_24] : memref<1x3x6x64x16xbf16, #tpu.memory_space<vmem>>, vector<1x1x1x64x16xbf16>
    %52 = vector.shape_cast %51 : vector<1x1x1x64x16xbf16> to vector<64x16xbf16>
    %53 = vector.shape_cast %50 : vector<64x16xbf16> to vector<1x1x1x64x16xbf16>
    tpu.vector_store %arg5[%c0_21, %c1, %c0_22, %c0_23, %c0_24], %53 {strides = array<i32>} : memref<1x3x6x64x16xbf16, #tpu.memory_space<vmem>>, vector<1x1x1x64x16xbf16>,
    %54 = vector.extract_strided_slice %41 {offsets = [64, 0], sizes = [64, 16], strides = [1, 1]} : vector<192x16xbf16> to vector<64x16xbf16>
    %c0_25 = arith.constant 0 : index
    %c1_26 = arith.constant 1 : index
    %c0_27 = arith.constant 0 : index
    %c0_28 = arith.constant 0 : index
    %c0_29 = arith.constant 0 : index
    %55 = vector.load %arg6[%c0_25, %c1_26, %c0_27, %c0_28, %c0_29] : memref<1x3x6x64x16xbf16, #tpu.memory_space<vmem>>, vector<1x1x1x64x16xbf16>
    %56 = vector.shape_cast %55 : vector<1x1x1x64x16xbf16> to vector<64x16xbf16>
    %57 = vector.shape_cast %54 : vector<64x16xbf16> to vector<1x1x1x64x16xbf16>
    tpu.vector_store %arg6[%c0_25, %c1_26, %c0_27, %c0_28, %c0_29], %57 {strides = array<i32>} : memref<1x3x6x64x16xbf16, #tpu.memory_space<vmem>>, vector<1x1x1x64x16xbf16>,
    %58 = vector.extract_strided_slice %40 {offsets = [128, 0], sizes = [64, 16], strides = [1, 1]} : vector<192x16xbf16> to vector<64x16xbf16>
    %c0_30 = arith.constant 0 : index
    %c2 = arith.constant 2 : index
    %c0_31 = arith.constant 0 : index
    %c0_32 = arith.constant 0 : index
    %c0_33 = arith.constant 0 : index
    %59 = vector.load %arg5[%c0_30, %c2, %c0_31, %c0_32, %c0_33] : memref<1x3x6x64x16xbf16, #tpu.memory_space<vmem>>, vector<1x1x1x64x16xbf16>
    %60 = vector.shape_cast %59 : vector<1x1x1x64x16xbf16> to vector<64x16xbf16>
    %61 = vector.shape_cast %58 : vector<64x16xbf16> to vector<1x1x1x64x16xbf16>
    tpu.vector_store %arg5[%c0_30, %c2, %c0_31, %c0_32, %c0_33], %61 {strides = array<i32>} : memref<1x3x6x64x16xbf16, #tpu.memory_space<vmem>>, vector<1x1x1x64x16xbf16>,
    %62 = vector.extract_strided_slice %41 {offsets = [128, 0], sizes = [64, 16], strides = [1, 1]} : vector<192x16xbf16> to vector<64x16xbf16>
    %c0_34 = arith.constant 0 : index
    %c2_35 = arith.constant 2 : index
    %c0_36 = arith.constant 0 : index
    %c0_37 = arith.constant 0 : index
    %c0_38 = arith.constant 0 : index
    %63 = vector.load %arg6[%c0_34, %c2_35, %c0_36, %c0_37, %c0_38] : memref<1x3x6x64x16xbf16, #tpu.memory_space<vmem>>, vector<1x1x1x64x16xbf16>
    %64 = vector.shape_cast %63 : vector<1x1x1x64x16xbf16> to vector<64x16xbf16>
    %65 = vector.shape_cast %62 : vector<64x16xbf16> to vector<1x1x1x64x16xbf16>
    tpu.vector_store %arg6[%c0_34, %c2_35, %c0_36, %c0_37, %c0_38], %65 {strides = array<i32>} : memref<1x3x6x64x16xbf16, #tpu.memory_space<vmem>>, vector<1x1x1x64x16xbf16>,
    %66 = vector.extract_strided_slice %38 {offsets = [0, 16], sizes = [192, 16], strides = [1, 1]} : vector<192x96xbf16> to vector<192x16xbf16>
    %67 = vector.extract_strided_slice %39 {offsets = [0, 16], sizes = [192, 16], strides = [1, 1]} : vector<192x96xbf16> to vector<192x16xbf16>
    %68 = vector.extract_strided_slice %66 {offsets = [0, 0], sizes = [64, 16], strides = [1, 1]} : vector<192x16xbf16> to vector<64x16xbf16>
    %c0_39 = arith.constant 0 : index
    %c0_40 = arith.constant 0 : index
    %c1_41 = arith.constant 1 : index
    %c0_42 = arith.constant 0 : index
    %c0_43 = arith.constant 0 : index
    %69 = vector.load %arg5[%c0_39, %c0_40, %c1_41, %c0_42, %c0_43] : memref<1x3x6x64x16xbf16, #tpu.memory_space<vmem>>, vector<1x1x1x64x16xbf16>
    %70 = vector.shape_cast %69 : vector<1x1x1x64x16xbf16> to vector<64x16xbf16>
    %71 = vector.shape_cast %68 : vector<64x16xbf16> to vector<1x1x1x64x16xbf16>
    tpu.vector_store %arg5[%c0_39, %c0_40, %c1_41, %c0_42, %c0_43], %71 {strides = array<i32>} : memref<1x3x6x64x16xbf16, #tpu.memory_space<vmem>>, vector<1x1x1x64x16xbf16>,
    %72 = vector.extract_strided_slice %67 {offsets = [0, 0], sizes = [64, 16], strides = [1, 1]} : vector<192x16xbf16> to vector<64x16xbf16>
    %c0_44 = arith.constant 0 : index
    %c0_45 = arith.constant 0 : index
    %c1_46 = arith.constant 1 : index
    %c0_47 = arith.constant 0 : index
    %c0_48 = arith.constant 0 : index
    %73 = vector.load %arg6[%c0_44, %c0_45, %c1_46, %c0_47, %c0_48] : memref<1x3x6x64x16xbf16, #tpu.memory_space<vmem>>, vector<1x1x1x64x16xbf16>
    %74 = vector.shape_cast %73 : vector<1x1x1x64x16xbf16> to vector<64x16xbf16>
    %75 = vector.shape_cast %72 : vector<64x16xbf16> to vector<1x1x1x64x16xbf16>
    tpu.vector_store %arg6[%c0_44, %c0_45, %c1_46, %c0_47, %c0_48], %75 {strides = array<i32>} : memref<1x3x6x64x16xbf16, #tpu.memory_space<vmem>>, vector<1x1x1x64x16xbf16>,
    %76 = vector.extract_strided_slice %66 {offsets = [64, 0], sizes = [64, 16], strides = [1, 1]} : vector<192x16xbf16> to vector<64x16xbf16>
    %c0_49 = arith.constant 0 : index
    %c1_50 = arith.constant 1 : index
    %c1_51 = arith.constant 1 : index
    %c0_52 = arith.constant 0 : index
    %c0_53 = arith.constant 0 : index
    %77 = vector.load %arg5[%c0_49, %c1_50, %c1_51, %c0_52, %c0_53] : memref<1x3x6x64x16xbf16, #tpu.memory_space<vmem>>, vector<1x1x1x64x16xbf16>
    %78 = vector.shape_cast %77 : vector<1x1x1x64x16xbf16> to vector<64x16xbf16>
    %79 = vector.shape_cast %76 : vector<64x16xbf16> to vector<1x1x1x64x16xbf16>
    tpu.vector_store %arg5[%c0_49, %c1_50, %c1_51, %c0_52, %c0_53], %79 {strides = array<i32>} : memref<1x3x6x64x16xbf16, #tpu.memory_space<vmem>>, vector<1x1x1x64x16xbf16>,
    %80 = vector.extract_strided_slice %67 {offsets = [64, 0], sizes = [64, 16], strides = [1, 1]} : vector<192x16xbf16> to vector<64x16xbf16>
    %c0_54 = arith.constant 0 : index
    %c1_55 = arith.constant 1 : index
    %c1_56 = arith.constant 1 : index
    %c0_57 = arith.constant 0 : index
    %c0_58 = arith.constant 0 : index
    %81 = vector.load %arg6[%c0_54, %c1_55, %c1_56, %c0_57, %c0_58] : memref<1x3x6x64x16xbf16, #tpu.memory_space<vmem>>, vector<1x1x1x64x16xbf16>
    %82 = vector.shape_cast %81 : vector<1x1x1x64x16xbf16> to vector<64x16xbf16>
    %83 = vector.shape_cast %80 : vector<64x16xbf16> to vector<1x1x1x64x16xbf16>
    tpu.vector_store %arg6[%c0_54, %c1_55, %c1_56, %c0_57, %c0_58], %83 {strides = array<i32>} : memref<1x3x6x64x16xbf16, #tpu.memory_space<vmem>>, vector<1x1x1x64x16xbf16>,
    %84 = vector.extract_strided_slice %66 {offsets = [128, 0], sizes = [64, 16], strides = [1, 1]} : vector<192x16xbf16> to vector<64x16xbf16>
    %c0_59 = arith.constant 0 : index
    %c2_60 = arith.constant 2 : index
    %c1_61 = arith.constant 1 : index
    %c0_62 = arith.constant 0 : index
    %c0_63 = arith.constant 0 : index
    %85 = vector.load %arg5[%c0_59, %c2_60, %c1_61, %c0_62, %c0_63] : memref<1x3x6x64x16xbf16, #tpu.memory_space<vmem>>, vector<1x1x1x64x16xbf16>
    %86 = vector.shape_cast %85 : vector<1x1x1x64x16xbf16> to vector<64x16xbf16>
    %87 = vector.shape_cast %84 : vector<64x16xbf16> to vector<1x1x1x64x16xbf16>
    tpu.vector_store %arg5[%c0_59, %c2_60, %c1_61, %c0_62, %c0_63], %87 {strides = array<i32>} : memref<1x3x6x64x16xbf16, #tpu.memory_space<vmem>>, vector<1x1x1x64x16xbf16>,
    %88 = vector.extract_strided_slice %67 {offsets = [128, 0], sizes = [64, 16], strides = [1, 1]} : vector<192x16xbf16> to vector<64x16xbf16>
    %c0_64 = arith.constant 0 : index
    %c2_65 = arith.constant 2 : index
    %c1_66 = arith.constant 1 : index
    %c0_67 = arith.constant 0 : index
    %c0_68 = arith.constant 0 : index
    %89 = vector.load %arg6[%c0_64, %c2_65, %c1_66, %c0_67, %c0_68] : memref<1x3x6x64x16xbf16, #tpu.memory_space<vmem>>, vector<1x1x1x64x16xbf16>
    %90 = vector.shape_cast %89 : vector<1x1x1x64x16xbf16> to vector<64x16xbf16>
    %91 = vector.shape_cast %88 : vector<64x16xbf16> to vector<1x1x1x64x16xbf16>
    tpu.vector_store %arg6[%c0_64, %c2_65, %c1_66, %c0_67, %c0_68], %91 {strides = array<i32>} : memref<1x3x6x64x16xbf16, #tpu.memory_space<vmem>>, vector<1x1x1x64x16xbf16>,
    %92 = vector.extract_strided_slice %38 {offsets = [0, 32], sizes = [192, 16], strides = [1, 1]} : vector<192x96xbf16> to vector<192x16xbf16>
    %93 = vector.extract_strided_slice %39 {offsets = [0, 32], sizes = [192, 16], strides = [1, 1]} : vector<192x96xbf16> to vector<192x16xbf16>
    %94 = vector.extract_strided_slice %92 {offsets = [0, 0], sizes = [64, 16], strides = [1, 1]} : vector<192x16xbf16> to vector<64x16xbf16>
    %c0_69 = arith.constant 0 : index
    %c0_70 = arith.constant 0 : index
    %c2_71 = arith.constant 2 : index
    %c0_72 = arith.constant 0 : index
    %c0_73 = arith.constant 0 : index
    %95 = vector.load %arg5[%c0_69, %c0_70, %c2_71, %c0_72, %c0_73] : memref<1x3x6x64x16xbf16, #tpu.memory_space<vmem>>, vector<1x1x1x64x16xbf16>
    %96 = vector.shape_cast %95 : vector<1x1x1x64x16xbf16> to vector<64x16xbf16>
    %97 = vector.shape_cast %94 : vector<64x16xbf16> to vector<1x1x1x64x16xbf16>
    tpu.vector_store %arg5[%c0_69, %c0_70, %c2_71, %c0_72, %c0_73], %97 {strides = array<i32>} : memref<1x3x6x64x16xbf16, #tpu.memory_space<vmem>>, vector<1x1x1x64x16xbf16>,
    %98 = vector.extract_strided_slice %93 {offsets = [0, 0], sizes = [64, 16], strides = [1, 1]} : vector<192x16xbf16> to vector<64x16xbf16>
    %c0_74 = arith.constant 0 : index
    %c0_75 = arith.constant 0 : index
    %c2_76 = arith.constant 2 : index
    %c0_77 = arith.constant 0 : index
    %c0_78 = arith.constant 0 : index
    %99 = vector.load %arg6[%c0_74, %c0_75, %c2_76, %c0_77, %c0_78] : memref<1x3x6x64x16xbf16, #tpu.memory_space<vmem>>, vector<1x1x1x64x16xbf16>
    %100 = vector.shape_cast %99 : vector<1x1x1x64x16xbf16> to vector<64x16xbf16>
    %101 = vector.shape_cast %98 : vector<64x16xbf16> to vector<1x1x1x64x16xbf16>
    tpu.vector_store %arg6[%c0_74, %c0_75, %c2_76, %c0_77, %c0_78], %101 {strides = array<i32>} : memref<1x3x6x64x16xbf16, #tpu.memory_space<vmem>>, vector<1x1x1x64x16xbf16>,
    %102 = vector.extract_strided_slice %92 {offsets = [64, 0], sizes = [64, 16], strides = [1, 1]} : vector<192x16xbf16> to vector<64x16xbf16>
    %c0_79 = arith.constant 0 : index
    %c1_80 = arith.constant 1 : index
    %c2_81 = arith.constant 2 : index
    %c0_82 = arith.constant 0 : index
    %c0_83 = arith.constant 0 : index
    %103 = vector.load %arg5[%c0_79, %c1_80, %c2_81, %c0_82, %c0_83] : memref<1x3x6x64x16xbf16, #tpu.memory_space<vmem>>, vector<1x1x1x64x16xbf16>
    %104 = vector.shape_cast %103 : vector<1x1x1x64x16xbf16> to vector<64x16xbf16>
    %105 = vector.shape_cast %102 : vector<64x16xbf16> to vector<1x1x1x64x16xbf16>
    tpu.vector_store %arg5[%c0_79, %c1_80, %c2_81, %c0_82, %c0_83], %105 {strides = array<i32>} : memref<1x3x6x64x16xbf16, #tpu.memory_space<vmem>>, vector<1x1x1x64x16xbf16>,
    %106 = vector.extract_strided_slice %93 {offsets = [64, 0], sizes = [64, 16], strides = [1, 1]} : vector<192x16xbf16> to vector<64x16xbf16>
    %c0_84 = arith.constant 0 : index
    %c1_85 = arith.constant 1 : index
    %c2_86 = arith.constant 2 : index
    %c0_87 = arith.constant 0 : index
    %c0_88 = arith.constant 0 : index
    %107 = vector.load %arg6[%c0_84, %c1_85, %c2_86, %c0_87, %c0_88] : memref<1x3x6x64x16xbf16, #tpu.memory_space<vmem>>, vector<1x1x1x64x16xbf16>
    %108 = vector.shape_cast %107 : vector<1x1x1x64x16xbf16> to vector<64x16xbf16>
    %109 = vector.shape_cast %106 : vector<64x16xbf16> to vector<1x1x1x64x16xbf16>
    tpu.vector_store %arg6[%c0_84, %c1_85, %c2_86, %c0_87, %c0_88], %109 {strides = array<i32>} : memref<1x3x6x64x16xbf16, #tpu.memory_space<vmem>>, vector<1x1x1x64x16xbf16>,
    %110 = vector.extract_strided_slice %92 {offsets = [128, 0], sizes = [64, 16], strides = [1, 1]} : vector<192x16xbf16> to vector<64x16xbf16>
    %c0_89 = arith.constant 0 : index
    %c2_90 = arith.constant 2 : index
    %c2_91 = arith.constant 2 : index
    %c0_92 = arith.constant 0 : index
    %c0_93 = arith.constant 0 : index
    %111 = vector.load %arg5[%c0_89, %c2_90, %c2_91, %c0_92, %c0_93] : memref<1x3x6x64x16xbf16, #tpu.memory_space<vmem>>, vector<1x1x1x64x16xbf16>
    %112 = vector.shape_cast %111 : vector<1x1x1x64x16xbf16> to vector<64x16xbf16>
    %113 = vector.shape_cast %110 : vector<64x16xbf16> to vector<1x1x1x64x16xbf16>
    tpu.vector_store %arg5[%c0_89, %c2_90, %c2_91, %c0_92, %c0_93], %113 {strides = array<i32>} : memref<1x3x6x64x16xbf16, #tpu.memory_space<vmem>>, vector<1x1x1x64x16xbf16>,
    %114 = vector.extract_strided_slice %93 {offsets = [128, 0], sizes = [64, 16], strides = [1, 1]} : vector<192x16xbf16> to vector<64x16xbf16>
    %c0_94 = arith.constant 0 : index
    %c2_95 = arith.constant 2 : index
    %c2_96 = arith.constant 2 : index
    %c0_97 = arith.constant 0 : index
    %c0_98 = arith.constant 0 : index
    %115 = vector.load %arg6[%c0_94, %c2_95, %c2_96, %c0_97, %c0_98] : memref<1x3x6x64x16xbf16, #tpu.memory_space<vmem>>, vector<1x1x1x64x16xbf16>
    %116 = vector.shape_cast %115 : vector<1x1x1x64x16xbf16> to vector<64x16xbf16>
    %117 = vector.shape_cast %114 : vector<64x16xbf16> to vector<1x1x1x64x16xbf16>
    tpu.vector_store %arg6[%c0_94, %c2_95, %c2_96, %c0_97, %c0_98], %117 {strides = array<i32>} : memref<1x3x6x64x16xbf16, #tpu.memory_space<vmem>>, vector<1x1x1x64x16xbf16>,
    %118 = vector.extract_strided_slice %38 {offsets = [0, 48], sizes = [192, 16], strides = [1, 1]} : vector<192x96xbf16> to vector<192x16xbf16>
    %119 = vector.extract_strided_slice %39 {offsets = [0, 48], sizes = [192, 16], strides = [1, 1]} : vector<192x96xbf16> to vector<192x16xbf16>
    %120 = vector.extract_strided_slice %118 {offsets = [0, 0], sizes = [64, 16], strides = [1, 1]} : vector<192x16xbf16> to vector<64x16xbf16>
    %c0_99 = arith.constant 0 : index
    %c0_100 = arith.constant 0 : index
    %c3 = arith.constant 3 : index
    %c0_101 = arith.constant 0 : index
    %c0_102 = arith.constant 0 : index
    %121 = vector.load %arg5[%c0_99, %c0_100, %c3, %c0_101, %c0_102] : memref<1x3x6x64x16xbf16, #tpu.memory_space<vmem>>, vector<1x1x1x64x16xbf16>
    %122 = vector.shape_cast %121 : vector<1x1x1x64x16xbf16> to vector<64x16xbf16>
    %123 = vector.shape_cast %120 : vector<64x16xbf16> to vector<1x1x1x64x16xbf16>
    tpu.vector_store %arg5[%c0_99, %c0_100, %c3, %c0_101, %c0_102], %123 {strides = array<i32>} : memref<1x3x6x64x16xbf16, #tpu.memory_space<vmem>>, vector<1x1x1x64x16xbf16>,
    %124 = vector.extract_strided_slice %119 {offsets = [0, 0], sizes = [64, 16], strides = [1, 1]} : vector<192x16xbf16> to vector<64x16xbf16>
    %c0_103 = arith.constant 0 : index
    %c0_104 = arith.constant 0 : index
    %c3_105 = arith.constant 3 : index
    %c0_106 = arith.constant 0 : index
    %c0_107 = arith.constant 0 : index
    %125 = vector.load %arg6[%c0_103, %c0_104, %c3_105, %c0_106, %c0_107] : memref<1x3x6x64x16xbf16, #tpu.memory_space<vmem>>, vector<1x1x1x64x16xbf16>
    %126 = vector.shape_cast %125 : vector<1x1x1x64x16xbf16> to vector<64x16xbf16>
    %127 = vector.shape_cast %124 : vector<64x16xbf16> to vector<1x1x1x64x16xbf16>
    tpu.vector_store %arg6[%c0_103, %c0_104, %c3_105, %c0_106, %c0_107], %127 {strides = array<i32>} : memref<1x3x6x64x16xbf16, #tpu.memory_space<vmem>>, vector<1x1x1x64x16xbf16>,
    %128 = vector.extract_strided_slice %118 {offsets = [64, 0], sizes = [64, 16], strides = [1, 1]} : vector<192x16xbf16> to vector<64x16xbf16>
    %c0_108 = arith.constant 0 : index
    %c1_109 = arith.constant 1 : index
    %c3_110 = arith.constant 3 : index
    %c0_111 = arith.constant 0 : index
    %c0_112 = arith.constant 0 : index
    %129 = vector.load %arg5[%c0_108, %c1_109, %c3_110, %c0_111, %c0_112] : memref<1x3x6x64x16xbf16, #tpu.memory_space<vmem>>, vector<1x1x1x64x16xbf16>
    %130 = vector.shape_cast %129 : vector<1x1x1x64x16xbf16> to vector<64x16xbf16>
    %131 = vector.shape_cast %128 : vector<64x16xbf16> to vector<1x1x1x64x16xbf16>
    tpu.vector_store %arg5[%c0_108, %c1_109, %c3_110, %c0_111, %c0_112], %131 {strides = array<i32>} : memref<1x3x6x64x16xbf16, #tpu.memory_space<vmem>>, vector<1x1x1x64x16xbf16>,
    %132 = vector.extract_strided_slice %119 {offsets = [64, 0], sizes = [64, 16], strides = [1, 1]} : vector<192x16xbf16> to vector<64x16xbf16>
    %c0_113 = arith.constant 0 : index
    %c1_114 = arith.constant 1 : index
    %c3_115 = arith.constant 3 : index
    %c0_116 = arith.constant 0 : index
    %c0_117 = arith.constant 0 : index
    %133 = vector.load %arg6[%c0_113, %c1_114, %c3_115, %c0_116, %c0_117] : memref<1x3x6x64x16xbf16, #tpu.memory_space<vmem>>, vector<1x1x1x64x16xbf16>
    %134 = vector.shape_cast %133 : vector<1x1x1x64x16xbf16> to vector<64x16xbf16>
    %135 = vector.shape_cast %132 : vector<64x16xbf16> to vector<1x1x1x64x16xbf16>
    tpu.vector_store %arg6[%c0_113, %c1_114, %c3_115, %c0_116, %c0_117], %135 {strides = array<i32>} : memref<1x3x6x64x16xbf16, #tpu.memory_space<vmem>>, vector<1x1x1x64x16xbf16>,
    %136 = vector.extract_strided_slice %118 {offsets = [128, 0], sizes = [64, 16], strides = [1, 1]} : vector<192x16xbf16> to vector<64x16xbf16>
    %c0_118 = arith.constant 0 : index
    %c2_119 = arith.constant 2 : index
    %c3_120 = arith.constant 3 : index
    %c0_121 = arith.constant 0 : index
    %c0_122 = arith.constant 0 : index
    %137 = vector.load %arg5[%c0_118, %c2_119, %c3_120, %c0_121, %c0_122] : memref<1x3x6x64x16xbf16, #tpu.memory_space<vmem>>, vector<1x1x1x64x16xbf16>
    %138 = vector.shape_cast %137 : vector<1x1x1x64x16xbf16> to vector<64x16xbf16>
    %139 = vector.shape_cast %136 : vector<64x16xbf16> to vector<1x1x1x64x16xbf16>
    tpu.vector_store %arg5[%c0_118, %c2_119, %c3_120, %c0_121, %c0_122], %139 {strides = array<i32>} : memref<1x3x6x64x16xbf16, #tpu.memory_space<vmem>>, vector<1x1x1x64x16xbf16>,
    %140 = vector.extract_strided_slice %119 {offsets = [128, 0], sizes = [64, 16], strides = [1, 1]} : vector<192x16xbf16> to vector<64x16xbf16>
    %c0_123 = arith.constant 0 : index
    %c2_124 = arith.constant 2 : index
    %c3_125 = arith.constant 3 : index
    %c0_126 = arith.constant 0 : index
    %c0_127 = arith.constant 0 : index
    %141 = vector.load %arg6[%c0_123, %c2_124, %c3_125, %c0_126, %c0_127] : memref<1x3x6x64x16xbf16, #tpu.memory_space<vmem>>, vector<1x1x1x64x16xbf16>
    %142 = vector.shape_cast %141 : vector<1x1x1x64x16xbf16> to vector<64x16xbf16>
    %143 = vector.shape_cast %140 : vector<64x16xbf16> to vector<1x1x1x64x16xbf16>
    tpu.vector_store %arg6[%c0_123, %c2_124, %c3_125, %c0_126, %c0_127], %143 {strides = array<i32>} : memref<1x3x6x64x16xbf16, #tpu.memory_space<vmem>>, vector<1x1x1x64x16xbf16>,
    %144 = vector.extract_strided_slice %38 {offsets = [0, 64], sizes = [192, 16], strides = [1, 1]} : vector<192x96xbf16> to vector<192x16xbf16>
    %145 = vector.extract_strided_slice %39 {offsets = [0, 64], sizes = [192, 16], strides = [1, 1]} : vector<192x96xbf16> to vector<192x16xbf16>
    %146 = vector.extract_strided_slice %144 {offsets = [0, 0], sizes = [64, 16], strides = [1, 1]} : vector<192x16xbf16> to vector<64x16xbf16>
    %c0_128 = arith.constant 0 : index
    %c0_129 = arith.constant 0 : index
    %c4 = arith.constant 4 : index
    %c0_130 = arith.constant 0 : index
    %c0_131 = arith.constant 0 : index
    %147 = vector.load %arg5[%c0_128, %c0_129, %c4, %c0_130, %c0_131] : memref<1x3x6x64x16xbf16, #tpu.memory_space<vmem>>, vector<1x1x1x64x16xbf16>
    %148 = vector.shape_cast %147 : vector<1x1x1x64x16xbf16> to vector<64x16xbf16>
    %149 = vector.shape_cast %146 : vector<64x16xbf16> to vector<1x1x1x64x16xbf16>
    tpu.vector_store %arg5[%c0_128, %c0_129, %c4, %c0_130, %c0_131], %149 {strides = array<i32>} : memref<1x3x6x64x16xbf16, #tpu.memory_space<vmem>>, vector<1x1x1x64x16xbf16>,
    %150 = vector.extract_strided_slice %145 {offsets = [0, 0], sizes = [64, 16], strides = [1, 1]} : vector<192x16xbf16> to vector<64x16xbf16>
    %c0_132 = arith.constant 0 : index
    %c0_133 = arith.constant 0 : index
    %c4_134 = arith.constant 4 : index
    %c0_135 = arith.constant 0 : index
    %c0_136 = arith.constant 0 : index
    %151 = vector.load %arg6[%c0_132, %c0_133, %c4_134, %c0_135, %c0_136] : memref<1x3x6x64x16xbf16, #tpu.memory_space<vmem>>, vector<1x1x1x64x16xbf16>
    %152 = vector.shape_cast %151 : vector<1x1x1x64x16xbf16> to vector<64x16xbf16>
    %153 = vector.shape_cast %150 : vector<64x16xbf16> to vector<1x1x1x64x16xbf16>
    tpu.vector_store %arg6[%c0_132, %c0_133, %c4_134, %c0_135, %c0_136], %153 {strides = array<i32>} : memref<1x3x6x64x16xbf16, #tpu.memory_space<vmem>>, vector<1x1x1x64x16xbf16>,
    %154 = vector.extract_strided_slice %144 {offsets = [64, 0], sizes = [64, 16], strides = [1, 1]} : vector<192x16xbf16> to vector<64x16xbf16>
    %c0_137 = arith.constant 0 : index
    %c1_138 = arith.constant 1 : index
    %c4_139 = arith.constant 4 : index
    %c0_140 = arith.constant 0 : index
    %c0_141 = arith.constant 0 : index
    %155 = vector.load %arg5[%c0_137, %c1_138, %c4_139, %c0_140, %c0_141] : memref<1x3x6x64x16xbf16, #tpu.memory_space<vmem>>, vector<1x1x1x64x16xbf16>
    %156 = vector.shape_cast %155 : vector<1x1x1x64x16xbf16> to vector<64x16xbf16>
    %157 = vector.shape_cast %154 : vector<64x16xbf16> to vector<1x1x1x64x16xbf16>
    tpu.vector_store %arg5[%c0_137, %c1_138, %c4_139, %c0_140, %c0_141], %157 {strides = array<i32>} : memref<1x3x6x64x16xbf16, #tpu.memory_space<vmem>>, vector<1x1x1x64x16xbf16>,
    %158 = vector.extract_strided_slice %145 {offsets = [64, 0], sizes = [64, 16], strides = [1, 1]} : vector<192x16xbf16> to vector<64x16xbf16>
    %c0_142 = arith.constant 0 : index
    %c1_143 = arith.constant 1 : index
    %c4_144 = arith.constant 4 : index
    %c0_145 = arith.constant 0 : index
    %c0_146 = arith.constant 0 : index
    %159 = vector.load %arg6[%c0_142, %c1_143, %c4_144, %c0_145, %c0_146] : memref<1x3x6x64x16xbf16, #tpu.memory_space<vmem>>, vector<1x1x1x64x16xbf16>
    %160 = vector.shape_cast %159 : vector<1x1x1x64x16xbf16> to vector<64x16xbf16>
    %161 = vector.shape_cast %158 : vector<64x16xbf16> to vector<1x1x1x64x16xbf16>
    tpu.vector_store %arg6[%c0_142, %c1_143, %c4_144, %c0_145, %c0_146], %161 {strides = array<i32>} : memref<1x3x6x64x16xbf16, #tpu.memory_space<vmem>>, vector<1x1x1x64x16xbf16>,
    %162 = vector.extract_strided_slice %144 {offsets = [128, 0], sizes = [64, 16], strides = [1, 1]} : vector<192x16xbf16> to vector<64x16xbf16>
    %c0_147 = arith.constant 0 : index
    %c2_148 = arith.constant 2 : index
    %c4_149 = arith.constant 4 : index
    %c0_150 = arith.constant 0 : index
    %c0_151 = arith.constant 0 : index
    %163 = vector.load %arg5[%c0_147, %c2_148, %c4_149, %c0_150, %c0_151] : memref<1x3x6x64x16xbf16, #tpu.memory_space<vmem>>, vector<1x1x1x64x16xbf16>
    %164 = vector.shape_cast %163 : vector<1x1x1x64x16xbf16> to vector<64x16xbf16>
    %165 = vector.shape_cast %162 : vector<64x16xbf16> to vector<1x1x1x64x16xbf16>
    tpu.vector_store %arg5[%c0_147, %c2_148, %c4_149, %c0_150, %c0_151], %165 {strides = array<i32>} : memref<1x3x6x64x16xbf16, #tpu.memory_space<vmem>>, vector<1x1x1x64x16xbf16>,
    %166 = vector.extract_strided_slice %145 {offsets = [128, 0], sizes = [64, 16], strides = [1, 1]} : vector<192x16xbf16> to vector<64x16xbf16>
    %c0_152 = arith.constant 0 : index
    %c2_153 = arith.constant 2 : index
    %c4_154 = arith.constant 4 : index
    %c0_155 = arith.constant 0 : index
    %c0_156 = arith.constant 0 : index
    %167 = vector.load %arg6[%c0_152, %c2_153, %c4_154, %c0_155, %c0_156] : memref<1x3x6x64x16xbf16, #tpu.memory_space<vmem>>, vector<1x1x1x64x16xbf16>
    %168 = vector.shape_cast %167 : vector<1x1x1x64x16xbf16> to vector<64x16xbf16>
    %169 = vector.shape_cast %166 : vector<64x16xbf16> to vector<1x1x1x64x16xbf16>
    tpu.vector_store %arg6[%c0_152, %c2_153, %c4_154, %c0_155, %c0_156], %169 {strides = array<i32>} : memref<1x3x6x64x16xbf16, #tpu.memory_space<vmem>>, vector<1x1x1x64x16xbf16>,
    %170 = vector.extract_strided_slice %38 {offsets = [0, 80], sizes = [192, 16], strides = [1, 1]} : vector<192x96xbf16> to vector<192x16xbf16>
    %171 = vector.extract_strided_slice %39 {offsets = [0, 80], sizes = [192, 16], strides = [1, 1]} : vector<192x96xbf16> to vector<192x16xbf16>
    %172 = vector.extract_strided_slice %170 {offsets = [0, 0], sizes = [64, 16], strides = [1, 1]} : vector<192x16xbf16> to vector<64x16xbf16>
    %c0_157 = arith.constant 0 : index
    %c0_158 = arith.constant 0 : index
    %c5 = arith.constant 5 : index
    %c0_159 = arith.constant 0 : index
    %c0_160 = arith.constant 0 : index
    %173 = vector.load %arg5[%c0_157, %c0_158, %c5, %c0_159, %c0_160] : memref<1x3x6x64x16xbf16, #tpu.memory_space<vmem>>, vector<1x1x1x64x16xbf16>
    %174 = vector.shape_cast %173 : vector<1x1x1x64x16xbf16> to vector<64x16xbf16>
    %175 = vector.shape_cast %172 : vector<64x16xbf16> to vector<1x1x1x64x16xbf16>
    tpu.vector_store %arg5[%c0_157, %c0_158, %c5, %c0_159, %c0_160], %175 {strides = array<i32>} : memref<1x3x6x64x16xbf16, #tpu.memory_space<vmem>>, vector<1x1x1x64x16xbf16>,
    %176 = vector.extract_strided_slice %171 {offsets = [0, 0], sizes = [64, 16], strides = [1, 1]} : vector<192x16xbf16> to vector<64x16xbf16>
    %c0_161 = arith.constant 0 : index
    %c0_162 = arith.constant 0 : index
    %c5_163 = arith.constant 5 : index
    %c0_164 = arith.constant 0 : index
    %c0_165 = arith.constant 0 : index
    %177 = vector.load %arg6[%c0_161, %c0_162, %c5_163, %c0_164, %c0_165] : memref<1x3x6x64x16xbf16, #tpu.memory_space<vmem>>, vector<1x1x1x64x16xbf16>
    %178 = vector.shape_cast %177 : vector<1x1x1x64x16xbf16> to vector<64x16xbf16>
    %179 = vector.shape_cast %176 : vector<64x16xbf16> to vector<1x1x1x64x16xbf16>
    tpu.vector_store %arg6[%c0_161, %c0_162, %c5_163, %c0_164, %c0_165], %179 {strides = array<i32>} : memref<1x3x6x64x16xbf16, #tpu.memory_space<vmem>>, vector<1x1x1x64x16xbf16>,
    %180 = vector.extract_strided_slice %170 {offsets = [64, 0], sizes = [64, 16], strides = [1, 1]} : vector<192x16xbf16> to vector<64x16xbf16>
    %c0_166 = arith.constant 0 : index
    %c1_167 = arith.constant 1 : index
    %c5_168 = arith.constant 5 : index
    %c0_169 = arith.constant 0 : index
    %c0_170 = arith.constant 0 : index
    %181 = vector.load %arg5[%c0_166, %c1_167, %c5_168, %c0_169, %c0_170] : memref<1x3x6x64x16xbf16, #tpu.memory_space<vmem>>, vector<1x1x1x64x16xbf16>
    %182 = vector.shape_cast %181 : vector<1x1x1x64x16xbf16> to vector<64x16xbf16>
    %183 = vector.shape_cast %180 : vector<64x16xbf16> to vector<1x1x1x64x16xbf16>
    tpu.vector_store %arg5[%c0_166, %c1_167, %c5_168, %c0_169, %c0_170], %183 {strides = array<i32>} : memref<1x3x6x64x16xbf16, #tpu.memory_space<vmem>>, vector<1x1x1x64x16xbf16>,
    %184 = vector.extract_strided_slice %171 {offsets = [64, 0], sizes = [64, 16], strides = [1, 1]} : vector<192x16xbf16> to vector<64x16xbf16>
    %c0_171 = arith.constant 0 : index
    %c1_172 = arith.constant 1 : index
    %c5_173 = arith.constant 5 : index
    %c0_174 = arith.constant 0 : index
    %c0_175 = arith.constant 0 : index
    %185 = vector.load %arg6[%c0_171, %c1_172, %c5_173, %c0_174, %c0_175] : memref<1x3x6x64x16xbf16, #tpu.memory_space<vmem>>, vector<1x1x1x64x16xbf16>
    %186 = vector.shape_cast %185 : vector<1x1x1x64x16xbf16> to vector<64x16xbf16>
    %187 = vector.shape_cast %184 : vector<64x16xbf16> to vector<1x1x1x64x16xbf16>
    tpu.vector_store %arg6[%c0_171, %c1_172, %c5_173, %c0_174, %c0_175], %187 {strides = array<i32>} : memref<1x3x6x64x16xbf16, #tpu.memory_space<vmem>>, vector<1x1x1x64x16xbf16>,
    %188 = vector.extract_strided_slice %170 {offsets = [128, 0], sizes = [64, 16], strides = [1, 1]} : vector<192x16xbf16> to vector<64x16xbf16>
    %c0_176 = arith.constant 0 : index
    %c2_177 = arith.constant 2 : index
    %c5_178 = arith.constant 5 : index
    %c0_179 = arith.constant 0 : index
    %c0_180 = arith.constant 0 : index
    %189 = vector.load %arg5[%c0_176, %c2_177, %c5_178, %c0_179, %c0_180] : memref<1x3x6x64x16xbf16, #tpu.memory_space<vmem>>, vector<1x1x1x64x16xbf16>
    %190 = vector.shape_cast %189 : vector<1x1x1x64x16xbf16> to vector<64x16xbf16>
    %191 = vector.shape_cast %188 : vector<64x16xbf16> to vector<1x1x1x64x16xbf16>
    tpu.vector_store %arg5[%c0_176, %c2_177, %c5_178, %c0_179, %c0_180], %191 {strides = array<i32>} : memref<1x3x6x64x16xbf16, #tpu.memory_space<vmem>>, vector<1x1x1x64x16xbf16>,
    %192 = vector.extract_strided_slice %171 {offsets = [128, 0], sizes = [64, 16], strides = [1, 1]} : vector<192x16xbf16> to vector<64x16xbf16>
    %c0_181 = arith.constant 0 : index
    %c2_182 = arith.constant 2 : index
    %c5_183 = arith.constant 5 : index
    %c0_184 = arith.constant 0 : index
    %c0_185 = arith.constant 0 : index
    %193 = vector.load %arg6[%c0_181, %c2_182, %c5_183, %c0_184, %c0_185] : memref<1x3x6x64x16xbf16, #tpu.memory_space<vmem>>, vector<1x1x1x64x16xbf16>
    %194 = vector.shape_cast %193 : vector<1x1x1x64x16xbf16> to vector<64x16xbf16>
    %195 = vector.shape_cast %192 : vector<64x16xbf16> to vector<1x1x1x64x16xbf16>
    tpu.vector_store %arg6[%c0_181, %c2_182, %c5_183, %c0_184, %c0_185], %195 {strides = array<i32>} : memref<1x3x6x64x16xbf16, #tpu.memory_space<vmem>>, vector<1x1x1x64x16xbf16>,
    return
  }
  func.func @transform_0(%arg0: i32) -> (i32, i32, i32) {
    %c0_i32 = arith.constant 0 : i32
    %c0_i32_0 = arith.constant 0 : i32
    %c0_i32_1 = arith.constant 0 : i32
    return %arg0, %c0_i32, %c0_i32_0 : i32, i32, i32
  }
  func.func @transform_1(%arg0: i32) -> (i32, i32, i32) {
    %c0_i32 = arith.constant 0 : i32
    %c0_i32_0 = arith.constant 0 : i32
    %c0_i32_1 = arith.constant 0 : i32
    return %arg0, %c0_i32, %c0_i32_0 : i32, i32, i32
  }
  func.func @transform_2(%arg0: i32) -> (i32, i32) {
    %c0_i32 = arith.constant 0 : i32
    %c0_i32_0 = arith.constant 0 : i32
    %c0_i32_1 = arith.constant 0 : i32
    return %c0_i32, %c0_i32_0 : i32, i32
  }
  func.func @transform_3(%arg0: i32) -> (i32, i32) {
    %c0_i32 = arith.constant 0 : i32
    %c0_i32_0 = arith.constant 0 : i32
    %c0_i32_1 = arith.constant 0 : i32
    return %c0_i32, %c0_i32_0 : i32, i32
  }
  func.func @transform_4(%arg0: i32) -> (i32, i32, i32, i32, i32) {
    %c0_i32 = arith.constant 0 : i32
    %c0_i32_0 = arith.constant 0 : i32
    %c0_i32_1 = arith.constant 0 : i32
    %c0_i32_2 = arith.constant 0 : i32
    %c0_i32_3 = arith.constant 0 : i32
    return %arg0, %c0_i32, %c0_i32_0, %c0_i32_1, %c0_i32_2 : i32, i32, i32, i32, i32
  }
  func.func @transform_5(%arg0: i32) -> (i32, i32, i32, i32, i32) {
    %c0_i32 = arith.constant 0 : i32
    %c0_i32_0 = arith.constant 0 : i32
    %c0_i32_1 = arith.constant 0 : i32
    %c0_i32_2 = arith.constant 0 : i32
    %c0_i32_3 = arith.constant 0 : i32
    return %arg0, %c0_i32, %c0_i32_0, %c0_i32_1, %c0_i32_2 : i32, i32, i32, i32, i32
  }
}

module attributes {stable_mosaic.version = 11 : i64} {
  func.func @_mlp_loss_kernel(%arg0: i32, %arg1: memref<1x18x1024xbf16, #tpu.memory_space<vmem>>, %arg2: memref<1x18x1024xbf16, #tpu.memory_space<vmem>>, %arg3: memref<1024x64xbf16, #tpu.memory_space<vmem>>, %arg4: memref<1024x64xbf16, #tpu.memory_space<vmem>>, %arg5: memref<1x64xf32, #tpu.memory_space<vmem>>, %arg6: memref<64x32xf32, #tpu.memory_space<vmem>>, %arg7: memref<1x32xf32, #tpu.memory_space<vmem>>, %arg8: memref<32x4xf32, #tpu.memory_space<vmem>>, %arg9: memref<1x4xf32, #tpu.memory_space<vmem>>, %arg10: memref<1x18x1xf32, #tpu.memory_space<vmem>>) attributes {dimension_semantics = [#tpu.dimension_semantics<parallel>], iteration_bounds = array<i64: 2>, scalar_prefetch = 0 : i64, scratch_operands = 0 : i64, tpu.core_type = #tpu.core_type<tc>, window_params = [{transform_indices = @transform_0, window_bounds = array<i64: 1, 18, 1024>}, {transform_indices = @transform_1, window_bounds = array<i64: 1, 18, 1024>}, {pipeline_mode = #tpu.pipeline_mode<synchronous>, transform_indices = @transform_2, window_bounds = array<i64: 1024, 64>}, {pipeline_mode = #tpu.pipeline_mode<synchronous>, transform_indices = @transform_3, window_bounds = array<i64: 1024, 64>}, {pipeline_mode = #tpu.pipeline_mode<synchronous>, transform_indices = @transform_4, window_bounds = array<i64: 1, 64>}, {pipeline_mode = #tpu.pipeline_mode<synchronous>, transform_indices = @transform_5, window_bounds = array<i64: 64, 32>}, {pipeline_mode = #tpu.pipeline_mode<synchronous>, transform_indices = @transform_6, window_bounds = array<i64: 1, 32>}, {pipeline_mode = #tpu.pipeline_mode<synchronous>, transform_indices = @transform_7, window_bounds = array<i64: 32, 4>}, {pipeline_mode = #tpu.pipeline_mode<synchronous>, transform_indices = @transform_8, window_bounds = array<i64: 1, 4>}, {transform_indices = @transform_9, window_bounds = array<i64: 1, 18, 1>}]} {
    %c0 = arith.constant 0 : index
    %c0_0 = arith.constant 0 : index
    %c0_1 = arith.constant 0 : index
    %0 = vector.load %arg1[%c0, %c0_0, %c0_1] : memref<1x18x1024xbf16, #tpu.memory_space<vmem>>, vector<1x18x1024xbf16>
    %1 = vector.shape_cast %0 : vector<1x18x1024xbf16> to vector<18x1024xbf16>
    %c0_2 = arith.constant 0 : index
    %c0_3 = arith.constant 0 : index
    %2 = vector.load %arg3[%c0_2, %c0_3] : memref<1024x64xbf16, #tpu.memory_space<vmem>>, vector<1024x64xbf16>
    %cst = arith.constant dense<0.000000e+00> : vector<18x64xf32>
    %3 = tpu.matmul %1, %2, %cst {dimension_numbers = #tpu.dot_dimension_numbers<[1], [0], [0], [1], [0, 0, 1, 1], [], []>} : vector<18x1024xbf16>, vector<1024x64xbf16>, vector<18x64xf32> -> vector<18x64xf32>
    %c0_4 = arith.constant 0 : index
    %c0_5 = arith.constant 0 : index
    %c0_6 = arith.constant 0 : index
    %4 = vector.load %arg2[%c0_4, %c0_5, %c0_6] : memref<1x18x1024xbf16, #tpu.memory_space<vmem>>, vector<1x18x1024xbf16>
    %5 = vector.shape_cast %4 : vector<1x18x1024xbf16> to vector<18x1024xbf16>
    %c0_7 = arith.constant 0 : index
    %c0_8 = arith.constant 0 : index
    %6 = vector.load %arg4[%c0_7, %c0_8] : memref<1024x64xbf16, #tpu.memory_space<vmem>>, vector<1024x64xbf16>
    %cst_9 = arith.constant dense<0.000000e+00> : vector<18x64xf32>
    %7 = tpu.matmul %5, %6, %cst_9 {dimension_numbers = #tpu.dot_dimension_numbers<[1], [0], [0], [1], [0, 0, 1, 1], [], []>} : vector<18x1024xbf16>, vector<1024x64xbf16>, vector<18x64xf32> -> vector<18x64xf32>
    %8 = arith.addf %3, %7 : vector<18x64xf32>
    %c0_10 = arith.constant 0 : index
    %c0_11 = arith.constant 0 : index
    %9 = vector.load %arg5[%c0_10, %c0_11] : memref<1x64xf32, #tpu.memory_space<vmem>>, vector<1x64xf32>
    %10 = vector.broadcast %9 : vector<1x64xf32> to vector<18x64xf32>
    %11 = arith.addf %8, %10 : vector<18x64xf32>
    %cst_12 = arith.constant 0.000000e+00 : f32
    %12 = vector.broadcast %cst_12 : f32 to vector<18x64xf32>
    %13 = arith.maximumf %11, %12 : vector<18x64xf32>
    %c0_13 = arith.constant 0 : index
    %c0_14 = arith.constant 0 : index
    %14 = vector.load %arg6[%c0_13, %c0_14] : memref<64x32xf32, #tpu.memory_space<vmem>>, vector<64x32xf32>
    %cst_15 = arith.constant dense<0.000000e+00> : vector<18x32xf32>
    %15 = tpu.matmul %13, %14, %cst_15 {dimension_numbers = #tpu.dot_dimension_numbers<[1], [0], [0], [1], [0, 0, 1, 1], [], []>} : vector<18x64xf32>, vector<64x32xf32>, vector<18x32xf32> -> vector<18x32xf32>
    %c0_16 = arith.constant 0 : index
    %c0_17 = arith.constant 0 : index
    %16 = vector.load %arg7[%c0_16, %c0_17] : memref<1x32xf32, #tpu.memory_space<vmem>>, vector<1x32xf32>
    %17 = vector.broadcast %16 : vector<1x32xf32> to vector<18x32xf32>
    %18 = arith.addf %15, %17 : vector<18x32xf32>
    %cst_18 = arith.constant 0.000000e+00 : f32
    %19 = vector.broadcast %cst_18 : f32 to vector<18x32xf32>
    %20 = arith.maximumf %18, %19 : vector<18x32xf32>
    %c0_19 = arith.constant 0 : index
    %c0_20 = arith.constant 0 : index
    %21 = vector.load %arg8[%c0_19, %c0_20] : memref<32x4xf32, #tpu.memory_space<vmem>>, vector<32x4xf32>
    %cst_21 = arith.constant dense<0.000000e+00> : vector<18x4xf32>
    %22 = tpu.matmul %20, %21, %cst_21 {dimension_numbers = #tpu.dot_dimension_numbers<[1], [0], [0], [1], [0, 0, 1, 1], [], []>} : vector<18x32xf32>, vector<32x4xf32>, vector<18x4xf32> -> vector<18x4xf32>
    %c0_22 = arith.constant 0 : index
    %c0_23 = arith.constant 0 : index
    %23 = vector.load %arg9[%c0_22, %c0_23] : memref<1x4xf32, #tpu.memory_space<vmem>>, vector<1x4xf32>
    %24 = vector.broadcast %23 : vector<1x4xf32> to vector<18x4xf32>
    %25 = arith.addf %22, %24 : vector<18x4xf32>
    %26 = arith.mulf %25, %25 : vector<18x4xf32>
    %cst_24 = arith.constant dense<0.000000e+00> : vector<18xf32>
    %27 = vector.multi_reduction <add>, %26, %cst_24 [1] : vector<18x4xf32> to vector<18xf32>
    %28 = vector.shape_cast %27 : vector<18xf32> to vector<18x1xf32>
    %29 = math.sqrt %28 : vector<18x1xf32>
    %c0_25 = arith.constant 0 : index
    %c0_26 = arith.constant 0 : index
    %c0_27 = arith.constant 0 : index
    %30 = vector.load %arg10[%c0_25, %c0_26, %c0_27] : memref<1x18x1xf32, #tpu.memory_space<vmem>>, vector<1x18x1xf32>
    %31 = vector.shape_cast %30 : vector<1x18x1xf32> to vector<18x1xf32>
    %32 = vector.shape_cast %29 : vector<18x1xf32> to vector<1x18x1xf32>
    tpu.vector_store %arg10[%c0_25, %c0_26, %c0_27], %32 {strides = array<i32>} : memref<1x18x1xf32, #tpu.memory_space<vmem>>, vector<1x18x1xf32>,
    return
  }
  func.func @transform_0(%arg0: i32) -> (i32, i32, i32) {
    %c0_i32 = arith.constant 0 : i32
    %c0_i32_0 = arith.constant 0 : i32
    %c0_i32_1 = arith.constant 0 : i32
    return %arg0, %c0_i32, %c0_i32_0 : i32, i32, i32
  }
  func.func @transform_1(%arg0: i32) -> (i32, i32, i32) {
    %c0_i32 = arith.constant 0 : i32
    %c0_i32_0 = arith.constant 0 : i32
    %c0_i32_1 = arith.constant 0 : i32
    return %arg0, %c0_i32, %c0_i32_0 : i32, i32, i32
  }
  func.func @transform_2(%arg0: i32) -> (i32, i32) {
    %c0_i32 = arith.constant 0 : i32
    %c0_i32_0 = arith.constant 0 : i32
    %c0_i32_1 = arith.constant 0 : i32
    return %c0_i32, %c0_i32_0 : i32, i32
  }
  func.func @transform_3(%arg0: i32) -> (i32, i32) {
    %c0_i32 = arith.constant 0 : i32
    %c0_i32_0 = arith.constant 0 : i32
    %c0_i32_1 = arith.constant 0 : i32
    return %c0_i32, %c0_i32_0 : i32, i32
  }
  func.func @transform_4(%arg0: i32) -> (i32, i32) {
    %c0_i32 = arith.constant 0 : i32
    %c0_i32_0 = arith.constant 0 : i32
    %c0_i32_1 = arith.constant 0 : i32
    return %c0_i32, %c0_i32_0 : i32, i32
  }
  func.func @transform_5(%arg0: i32) -> (i32, i32) {
    %c0_i32 = arith.constant 0 : i32
    %c0_i32_0 = arith.constant 0 : i32
    %c0_i32_1 = arith.constant 0 : i32
    return %c0_i32, %c0_i32_0 : i32, i32
  }
  func.func @transform_6(%arg0: i32) -> (i32, i32) {
    %c0_i32 = arith.constant 0 : i32
    %c0_i32_0 = arith.constant 0 : i32
    %c0_i32_1 = arith.constant 0 : i32
    return %c0_i32, %c0_i32_0 : i32, i32
  }
  func.func @transform_7(%arg0: i32) -> (i32, i32) {
    %c0_i32 = arith.constant 0 : i32
    %c0_i32_0 = arith.constant 0 : i32
    %c0_i32_1 = arith.constant 0 : i32
    return %c0_i32, %c0_i32_0 : i32, i32
  }
  func.func @transform_8(%arg0: i32) -> (i32, i32) {
    %c0_i32 = arith.constant 0 : i32
    %c0_i32_0 = arith.constant 0 : i32
    %c0_i32_1 = arith.constant 0 : i32
    return %c0_i32, %c0_i32_0 : i32, i32
  }
  func.func @transform_9(%arg0: i32) -> (i32, i32, i32) {
    %c0_i32 = arith.constant 0 : i32
    %c0_i32_0 = arith.constant 0 : i32
    %c0_i32_1 = arith.constant 0 : i32
    return %arg0, %c0_i32, %c0_i32_0 : i32, i32, i32
  }
}

</mosaic_0001>

<llo_original>
// kernel: inverse_transform_2d.3
$region0: #{inverse_transform_2d.3}
  #allocation0 [shape = 'u32[]', space=smem, size = 0x4, offset = 0x4, fixed_abs, tag = 'smem constant byte address 0x4 - core index']
  #allocation1 [shape = 'u32[144,128]{1,0:T(1,128)}', space=vmem, size = 0x12000, scoped, tag = 'internal scratch']
  %s0 = inlined_call_operand.vmem [shape: bf16[2,18,1024], index: 0, kind: input, shape index: {}]
  %s1 = inlined_call_operand.vmem [shape: bf16[2,18,1024], index: 1, kind: input, shape index: {}]
  %s2 = inlined_call_operand.vmem [shape: bf16[1024,64], index: 2, kind: input, shape index: {}]
  %s3 = inlined_call_operand.vmem [shape: bf16[1024,64], index: 3, kind: input, shape index: {}]
  %s4 = inlined_call_operand.vmem [shape: f32[1,64], index: 4, kind: input, shape index: {}]
  %s5 = inlined_call_operand.vmem [shape: f32[64,32], index: 5, kind: input, shape index: {}]
  %s6 = inlined_call_operand.vmem [shape: f32[1,32], index: 6, kind: input, shape index: {}]
  %s7 = inlined_call_operand.vmem [shape: f32[32,4], index: 7, kind: input, shape index: {}]
  %s8 = inlined_call_operand.vmem [shape: f32[1,4], index: 8, kind: input, shape index: {}]
  %s9 = inlined_call_operand.vmem [shape: f32[2,18,1], index: 9, kind: output, shape index: {}]
  %s10 = sld [smem:[#allocation0]]
  $region69: #{inverse_transform_2d.3} parent=0
    _
  %s12 = ssub.s32 1, %s10
  %s13 = scalar_select 0, %s12, %s10
  loop: start=0, step=1, limit=4
  $region2: #{inverse_transform_2d.3} parent=0 // loop_pre_header
    _
  $region3: #{inverse_transform_2d.3} parent=0 // loop_header
    %s15 = sphi 0, %s19
    %p16 = scmp.ge.s32.totalorder %s15, 4
    %s25 = sphi 0, %s27
    %s28 = sphi 0, %s25
    %s29 = sphi 0, %s28
    %s45 = sphi 0, %s29
    %s51 = sphi 0, %s53
    %s54 = sphi 0, %s51
    %s55 = sphi 0, %s54
    %s71 = sphi 0, %s55
    %s75 = sphi 0, %s75
    %s77 = sphi 0, %s75
    %s78 = sphi 0, %s77
    %s92 = sphi 0, %s78
    %s96 = sphi 0, %s96
    %s98 = sphi 0, %s96
    %s99 = sphi 0, %s98
    %s113 = sphi 0, %s99
    %s117 = sphi 0, %s117
    %s119 = sphi 0, %s117
    %s120 = sphi 0, %s119
    %s134 = sphi 0, %s120
    %s138 = sphi 0, %s138
    %s140 = sphi 0, %s138
    %s141 = sphi 0, %s140
    %s155 = sphi 0, %s141
    %s159 = sphi 0, %s159
    %s161 = sphi 0, %s159
    %s162 = sphi 0, %s161
    %s176 = sphi 0, %s162
    %s180 = sphi 0, %s180
    %s182 = sphi 0, %s180
    %s183 = sphi 0, %s182
    %s197 = sphi 0, %s183
    %s201 = sphi 0, %s201
    %s203 = sphi 0, %s201
    %s204 = sphi 0, %s203
    %s218 = sphi 0, %s204
    %s224 = sphi 0, %s226
    %s227 = sphi 0, %s224
    %s228 = sphi 0, %s227
    %s244 = sphi 0, %s228
  $region4: #{inverse_transform_2d.3} parent=0 // loop_header_branch
    %18 = sbr.rel (%p16) target = $region8
  $region5: #{inverse_transform_2d.3} parent=0 // loop_body
    %s20 = ssub.s32 %s15, 1
    %s21 = ssub.s32 %s15, 2
    %s22 = sadd.s32 %s15, 1
    %s23 = ssub.s32 %s15, %s22
    %p24 = scmp.eq.s32.totalorder %s23, 0
    %s26 = sadd.s32 %s25, 1
    %s27 = scalar_select %p24, %s25, %s26
    %p30 = pneg %p24
    %p31 = scmp.eq.s32.totalorder %s15, 1
    %p32 = por %p30, %p31
    %p33 = scmp.ne.s32.totalorder %s25, %s28
    %p34 = scmp.eq.s32.totalorder %s15, 0
    %p35 = por %p33, %p34
    %p36 = scmp.ne.s32.totalorder %s25, %s28
    %p37 = scmp.eq.s32.totalorder %s20, 1
    %p38 = por %p36, %p37
    %p39 = scmp.ne.s32.totalorder %s28, %s29
    %p40 = scmp.eq.s32.totalorder %s20, 0
    %p41 = por %p39, %p40
    %p42 = scmp.ne.s32.totalorder %s28, %s29
    %p43 = scmp.eq.s32.totalorder %s21, 1
    %p44 = por %p42, %p43
    %p46 = scmp.ne.s32.totalorder %s29, %s45
    %p47 = scmp.eq.s32.totalorder %s21, 0
    %p48 = por %p46, %p47
    %s49 = ssub.s32 %s15, %s22
    %p50 = scmp.eq.s32.totalorder %s49, 0
    %s52 = sadd.s32 %s51, 1
    %s53 = scalar_select %p50, %s51, %s52
    %p56 = pneg %p50
    %p57 = scmp.eq.s32.totalorder %s15, 1
    %p58 = por %p56, %p57
    %p59 = scmp.ne.s32.totalorder %s51, %s54
    %p60 = scmp.eq.s32.totalorder %s15, 0
    %p61 = por %p59, %p60
    %p62 = scmp.ne.s32.totalorder %s51, %s54
    %p63 = scmp.eq.s32.totalorder %s20, 1
    %p64 = por %p62, %p63
    %p65 = scmp.ne.s32.totalorder %s54, %s55
    %p66 = scmp.eq.s32.totalorder %s20, 0
    %p67 = por %p65, %p66
    %p68 = scmp.ne.s32.totalorder %s54, %s55
    %p69 = scmp.eq.s32.totalorder %s21, 1
    %p70 = por %p68, %p69
    %p72 = scmp.ne.s32.totalorder %s55, %s71
    %p73 = scmp.eq.s32.totalorder %s21, 0
    %p74 = por %p72, %p73
    %s76 = sadd.s32 %s75, 1
    %p79 = scmp.eq.s32.totalorder %s15, 1
    %p80 = scmp.ne.s32.totalorder %s75, %s77
    %p81 = scmp.eq.s32.totalorder %s15, 0
    %p82 = por %p80, %p81
    %p83 = scmp.ne.s32.totalorder %s75, %s77
    %p84 = scmp.eq.s32.totalorder %s20, 1
    %p85 = por %p83, %p84
    %p86 = scmp.ne.s32.totalorder %s77, %s78
    %p87 = scmp.eq.s32.totalorder %s20, 0
    %p88 = por %p86, %p87
    %p89 = scmp.ne.s32.totalorder %s77, %s78
    %p90 = scmp.eq.s32.totalorder %s21, 1
    %p91 = por %p89, %p90
    %p93 = scmp.ne.s32.totalorder %s78, %s92
    %p94 = scmp.eq.s32.totalorder %s21, 0
    %p95 = por %p93, %p94
    %s97 = sadd.s32 %s96, 1
    %p100 = scmp.eq.s32.totalorder %s15, 1
    %p101 = scmp.ne.s32.totalorder %s96, %s98
    %p102 = scmp.eq.s32.totalorder %s15, 0
    %p103 = por %p101, %p102
    %p104 = scmp.ne.s32.totalorder %s96, %s98
    %p105 = scmp.eq.s32.totalorder %s20, 1
    %p106 = por %p104, %p105
    %p107 = scmp.ne.s32.totalorder %s98, %s99
    %p108 = scmp.eq.s32.totalorder %s20, 0
    %p109 = por %p107, %p108
    %p110 = scmp.ne.s32.totalorder %s98, %s99
    %p111 = scmp.eq.s32.totalorder %s21, 1
    %p112 = por %p110, %p111
    %p114 = scmp.ne.s32.totalorder %s99, %s113
    %p115 = scmp.eq.s32.totalorder %s21, 0
    %p116 = por %p114, %p115
    %s118 = sadd.s32 %s117, 1
    %p121 = scmp.eq.s32.totalorder %s15, 1
    %p122 = scmp.ne.s32.totalorder %s117, %s119
    %p123 = scmp.eq.s32.totalorder %s15, 0
    %p124 = por %p122, %p123
    %p125 = scmp.ne.s32.totalorder %s117, %s119
    %p126 = scmp.eq.s32.totalorder %s20, 1
    %p127 = por %p125, %p126
    %p128 = scmp.ne.s32.totalorder %s119, %s120
    %p129 = scmp.eq.s32.totalorder %s20, 0
    %p130 = por %p128, %p129
    %p131 = scmp.ne.s32.totalorder %s119, %s120
    %p132 = scmp.eq.s32.totalorder %s21, 1
    %p133 = por %p131, %p132
    %p135 = scmp.ne.s32.totalorder %s120, %s134
    %p136 = scmp.eq.s32.totalorder %s21, 0
    %p137 = por %p135, %p136
    %s139 = sadd.s32 %s138, 1
    %p142 = scmp.eq.s32.totalorder %s15, 1
    %p143 = scmp.ne.s32.totalorder %s138, %s140
    %p144 = scmp.eq.s32.totalorder %s15, 0
    %p145 = por %p143, %p144
    %p146 = scmp.ne.s32.totalorder %s138, %s140
    %p147 = scmp.eq.s32.totalorder %s20, 1
    %p148 = por %p146, %p147
    %p149 = scmp.ne.s32.totalorder %s140, %s141
    %p150 = scmp.eq.s32.totalorder %s20, 0
    %p151 = por %p149, %p150
    %p152 = scmp.ne.s32.totalorder %s140, %s141
    %p153 = scmp.eq.s32.totalorder %s21, 1
    %p154 = por %p152, %p153
    %p156 = scmp.ne.s32.totalorder %s141, %s155
    %p157 = scmp.eq.s32.totalorder %s21, 0
    %p158 = por %p156, %p157
    %s160 = sadd.s32 %s159, 1
    %p163 = scmp.eq.s32.totalorder %s15, 1
    %p164 = scmp.ne.s32.totalorder %s159, %s161
    %p165 = scmp.eq.s32.totalorder %s15, 0
    %p166 = por %p164, %p165
    %p167 = scmp.ne.s32.totalorder %s159, %s161
    %p168 = scmp.eq.s32.totalorder %s20, 1
    %p169 = por %p167, %p168
    %p170 = scmp.ne.s32.totalorder %s161, %s162
    %p171 = scmp.eq.s32.totalorder %s20, 0
    %p172 = por %p170, %p171
    %p173 = scmp.ne.s32.totalorder %s161, %s162
    %p174 = scmp.eq.s32.totalorder %s21, 1
    %p175 = por %p173, %p174
    %p177 = scmp.ne.s32.totalorder %s162, %s176
    %p178 = scmp.eq.s32.totalorder %s21, 0
    %p179 = por %p177, %p178
    %s181 = sadd.s32 %s180, 1
    %p184 = scmp.eq.s32.totalorder %s15, 1
    %p185 = scmp.ne.s32.totalorder %s180, %s182
    %p186 = scmp.eq.s32.totalorder %s15, 0
    %p187 = por %p185, %p186
    %p188 = scmp.ne.s32.totalorder %s180, %s182
    %p189 = scmp.eq.s32.totalorder %s20, 1
    %p190 = por %p188, %p189
    %p191 = scmp.ne.s32.totalorder %s182, %s183
    %p192 = scmp.eq.s32.totalorder %s20, 0
    %p193 = por %p191, %p192
    %p194 = scmp.ne.s32.totalorder %s182, %s183
    %p195 = scmp.eq.s32.totalorder %s21, 1
    %p196 = por %p194, %p195
    %p198 = scmp.ne.s32.totalorder %s183, %s197
    %p199 = scmp.eq.s32.totalorder %s21, 0
    %p200 = por %p198, %p199
    %s202 = sadd.s32 %s201, 1
    %p205 = scmp.eq.s32.totalorder %s15, 1
    %p206 = scmp.ne.s32.totalorder %s201, %s203
    %p207 = scmp.eq.s32.totalorder %s15, 0
    %p208 = por %p206, %p207
    %p209 = scmp.ne.s32.totalorder %s201, %s203
    %p210 = scmp.eq.s32.totalorder %s20, 1
    %p211 = por %p209, %p210
    %p212 = scmp.ne.s32.totalorder %s203, %s204
    %p213 = scmp.eq.s32.totalorder %s20, 0
    %p214 = por %p212, %p213
    %p215 = scmp.ne.s32.totalorder %s203, %s204
    %p216 = scmp.eq.s32.totalorder %s21, 1
    %p217 = por %p215, %p216
    %p219 = scmp.ne.s32.totalorder %s204, %s218
    %p220 = scmp.eq.s32.totalorder %s21, 0
    %p221 = por %p219, %p220
    %s222 = ssub.s32 %s15, %s22
    %p223 = scmp.eq.s32.totalorder %s222, 0
    %s225 = sadd.s32 %s224, 1
    %s226 = scalar_select %p223, %s224, %s225
    %p229 = pneg %p223
    %p230 = scmp.eq.s32.totalorder %s15, 1
    %p231 = por %p229, %p230
    %p232 = scmp.ne.s32.totalorder %s224, %s227
    %p233 = scmp.eq.s32.totalorder %s15, 0
    %p234 = por %p232, %p233
    %p235 = scmp.ne.s32.totalorder %s224, %s227
    %p236 = scmp.eq.s32.totalorder %s20, 1
    %p237 = por %p235, %p236
    %p238 = scmp.ne.s32.totalorder %s227, %s228
    %p239 = scmp.eq.s32.totalorder %s20, 0
    %p240 = por %p238, %p239
    %p241 = scmp.ne.s32.totalorder %s227, %s228
    %p242 = scmp.eq.s32.totalorder %s21, 1
    %p243 = por %p241, %p242
    %p245 = scmp.ne.s32.totalorder %s228, %s244
    %p246 = scmp.eq.s32.totalorder %s21, 0
    %p247 = por %p245, %p246
    %p248 = scmp.le.s32.totalorder 1, %s15
    %p249 = scmp.lt.s32.totalorder %s15, 3
    %p250 = pnand %p248, %p249
    %p251 = pneg %p250
    // Predicated region
    $region9: #{inverse_transform_2d.3} parent=5 // pred_check
      _
    $region10: #{inverse_transform_2d.3} parent=5 // pred_check_branch
      %253 = sbr.rel (%p250) target = $region12
    $region11: #{inverse_transform_2d.3} parent=5 // pred_region
      %s254 = ssub.s32 %s15, 1
      // Predicated region
      $region13: #{inverse_transform_2d.3} parent=11 // pred_check
        %p255 = pneg %p88
      $region14: #{inverse_transform_2d.3} parent=11 // pred_check_branch
        %257 = sbr.rel (%p255) target = $region16
      $region15: #{inverse_transform_2d.3} parent=11 // pred_region
        _
      $region16: #{inverse_transform_2d.3} parent=11 // pred_fallthru
        _
      // Predicated region
      $region17: #{inverse_transform_2d.3} parent=11 // pred_check
        %p258 = pneg %p109
      $region18: #{inverse_transform_2d.3} parent=11 // pred_check_branch
        %260 = sbr.rel (%p258) target = $region20
      $region19: #{inverse_transform_2d.3} parent=11 // pred_region
        _
      $region20: #{inverse_transform_2d.3} parent=11 // pred_fallthru
        _
      // Predicated region
      $region21: #{inverse_transform_2d.3} parent=11 // pred_check
        %p261 = pneg %p130
      $region22: #{inverse_transform_2d.3} parent=11 // pred_check_branch
        %263 = sbr.rel (%p261) target = $region24
      $region23: #{inverse_transform_2d.3} parent=11 // pred_region
        _
      $region24: #{inverse_transform_2d.3} parent=11 // pred_fallthru
        _
      // Predicated region
      $region25: #{inverse_transform_2d.3} parent=11 // pred_check
        %p264 = pneg %p151
      $region26: #{inverse_transform_2d.3} parent=11 // pred_check_branch
        %266 = sbr.rel (%p264) target = $region28
      $region27: #{inverse_transform_2d.3} parent=11 // pred_region
        _
      $region28: #{inverse_transform_2d.3} parent=11 // pred_fallthru
        _
      // Predicated region
      $region29: #{inverse_transform_2d.3} parent=11 // pred_check
        %p267 = pneg %p172
      $region30: #{inverse_transform_2d.3} parent=11 // pred_check_branch
        %269 = sbr.rel (%p267) target = $region32
      $region31: #{inverse_transform_2d.3} parent=11 // pred_region
        _
      $region32: #{inverse_transform_2d.3} parent=11 // pred_fallthru
        _
      // Predicated region
      $region33: #{inverse_transform_2d.3} parent=11 // pred_check
        %p270 = pneg %p193
      $region34: #{inverse_transform_2d.3} parent=11 // pred_check_branch
        %272 = sbr.rel (%p270) target = $region36
      $region35: #{inverse_transform_2d.3} parent=11 // pred_region
        _
      $region36: #{inverse_transform_2d.3} parent=11 // pred_fallthru
        _
      // Predicated region
      $region37: #{inverse_transform_2d.3} parent=11 // pred_check
        %p273 = pneg %p214
      $region38: #{inverse_transform_2d.3} parent=11 // pred_check_branch
        %275 = sbr.rel (%p273) target = $region40
      $region39: #{inverse_transform_2d.3} parent=11 // pred_region
        _
      $region40: #{inverse_transform_2d.3} parent=11 // pred_fallthru
        _
    $region12: #{inverse_transform_2d.3} parent=5 // pred_fallthru
      _
    %p276 = scmp.lt.s32.totalorder %s15, 2
    // Predicated region
    $region41: #{inverse_transform_2d.3} parent=5 // pred_check
      %p277 = pneg %p276
    $region42: #{inverse_transform_2d.3} parent=5 // pred_check_branch
      %279 = sbr.rel (%p277) target = $region44
    $region43: #{inverse_transform_2d.3} parent=5 // pred_region
      // Predicated region
      $region45: #{inverse_transform_2d.3} parent=43 // pred_check
        %p280 = pneg %p35
      $region46: #{inverse_transform_2d.3} parent=43 // pred_check_branch
        %282 = sbr.rel (%p280) target = $region48
      $region47: #{inverse_transform_2d.3} parent=43 // pred_region
        %p283 = scmp.lt.s32.totalorder %s15, 1
        %s284 = scalar_select %p283, %s15, 1
        %s285 = smul.addr %s284, 24
        %s286 = smul.addr %s285, 4
        %s287 = scalar_lea.vmem %s0, %s286
      $region48: #{inverse_transform_2d.3} parent=43 // pred_fallthru
        _
      // Predicated region
      $region49: #{inverse_transform_2d.3} parent=43 // pred_check
        %p288 = pneg %p61
      $region50: #{inverse_transform_2d.3} parent=43 // pred_check_branch
        %290 = sbr.rel (%p288) target = $region52
      $region51: #{inverse_transform_2d.3} parent=43 // pred_region
        %p291 = scmp.lt.s32.totalorder %s15, 1
        %s292 = scalar_select %p291, %s15, 1
        %s293 = smul.addr %s292, 24
        %s294 = smul.addr %s293, 4
        %s295 = scalar_lea.vmem %s1, %s294
      $region52: #{inverse_transform_2d.3} parent=43 // pred_fallthru
        _
    $region44: #{inverse_transform_2d.3} parent=5 // pred_fallthru
      _
    %p296 = scmp.le.s32.totalorder 1, %s15
    %p297 = scmp.lt.s32.totalorder %s15, 3
    %p298 = pnand %p296, %p297
    %p299 = pneg %p298
    // Predicated region
    $region53: #{inverse_transform_2d.3} parent=5 // pred_check
      _
    $region54: #{inverse_transform_2d.3} parent=5 // pred_check_branch
      %301 = sbr.rel (%p298) target = $region56
    $region55: #{inverse_transform_2d.3} parent=5 // pred_region
      %s302 = ssub.s32 %s15, 1
      %p303 = scmp.lt.s32.totalorder %s20, 1
      %s304 = scalar_select %p303, %s20, 1
      %s305 = smul.addr %s304, 24
      %s306 = smul.addr %s305, 4
      %s307 = scalar_lea.vmem %s0, %s306
      %p308 = pneg %p41
      %p309 = pneg %p38
      %p310 = scmp.lt.s32.totalorder %s20, 1
      %s311 = scalar_select %p310, %s20, 1
      %s312 = smul.addr %s311, 24
      %s313 = smul.addr %s312, 4
      %s314 = scalar_lea.vmem %s1, %s313
      %p315 = pneg %p67
      %p316 = pneg %p64
      %p317 = pneg %p88
      %p318 = pneg %p85
      %p319 = pneg %p109
      %p320 = pneg %p106
      %p321 = pneg %p130
      %p322 = pneg %p127
      %p323 = pneg %p151
      %p324 = pneg %p148
      %p325 = pneg %p172
      %p326 = pneg %p169
      %p327 = pneg %p193
      %p328 = pneg %p190
      %p329 = pneg %p214
      %p330 = pneg %p211
      %p331 = pneg %p240
      %p332 = pneg %p237
      %p333 = scmp.lt.s32.totalorder %s20, 1
      %s334 = scalar_select %p333, %s20, 1
      %s335 = smul.addr %s334, 3
      %s336 = smul.addr %s335, 8
      %s337 = scalar_lea.vmem %s9, %s336
      %p338 = scmp.lt.s32.totalorder %s20, 1
      %s339 = scalar_select %p338, %s20, 1
      %s340 = smul.addr %s339, 24
      %s341 = smul.addr %s340, 4
      %s342 = scalar_lea.vmem %s0, %s341
      %p343 = scmp.lt.s32.totalorder %s20, 1
      %s344 = scalar_select %p343, %s20, 1
      %s345 = smul.addr %s344, 24
      %s346 = smul.addr %s345, 4
      %s347 = scalar_lea.vmem %s1, %s346
      %p348 = scmp.lt.s32.totalorder %s20, 1
      %s349 = scalar_select %p348, %s20, 1
      %s350 = smul.addr %s349, 3
      %s351 = smul.addr %s350, 8
      %s352 = scalar_lea.vmem %s9, %s351
      %v354 = vld [vmem:[%s342] sm:$0xff]
      %v355 = vld [vmem:[%s342 + $0x8] sm:$0xff]
      %v356 = vld [vmem:[%s342 + $0x10] sm:$0xff]
      %v357 = vld [vmem:[%s342 + $0x18] sm:$0xff]
      %v358 = vld [vmem:[%s342 + $0x20] sm:$0xff]
      %v359 = vld [vmem:[%s342 + $0x28] sm:$0xff]
      %v360 = vld [vmem:[%s342 + $0x30] sm:$0xff]
      %v361 = vld [vmem:[%s342 + $0x38] sm:$0xff]
      %v362 = vld [vmem:[%s342 + $0x40] sm:$0x11]
      %v363 = vld [vmem:[%s342 + $0x48] sm:$0x11]
      %v364 = vld [vmem:[%s342 + $0x50] sm:$0x11]
      %v365 = vld [vmem:[%s342 + $0x58] sm:$0x11]
      %v366 = vld [vmem:[%s2] sm:$0xf]
      %v367 = vld [vmem:[%s2 + $0x4] sm:$0xf]
      %v368 = vld [vmem:[%s2 + $0x8] sm:$0xf]
      %v369 = vld [vmem:[%s2 + $0xc] sm:$0xf]
      %v370 = vld [vmem:[%s2 + $0x10] sm:$0xf]
      %v371 = vld [vmem:[%s2 + $0x14] sm:$0xf]
      %v372 = vld [vmem:[%s2 + $0x18] sm:$0xf]
      %v373 = vld [vmem:[%s2 + $0x1c] sm:$0xf]
      %v374 = vld [vmem:[%s2 + $0x20] sm:$0xf]
      %v375 = vld [vmem:[%s2 + $0x24] sm:$0xf]
      %v376 = vld [vmem:[%s2 + $0x28] sm:$0xf]
      %v377 = vld [vmem:[%s2 + $0x2c] sm:$0xf]
      %v378 = vld [vmem:[%s2 + $0x30] sm:$0xf]
      %v379 = vld [vmem:[%s2 + $0x34] sm:$0xf]
      %v380 = vld [vmem:[%s2 + $0x38] sm:$0xf]
      %v381 = vld [vmem:[%s2 + $0x3c] sm:$0xf]
      %v382 = vld [vmem:[%s2 + $0x40] sm:$0xf]
      %v383 = vld [vmem:[%s2 + $0x44] sm:$0xf]
      %v384 = vld [vmem:[%s2 + $0x48] sm:$0xf]
      %v385 = vld [vmem:[%s2 + $0x4c] sm:$0xf]
      %v386 = vld [vmem:[%s2 + $0x50] sm:$0xf]
      %v387 = vld [vmem:[%s2 + $0x54] sm:$0xf]
      %v388 = vld [vmem:[%s2 + $0x58] sm:$0xf]
      %v389 = vld [vmem:[%s2 + $0x5c] sm:$0xf]
      %v390 = vld [vmem:[%s2 + $0x60] sm:$0xf]
      %v391 = vld [vmem:[%s2 + $0x64] sm:$0xf]
      %v392 = vld [vmem:[%s2 + $0x68] sm:$0xf]
      %v393 = vld [vmem:[%s2 + $0x6c] sm:$0xf]
      %v394 = vld [vmem:[%s2 + $0x70] sm:$0xf]
      %v395 = vld [vmem:[%s2 + $0x74] sm:$0xf]
      %v396 = vld [vmem:[%s2 + $0x78] sm:$0xf]
      %v397 = vld [vmem:[%s2 + $0x7c] sm:$0xf]
      %v398 = vld [vmem:[%s2 + $0x80] sm:$0xf]
      %v399 = vld [vmem:[%s2 + $0x84] sm:$0xf]
      %v400 = vld [vmem:[%s2 + $0x88] sm:$0xf]
      %v401 = vld [vmem:[%s2 + $0x8c] sm:$0xf]
      %v402 = vld [vmem:[%s2 + $0x90] sm:$0xf]
      %v403 = vld [vmem:[%s2 + $0x94] sm:$0xf]
      %v404 = vld [vmem:[%s2 + $0x98] sm:$0xf]
      %v405 = vld [vmem:[%s2 + $0x9c] sm:$0xf]
      %v406 = vld [vmem:[%s2 + $0xa0] sm:$0xf]
      %v407 = vld [vmem:[%s2 + $0xa4] sm:$0xf]
      %v408 = vld [vmem:[%s2 + $0xa8] sm:$0xf]
      %v409 = vld [vmem:[%s2 + $0xac] sm:$0xf]
      %v410 = vld [vmem:[%s2 + $0xb0] sm:$0xf]
      %v411 = vld [vmem:[%s2 + $0xb4] sm:$0xf]
      %v412 = vld [vmem:[%s2 + $0xb8] sm:$0xf]
      %v413 = vld [vmem:[%s2 + $0xbc] sm:$0xf]
      %v414 = vld [vmem:[%s2 + $0xc0] sm:$0xf]
      %v415 = vld [vmem:[%s2 + $0xc4] sm:$0xf]
      %v416 = vld [vmem:[%s2 + $0xc8] sm:$0xf]
      %v417 = vld [vmem:[%s2 + $0xcc] sm:$0xf]
      %v418 = vld [vmem:[%s2 + $0xd0] sm:$0xf]
      %v419 = vld [vmem:[%s2 + $0xd4] sm:$0xf]
      %v420 = vld [vmem:[%s2 + $0xd8] sm:$0xf]
      %v421 = vld [vmem:[%s2 + $0xdc] sm:$0xf]
      %v422 = vld [vmem:[%s2 + $0xe0] sm:$0xf]
      %v423 = vld [vmem:[%s2 + $0xe4] sm:$0xf]
      %v424 = vld [vmem:[%s2 + $0xe8] sm:$0xf]
      %v425 = vld [vmem:[%s2 + $0xec] sm:$0xf]
      %v426 = vld [vmem:[%s2 + $0xf0] sm:$0xf]
      %v427 = vld [vmem:[%s2 + $0xf4] sm:$0xf]
      %v428 = vld [vmem:[%s2 + $0xf8] sm:$0xf]
      %v429 = vld [vmem:[%s2 + $0xfc] sm:$0xf]
      %v430 = vld [vmem:[%s2 + $0x100] sm:$0xf]
      %v431 = vld [vmem:[%s2 + $0x104] sm:$0xf]
      %v432 = vld [vmem:[%s2 + $0x108] sm:$0xf]
      %v433 = vld [vmem:[%s2 + $0x10c] sm:$0xf]
      %v434 = vld [vmem:[%s2 + $0x110] sm:$0xf]
      %v435 = vld [vmem:[%s2 + $0x114] sm:$0xf]
      %v436 = vld [vmem:[%s2 + $0x118] sm:$0xf]
      %v437 = vld [vmem:[%s2 + $0x11c] sm:$0xf]
      %v438 = vld [vmem:[%s2 + $0x120] sm:$0xf]
      %v439 = vld [vmem:[%s2 + $0x124] sm:$0xf]
      %v440 = vld [vmem:[%s2 + $0x128] sm:$0xf]
      %v441 = vld [vmem:[%s2 + $0x12c] sm:$0xf]
      %v442 = vld [vmem:[%s2 + $0x130] sm:$0xf]
      %v443 = vld [vmem:[%s2 + $0x134] sm:$0xf]
      %v444 = vld [vmem:[%s2 + $0x138] sm:$0xf]
      %v445 = vld [vmem:[%s2 + $0x13c] sm:$0xf]
      %v446 = vld [vmem:[%s2 + $0x140] sm:$0xf]
      %v447 = vld [vmem:[%s2 + $0x144] sm:$0xf]
      %v448 = vld [vmem:[%s2 + $0x148] sm:$0xf]
      %v449 = vld [vmem:[%s2 + $0x14c] sm:$0xf]
      %v450 = vld [vmem:[%s2 + $0x150] sm:$0xf]
      %v451 = vld [vmem:[%s2 + $0x154] sm:$0xf]
      %v452 = vld [vmem:[%s2 + $0x158] sm:$0xf]
      %v453 = vld [vmem:[%s2 + $0x15c] sm:$0xf]
      %v454 = vld [vmem:[%s2 + $0x160] sm:$0xf]
      %v455 = vld [vmem:[%s2 + $0x164] sm:$0xf]
      %v456 = vld [vmem:[%s2 + $0x168] sm:$0xf]
      %v457 = vld [vmem:[%s2 + $0x16c] sm:$0xf]
      %v458 = vld [vmem:[%s2 + $0x170] sm:$0xf]
      %v459 = vld [vmem:[%s2 + $0x174] sm:$0xf]
      %v460 = vld [vmem:[%s2 + $0x178] sm:$0xf]
      %v461 = vld [vmem:[%s2 + $0x17c] sm:$0xf]
      %v462 = vld [vmem:[%s2 + $0x180] sm:$0xf]
      %v463 = vld [vmem:[%s2 + $0x184] sm:$0xf]
      %v464 = vld [vmem:[%s2 + $0x188] sm:$0xf]
      %v465 = vld [vmem:[%s2 + $0x18c] sm:$0xf]
      %v466 = vld [vmem:[%s2 + $0x190] sm:$0xf]
      %v467 = vld [vmem:[%s2 + $0x194] sm:$0xf]
      %v468 = vld [vmem:[%s2 + $0x198] sm:$0xf]
      %v469 = vld [vmem:[%s2 + $0x19c] sm:$0xf]
      %v470 = vld [vmem:[%s2 + $0x1a0] sm:$0xf]
      %v471 = vld [vmem:[%s2 + $0x1a4] sm:$0xf]
      %v472 = vld [vmem:[%s2 + $0x1a8] sm:$0xf]
      %v473 = vld [vmem:[%s2 + $0x1ac] sm:$0xf]
      %v474 = vld [vmem:[%s2 + $0x1b0] sm:$0xf]
      %v475 = vld [vmem:[%s2 + $0x1b4] sm:$0xf]
      %v476 = vld [vmem:[%s2 + $0x1b8] sm:$0xf]
      %v477 = vld [vmem:[%s2 + $0x1bc] sm:$0xf]
      %v478 = vld [vmem:[%s2 + $0x1c0] sm:$0xf]
      %v479 = vld [vmem:[%s2 + $0x1c4] sm:$0xf]
      %v480 = vld [vmem:[%s2 + $0x1c8] sm:$0xf]
      %v481 = vld [vmem:[%s2 + $0x1cc] sm:$0xf]
      %v482 = vld [vmem:[%s2 + $0x1d0] sm:$0xf]
      %v483 = vld [vmem:[%s2 + $0x1d4] sm:$0xf]
      %v484 = vld [vmem:[%s2 + $0x1d8] sm:$0xf]
      %v485 = vld [vmem:[%s2 + $0x1dc] sm:$0xf]
      %v486 = vld [vmem:[%s2 + $0x1e0] sm:$0xf]
      %v487 = vld [vmem:[%s2 + $0x1e4] sm:$0xf]
      %v488 = vld [vmem:[%s2 + $0x1e8] sm:$0xf]
      %v489 = vld [vmem:[%s2 + $0x1ec] sm:$0xf]
      %v490 = vld [vmem:[%s2 + $0x1f0] sm:$0xf]
      %v491 = vld [vmem:[%s2 + $0x1f4] sm:$0xf]
      %v492 = vld [vmem:[%s2 + $0x1f8] sm:$0xf]
      %v493 = vld [vmem:[%s2 + $0x1fc] sm:$0xf]
      %v494 = vld [vmem:[%s347] sm:$0xff]
      %v495 = vld [vmem:[%s347 + $0x8] sm:$0xff]
      %v496 = vld [vmem:[%s347 + $0x10] sm:$0xff]
      %v497 = vld [vmem:[%s347 + $0x18] sm:$0xff]
      %v498 = vld [vmem:[%s347 + $0x20] sm:$0xff]
      %v499 = vld [vmem:[%s347 + $0x28] sm:$0xff]
      %v500 = vld [vmem:[%s347 + $0x30] sm:$0xff]
      %v501 = vld [vmem:[%s347 + $0x38] sm:$0xff]
      %v502 = vld [vmem:[%s347 + $0x40] sm:$0x11]
      %v503 = vld [vmem:[%s347 + $0x48] sm:$0x11]
      %v504 = vld [vmem:[%s347 + $0x50] sm:$0x11]
      %v505 = vld [vmem:[%s347 + $0x58] sm:$0x11]
      %v506 = vld [vmem:[%s3] sm:$0xf]
      %v507 = vld [vmem:[%s3 + $0x4] sm:$0xf]
      %v508 = vld [vmem:[%s3 + $0x8] sm:$0xf]
      %v509 = vld [vmem:[%s3 + $0xc] sm:$0xf]
      %v510 = vld [vmem:[%s3 + $0x10] sm:$0xf]
      %v511 = vld [vmem:[%s3 + $0x14] sm:$0xf]
      %v512 = vld [vmem:[%s3 + $0x18] sm:$0xf]
      %v513 = vld [vmem:[%s3 + $0x1c] sm:$0xf]
      %v514 = vld [vmem:[%s3 + $0x20] sm:$0xf]
      %v515 = vld [vmem:[%s3 + $0x24] sm:$0xf]
      %v516 = vld [vmem:[%s3 + $0x28] sm:$0xf]
      %v517 = vld [vmem:[%s3 + $0x2c] sm:$0xf]
      %v518 = vld [vmem:[%s3 + $0x30] sm:$0xf]
      %v519 = vld [vmem:[%s3 + $0x34] sm:$0xf]
      %v520 = vld [vmem:[%s3 + $0x38] sm:$0xf]
      %v521 = vld [vmem:[%s3 + $0x3c] sm:$0xf]
      %v522 = vld [vmem:[%s3 + $0x40] sm:$0xf]
      %v523 = vld [vmem:[%s3 + $0x44] sm:$0xf]
      %v524 = vld [vmem:[%s3 + $0x48] sm:$0xf]
      %v525 = vld [vmem:[%s3 + $0x4c] sm:$0xf]
      %v526 = vld [vmem:[%s3 + $0x50] sm:$0xf]
      %v527 = vld [vmem:[%s3 + $0x54] sm:$0xf]
      %v528 = vld [vmem:[%s3 + $0x58] sm:$0xf]
      %v529 = vld [vmem:[%s3 + $0x5c] sm:$0xf]
      %v530 = vld [vmem:[%s3 + $0x60] sm:$0xf]
      %v531 = vld [vmem:[%s3 + $0x64] sm:$0xf]
      %v532 = vld [vmem:[%s3 + $0x68] sm:$0xf]
      %v533 = vld [vmem:[%s3 + $0x6c] sm:$0xf]
      %v534 = vld [vmem:[%s3 + $0x70] sm:$0xf]
      %v535 = vld [vmem:[%s3 + $0x74] sm:$0xf]
      %v536 = vld [vmem:[%s3 + $0x78] sm:$0xf]
      %v537 = vld [vmem:[%s3 + $0x7c] sm:$0xf]
      %v538 = vld [vmem:[%s3 + $0x80] sm:$0xf]
      %v539 = vld [vmem:[%s3 + $0x84] sm:$0xf]
      %v540 = vld [vmem:[%s3 + $0x88] sm:$0xf]
      %v541 = vld [vmem:[%s3 + $0x8c] sm:$0xf]
      %v542 = vld [vmem:[%s3 + $0x90] sm:$0xf]
      %v543 = vld [vmem:[%s3 + $0x94] sm:$0xf]
      %v544 = vld [vmem:[%s3 + $0x98] sm:$0xf]
      %v545 = vld [vmem:[%s3 + $0x9c] sm:$0xf]
      %v546 = vld [vmem:[%s3 + $0xa0] sm:$0xf]
      %v547 = vld [vmem:[%s3 + $0xa4] sm:$0xf]
      %v548 = vld [vmem:[%s3 + $0xa8] sm:$0xf]
      %v549 = vld [vmem:[%s3 + $0xac] sm:$0xf]
      %v550 = vld [vmem:[%s3 + $0xb0] sm:$0xf]
      %v551 = vld [vmem:[%s3 + $0xb4] sm:$0xf]
      %v552 = vld [vmem:[%s3 + $0xb8] sm:$0xf]
      %v553 = vld [vmem:[%s3 + $0xbc] sm:$0xf]
      %v554 = vld [vmem:[%s3 + $0xc0] sm:$0xf]
      %v555 = vld [vmem:[%s3 + $0xc4] sm:$0xf]
      %v556 = vld [vmem:[%s3 + $0xc8] sm:$0xf]
      %v557 = vld [vmem:[%s3 + $0xcc] sm:$0xf]
      %v558 = vld [vmem:[%s3 + $0xd0] sm:$0xf]
      %v559 = vld [vmem:[%s3 + $0xd4] sm:$0xf]
      %v560 = vld [vmem:[%s3 + $0xd8] sm:$0xf]
      %v561 = vld [vmem:[%s3 + $0xdc] sm:$0xf]
      %v562 = vld [vmem:[%s3 + $0xe0] sm:$0xf]
      %v563 = vld [vmem:[%s3 + $0xe4] sm:$0xf]
      %v564 = vld [vmem:[%s3 + $0xe8] sm:$0xf]
      %v565 = vld [vmem:[%s3 + $0xec] sm:$0xf]
      %v566 = vld [vmem:[%s3 + $0xf0] sm:$0xf]
      %v567 = vld [vmem:[%s3 + $0xf4] sm:$0xf]
      %v568 = vld [vmem:[%s3 + $0xf8] sm:$0xf]
      %v569 = vld [vmem:[%s3 + $0xfc] sm:$0xf]
      %v570 = vld [vmem:[%s3 + $0x100] sm:$0xf]
      %v571 = vld [vmem:[%s3 + $0x104] sm:$0xf]
      %v572 = vld [vmem:[%s3 + $0x108] sm:$0xf]
      %v573 = vld [vmem:[%s3 + $0x10c] sm:$0xf]
      %v574 = vld [vmem:[%s3 + $0x110] sm:$0xf]
      %v575 = vld [vmem:[%s3 + $0x114] sm:$0xf]
      %v576 = vld [vmem:[%s3 + $0x118] sm:$0xf]
      %v577 = vld [vmem:[%s3 + $0x11c] sm:$0xf]
      %v578 = vld [vmem:[%s3 + $0x120] sm:$0xf]
      %v579 = vld [vmem:[%s3 + $0x124] sm:$0xf]
      %v580 = vld [vmem:[%s3 + $0x128] sm:$0xf]
      %v581 = vld [vmem:[%s3 + $0x12c] sm:$0xf]
      %v582 = vld [vmem:[%s3 + $0x130] sm:$0xf]
      %v583 = vld [vmem:[%s3 + $0x134] sm:$0xf]
      %v584 = vld [vmem:[%s3 + $0x138] sm:$0xf]
      %v585 = vld [vmem:[%s3 + $0x13c] sm:$0xf]
      %v586 = vld [vmem:[%s3 + $0x140] sm:$0xf]
      %v587 = vld [vmem:[%s3 + $0x144] sm:$0xf]
      %v588 = vld [vmem:[%s3 + $0x148] sm:$0xf]
      %v589 = vld [vmem:[%s3 + $0x14c] sm:$0xf]
      %v590 = vld [vmem:[%s3 + $0x150] sm:$0xf]
      %v591 = vld [vmem:[%s3 + $0x154] sm:$0xf]
      %v592 = vld [vmem:[%s3 + $0x158] sm:$0xf]
      %v593 = vld [vmem:[%s3 + $0x15c] sm:$0xf]
      %v594 = vld [vmem:[%s3 + $0x160] sm:$0xf]
      %v595 = vld [vmem:[%s3 + $0x164] sm:$0xf]
      %v596 = vld [vmem:[%s3 + $0x168] sm:$0xf]
      %v597 = vld [vmem:[%s3 + $0x16c] sm:$0xf]
      %v598 = vld [vmem:[%s3 + $0x170] sm:$0xf]
      %v599 = vld [vmem:[%s3 + $0x174] sm:$0xf]
      %v600 = vld [vmem:[%s3 + $0x178] sm:$0xf]
      %v601 = vld [vmem:[%s3 + $0x17c] sm:$0xf]
      %v602 = vld [vmem:[%s3 + $0x180] sm:$0xf]
      %v603 = vld [vmem:[%s3 + $0x184] sm:$0xf]
      %v604 = vld [vmem:[%s3 + $0x188] sm:$0xf]
      %v605 = vld [vmem:[%s3 + $0x18c] sm:$0xf]
      %v606 = vld [vmem:[%s3 + $0x190] sm:$0xf]
      %v607 = vld [vmem:[%s3 + $0x194] sm:$0xf]
      %v608 = vld [vmem:[%s3 + $0x198] sm:$0xf]
      %v609 = vld [vmem:[%s3 + $0x19c] sm:$0xf]
      %v610 = vld [vmem:[%s3 + $0x1a0] sm:$0xf]
      %v611 = vld [vmem:[%s3 + $0x1a4] sm:$0xf]
      %v612 = vld [vmem:[%s3 + $0x1a8] sm:$0xf]
      %v613 = vld [vmem:[%s3 + $0x1ac] sm:$0xf]
      %v614 = vld [vmem:[%s3 + $0x1b0] sm:$0xf]
      %v615 = vld [vmem:[%s3 + $0x1b4] sm:$0xf]
      %v616 = vld [vmem:[%s3 + $0x1b8] sm:$0xf]
      %v617 = vld [vmem:[%s3 + $0x1bc] sm:$0xf]
      %v618 = vld [vmem:[%s3 + $0x1c0] sm:$0xf]
      %v619 = vld [vmem:[%s3 + $0x1c4] sm:$0xf]
      %v620 = vld [vmem:[%s3 + $0x1c8] sm:$0xf]
      %v621 = vld [vmem:[%s3 + $0x1cc] sm:$0xf]
      %v622 = vld [vmem:[%s3 + $0x1d0] sm:$0xf]
      %v623 = vld [vmem:[%s3 + $0x1d4] sm:$0xf]
      %v624 = vld [vmem:[%s3 + $0x1d8] sm:$0xf]
      %v625 = vld [vmem:[%s3 + $0x1dc] sm:$0xf]
      %v626 = vld [vmem:[%s3 + $0x1e0] sm:$0xf]
      %v627 = vld [vmem:[%s3 + $0x1e4] sm:$0xf]
      %v628 = vld [vmem:[%s3 + $0x1e8] sm:$0xf]
      %v629 = vld [vmem:[%s3 + $0x1ec] sm:$0xf]
      %v630 = vld [vmem:[%s3 + $0x1f0] sm:$0xf]
      %v631 = vld [vmem:[%s3 + $0x1f4] sm:$0xf]
      %v632 = vld [vmem:[%s3 + $0x1f8] sm:$0xf]
      %v633 = vld [vmem:[%s3 + $0x1fc] sm:$0xf]
      %v646 = vunpack.c.l.b16 %v494
      %v647 = vunpack.c.h.b16 %v494
      %v648 = vunpack.c.l.b16 %v495
      %v649 = vunpack.c.h.b16 %v495
      %v650 = vunpack.c.l.b16 %v496
      %v651 = vunpack.c.h.b16 %v496
      %v652 = vunpack.c.l.b16 %v497
      %v653 = vunpack.c.h.b16 %v497
      %v654 = vunpack.c.l.b16 %v498
      %v655 = vunpack.c.h.b16 %v498
      %v656 = vunpack.c.l.b16 %v499
      %v657 = vunpack.c.h.b16 %v499
      %v658 = vunpack.c.l.b16 %v500
      %v659 = vunpack.c.h.b16 %v500
      %v660 = vunpack.c.l.b16 %v501
      %v661 = vunpack.c.h.b16 %v501
      %v662 = vunpack.c.l.b16 %v502
      %v663 = vunpack.c.h.b16 %v502
      %v664 = vunpack.c.l.b16 %v503
      %v665 = vunpack.c.h.b16 %v503
      %v666 = vunpack.c.l.b16 %v504
      %v667 = vunpack.c.h.b16 %v504
      %v668 = vunpack.c.l.b16 %v505
      %v669 = vunpack.c.h.b16 %v505
      %v670 = vpack.c.b16 %v654, %v646
      %v671 = vpack.c.b16 %v655, %v647
      %v672 = vpack.c.b16 %v656, %v648
      %v673 = vpack.c.b16 %v657, %v649
      %v674 = vpack.c.b16 %v658, %v650
      %v675 = vpack.c.b16 %v659, %v651
      %v676 = vpack.c.b16 %v660, %v652
      %v677 = vpack.c.b16 %v661, %v653
      %v678 = vpack.c.b16 %v662, %v662
      %v679 = vpack.c.b16 %v663, %v663
      %v680 = vpack.c.b16 %v664, %v664
      %v681 = vpack.c.b16 %v665, %v665
      %v682 = vpack.c.b16 %v666, %v666
      %v683 = vpack.c.b16 %v667, %v667
      %v684 = vpack.c.b16 %v668, %v668
      %v685 = vpack.c.b16 %v669, %v669
      %v830 = vunpack.c.l.b16 %v506
      %v831 = vunpack.c.l.b16 %v507
      %v832 = vunpack.c.l.b16 %v508
      %v833 = vunpack.c.l.b16 %v509
      %v834 = vunpack.c.l.b16 %v510
      %v835 = vunpack.c.l.b16 %v511
      %v836 = vunpack.c.l.b16 %v512
      %v837 = vunpack.c.l.b16 %v513
      %v838 = vunpack.c.l.b16 %v514
      %v839 = vunpack.c.l.b16 %v515
      %v840 = vunpack.c.l.b16 %v516
      %v841 = vunpack.c.l.b16 %v517
      %v842 = vunpack.c.l.b16 %v518
      %v843 = vunpack.c.l.b16 %v519
      %v844 = vunpack.c.l.b16 %v520
      %v845 = vunpack.c.l.b16 %v521
      %v846 = vunpack.c.l.b16 %v522
      %v847 = vunpack.c.l.b16 %v523
      %v848 = vunpack.c.l.b16 %v524
      %v849 = vunpack.c.l.b16 %v525
      %v850 = vunpack.c.l.b16 %v526
      %v851 = vunpack.c.l.b16 %v527
      %v852 = vunpack.c.l.b16 %v528
      %v853 = vunpack.c.l.b16 %v529
      %v854 = vunpack.c.l.b16 %v530
      %v855 = vunpack.c.l.b16 %v531
      %v856 = vunpack.c.l.b16 %v532
      %v857 = vunpack.c.l.b16 %v533
      %v858 = vunpack.c.l.b16 %v534
      %v859 = vunpack.c.l.b16 %v535
      %v860 = vunpack.c.l.b16 %v536
      %v861 = vunpack.c.l.b16 %v537
      %v862 = vunpack.c.l.b16 %v538
      %v863 = vunpack.c.l.b16 %v539
      %v864 = vunpack.c.l.b16 %v540
      %v865 = vunpack.c.l.b16 %v541
      %v866 = vunpack.c.l.b16 %v542
      %v867 = vunpack.c.l.b16 %v543
      %v868 = vunpack.c.l.b16 %v544
      %v869 = vunpack.c.l.b16 %v545
      %v870 = vunpack.c.l.b16 %v546
      %v871 = vunpack.c.l.b16 %v547
      %v872 = vunpack.c.l.b16 %v548
      %v873 = vunpack.c.l.b16 %v549
      %v874 = vunpack.c.l.b16 %v550
      %v875 = vunpack.c.l.b16 %v551
      %v876 = vunpack.c.l.b16 %v552
      %v877 = vunpack.c.l.b16 %v553
      %v878 = vunpack.c.l.b16 %v554
      %v879 = vunpack.c.l.b16 %v555
      %v880 = vunpack.c.l.b16 %v556
      %v881 = vunpack.c.l.b16 %v557
      %v882 = vunpack.c.l.b16 %v558
      %v883 = vunpack.c.l.b16 %v559
      %v884 = vunpack.c.l.b16 %v560
      %v885 = vunpack.c.l.b16 %v561
      %v886 = vunpack.c.l.b16 %v562
      %v887 = vunpack.c.l.b16 %v563
      %v888 = vunpack.c.l.b16 %v564
      %v889 = vunpack.c.l.b16 %v565
      %v890 = vunpack.c.l.b16 %v566
      %v891 = vunpack.c.l.b16 %v567
      %v892 = vunpack.c.l.b16 %v568
      %v893 = vunpack.c.l.b16 %v569
      %v894 = vunpack.c.l.b16 %v570
      %v895 = vunpack.c.l.b16 %v571
      %v896 = vunpack.c.l.b16 %v572
      %v897 = vunpack.c.l.b16 %v573
      %v898 = vunpack.c.l.b16 %v574
      %v899 = vunpack.c.l.b16 %v575
      %v900 = vunpack.c.l.b16 %v576
      %v901 = vunpack.c.l.b16 %v577
      %v902 = vunpack.c.l.b16 %v578
      %v903 = vunpack.c.l.b16 %v579
      %v904 = vunpack.c.l.b16 %v580
      %v905 = vunpack.c.l.b16 %v581
      %v906 = vunpack.c.l.b16 %v582
      %v907 = vunpack.c.l.b16 %v583
      %v908 = vunpack.c.l.b16 %v584
      %v909 = vunpack.c.l.b16 %v585
      %v910 = vunpack.c.l.b16 %v586
      %v911 = vunpack.c.l.b16 %v587
      %v912 = vunpack.c.l.b16 %v588
      %v913 = vunpack.c.l.b16 %v589
      %v914 = vunpack.c.l.b16 %v590
      %v915 = vunpack.c.l.b16 %v591
      %v916 = vunpack.c.l.b16 %v592
      %v917 = vunpack.c.l.b16 %v593
      %v918 = vunpack.c.l.b16 %v594
      %v919 = vunpack.c.l.b16 %v595
      %v920 = vunpack.c.l.b16 %v596
      %v921 = vunpack.c.l.b16 %v597
      %v922 = vunpack.c.l.b16 %v598
      %v923 = vunpack.c.l.b16 %v599
      %v924 = vunpack.c.l.b16 %v600
      %v925 = vunpack.c.l.b16 %v601
      %v926 = vunpack.c.l.b16 %v602
      %v927 = vunpack.c.l.b16 %v603
      %v928 = vunpack.c.l.b16 %v604
      %v929 = vunpack.c.l.b16 %v605
      %v930 = vunpack.c.l.b16 %v606
      %v931 = vunpack.c.l.b16 %v607
      %v932 = vunpack.c.l.b16 %v608
      %v933 = vunpack.c.l.b16 %v609
      %v934 = vunpack.c.l.b16 %v610
      %v935 = vunpack.c.l.b16 %v611
      %v936 = vunpack.c.l.b16 %v612
      %v937 = vunpack.c.l.b16 %v613
      %v938 = vunpack.c.l.b16 %v614
      %v939 = vunpack.c.l.b16 %v615
      %v940 = vunpack.c.l.b16 %v616
      %v941 = vunpack.c.l.b16 %v617
      %v942 = vunpack.c.l.b16 %v618
      %v943 = vunpack.c.l.b16 %v619
      %v944 = vunpack.c.l.b16 %v620
      %v945 = vunpack.c.l.b16 %v621
      %v946 = vunpack.c.l.b16 %v622
      %v947 = vunpack.c.l.b16 %v623
      %v948 = vunpack.c.l.b16 %v624
      %v949 = vunpack.c.l.b16 %v625
      %v950 = vunpack.c.l.b16 %v626
      %v951 = vunpack.c.l.b16 %v627
      %v952 = vunpack.c.l.b16 %v628
      %v953 = vunpack.c.l.b16 %v629
      %v954 = vunpack.c.l.b16 %v630
      %v955 = vunpack.c.l.b16 %v631
      %v956 = vunpack.c.l.b16 %v632
      %v957 = vunpack.c.l.b16 %v633
      %v958 = vpack.c.b16 %v831, %v830
      %v959 = vpack.c.b16 %v833, %v832
      %v960 = vpack.c.b16 %v835, %v834
      %v961 = vpack.c.b16 %v837, %v836
      %v962 = vpack.c.b16 %v839, %v838
      %v963 = vpack.c.b16 %v841, %v840
      %v964 = vpack.c.b16 %v843, %v842
      %v965 = vpack.c.b16 %v845, %v844
      %v966 = vpack.c.b16 %v847, %v846
      %v967 = vpack.c.b16 %v849, %v848
      %v968 = vpack.c.b16 %v851, %v850
      %v969 = vpack.c.b16 %v853, %v852
      %v970 = vpack.c.b16 %v855, %v854
      %v971 = vpack.c.b16 %v857, %v856
      %v972 = vpack.c.b16 %v859, %v858
      %v973 = vpack.c.b16 %v861, %v860
      %v974 = vpack.c.b16 %v863, %v862
      %v975 = vpack.c.b16 %v865, %v864
      %v976 = vpack.c.b16 %v867, %v866
      %v977 = vpack.c.b16 %v869, %v868
      %v978 = vpack.c.b16 %v871, %v870
      %v979 = vpack.c.b16 %v873, %v872
      %v980 = vpack.c.b16 %v875, %v874
      %v981 = vpack.c.b16 %v877, %v876
      %v982 = vpack.c.b16 %v879, %v878
      %v983 = vpack.c.b16 %v881, %v880
      %v984 = vpack.c.b16 %v883, %v882
      %v985 = vpack.c.b16 %v885, %v884
      %v986 = vpack.c.b16 %v887, %v886
      %v987 = vpack.c.b16 %v889, %v888
      %v988 = vpack.c.b16 %v891, %v890
      %v989 = vpack.c.b16 %v893, %v892
      %v990 = vpack.c.b16 %v895, %v894
      %v991 = vpack.c.b16 %v897, %v896
      %v992 = vpack.c.b16 %v899, %v898
      %v993 = vpack.c.b16 %v901, %v900
      %v994 = vpack.c.b16 %v903, %v902
      %v995 = vpack.c.b16 %v905, %v904
      %v996 = vpack.c.b16 %v907, %v906
      %v997 = vpack.c.b16 %v909, %v908
      %v998 = vpack.c.b16 %v911, %v910
      %v999 = vpack.c.b16 %v913, %v912
      %v1000 = vpack.c.b16 %v915, %v914
      %v1001 = vpack.c.b16 %v917, %v916
      %v1002 = vpack.c.b16 %v919, %v918
      %v1003 = vpack.c.b16 %v921, %v920
      %v1004 = vpack.c.b16 %v923, %v922
      %v1005 = vpack.c.b16 %v925, %v924
      %v1006 = vpack.c.b16 %v927, %v926
      %v1007 = vpack.c.b16 %v929, %v928
      %v1008 = vpack.c.b16 %v931, %v930
      %v1009 = vpack.c.b16 %v933, %v932
      %v1010 = vpack.c.b16 %v935, %v934
      %v1011 = vpack.c.b16 %v937, %v936
      %v1012 = vpack.c.b16 %v939, %v938
      %v1013 = vpack.c.b16 %v941, %v940
      %v1014 = vpack.c.b16 %v943, %v942
      %v1015 = vpack.c.b16 %v945, %v944
      %v1016 = vpack.c.b16 %v947, %v946
      %v1017 = vpack.c.b16 %v949, %v948
      %v1018 = vpack.c.b16 %v951, %v950
      %v1019 = vpack.c.b16 %v953, %v952
      %v1020 = vpack.c.b16 %v955, %v954
      %v1021 = vpack.c.b16 %v957, %v956
      %1086 = vmatprep.subr.bf16.mxu0 0
      %1087 = vmatpush1.bf16.msra.mxu0 %v958
      %1088 = vmatprep.subr.bf16.mxu0 0
      %1089 = vmatpush1.bf16.msra.mxu0 %v959
      %1090 = vmatprep.subr.bf16.mxu0 0
      %1091 = vmatpush1.bf16.msra.mxu0 %v960
      %1092 = vmatprep.subr.bf16.mxu0 0
      %1093 = vmatpush1.bf16.msra.mxu0 %v961
      %1094 = vmatprep.subr.bf16.mxu0 0
      %1095 = vmatpush1.bf16.msra.mxu0 %v962
      %1096 = vmatprep.subr.bf16.mxu0 0
      %1097 = vmatpush1.bf16.msra.mxu0 %v963
      %1098 = vmatprep.subr.bf16.mxu0 0
      %1099 = vmatpush1.bf16.msra.mxu0 %v964
      %1100 = vmatprep.subr.bf16.mxu0 0
      %1101 = vmatpush1.bf16.msra.mxu0 %v965
      %1102 = vmatprep.subr.bf16.mxu0 0
      %1103 = vmatpush1.bf16.msra.mxu0 %v966
      %1104 = vmatprep.subr.bf16.mxu0 0
      %1105 = vmatpush1.bf16.msra.mxu0 %v967
      %1106 = vmatprep.subr.bf16.mxu0 0
      %1107 = vmatpush1.bf16.msra.mxu0 %v968
      %1108 = vmatprep.subr.bf16.mxu0 0
      %1109 = vmatpush1.bf16.msra.mxu0 %v969
      %1110 = vmatprep.subr.bf16.mxu0 0
      %1111 = vmatpush1.bf16.msra.mxu0 %v970
      %1112 = vmatprep.subr.bf16.mxu0 0
      %1113 = vmatpush1.bf16.msra.mxu0 %v971
      %1114 = vmatprep.subr.bf16.mxu0 0
      %1115 = vmatpush1.bf16.msra.mxu0 %v972
      %1116 = vmatprep.subr.bf16.mxu0 0
      %1117 = vmatpush1.bf16.msra.mxu0 %v973
      %1118 = vmatprep.mubr.bf16.mxu0 %v671
      %1119 = vmatmul.mubr.bf16.gmra.mrb[0].mxu0 %v670
      %v1120 = vpop.f32.mrb[0].mxu0
      %v1121 = vadd.f32 0.0, %v1120
      %v1122 = vpop.f32.mrb[0].mxu0
      %v1123 = vpop.f32.mrb[0].mxu0
      %v1124 = vadd.f32 0.0, %v1123
      %v1125 = vpop.f32.mrb[0].mxu0
      %1126 = vmatprep.mubr.bf16.mxu0 %v679
      %1127 = vmatmul.mubr.bf16.gmra.mrb[0].mxu0 %v678
      %v1128 = vpop.f32.mrb[0].mxu0
      %v1129 = vadd.f32 0.0, %v1128
      %v1130 = vpop.f32.mrb[0].mxu0
      %v1131 = vpop.f32.mrb[0].mxu0
      %v1132 = vpop.f32.mrb[0].mxu0
      %1133 = vdwg.mxu0
      %1134 = vmatprep.subr.bf16.mxu0 0
      %1135 = vmatpush1.bf16.msra.mxu0 %v974
      %1136 = vmatprep.subr.bf16.mxu0 0
      %1137 = vmatpush1.bf16.msra.mxu0 %v975
      %1138 = vmatprep.subr.bf16.mxu0 0
      %1139 = vmatpush1.bf16.msra.mxu0 %v976
      %1140 = vmatprep.subr.bf16.mxu0 0
      %1141 = vmatpush1.bf16.msra.mxu0 %v977
      %1142 = vmatprep.subr.bf16.mxu0 0
      %1143 = vmatpush1.bf16.msra.mxu0 %v978
      %1144 = vmatprep.subr.bf16.mxu0 0
      %1145 = vmatpush1.bf16.msra.mxu0 %v979
      %1146 = vmatprep.subr.bf16.mxu0 0
      %1147 = vmatpush1.bf16.msra.mxu0 %v980
      %1148 = vmatprep.subr.bf16.mxu0 0
      %1149 = vmatpush1.bf16.msra.mxu0 %v981
      %1150 = vmatprep.subr.bf16.mxu0 0
      %1151 = vmatpush1.bf16.msra.mxu0 %v982
      %1152 = vmatprep.subr.bf16.mxu0 0
      %1153 = vmatpush1.bf16.msra.mxu0 %v983
      %1154 = vmatprep.subr.bf16.mxu0 0
      %1155 = vmatpush1.bf16.msra.mxu0 %v984
      %1156 = vmatprep.subr.bf16.mxu0 0
      %1157 = vmatpush1.bf16.msra.mxu0 %v985
      %1158 = vmatprep.subr.bf16.mxu0 0
      %1159 = vmatpush1.bf16.msra.mxu0 %v986
      %1160 = vmatprep.subr.bf16.mxu0 0
      %1161 = vmatpush1.bf16.msra.mxu0 %v987
      %1162 = vmatprep.subr.bf16.mxu0 0
      %1163 = vmatpush1.bf16.msra.mxu0 %v988
      %1164 = vmatprep.subr.bf16.mxu0 0
      %1165 = vmatpush1.bf16.msra.mxu0 %v989
      %1166 = vmatprep.mubr.bf16.mxu0 %v673
      %1167 = vmatmul.mubr.bf16.gmra.mrb[0].mxu0 %v672
      %v1168 = vpop.f32.mrb[0].mxu0
      %v1169 = vadd.f32 %v1121, %v1168
      %v1170 = vpop.f32.mrb[0].mxu0
      %v1171 = vpop.f32.mrb[0].mxu0
      %v1172 = vadd.f32 %v1124, %v1171
      %v1173 = vpop.f32.mrb[0].mxu0
      %1174 = vmatprep.mubr.bf16.mxu0 %v681
      %1175 = vmatmul.mubr.bf16.gmra.mrb[0].mxu0 %v680
      %v1176 = vpop.f32.mrb[0].mxu0
      %v1177 = vadd.f32 %v1129, %v1176
      %v1178 = vpop.f32.mrb[0].mxu0
      %v1179 = vpop.f32.mrb[0].mxu0
      %v1180 = vpop.f32.mrb[0].mxu0
      %1181 = vdwg.mxu0
      %1182 = vmatprep.subr.bf16.mxu0 0
      %1183 = vmatpush1.bf16.msra.mxu0 %v990
      %1184 = vmatprep.subr.bf16.mxu0 0
      %1185 = vmatpush1.bf16.msra.mxu0 %v991
      %1186 = vmatprep.subr.bf16.mxu0 0
      %1187 = vmatpush1.bf16.msra.mxu0 %v992
      %1188 = vmatprep.subr.bf16.mxu0 0
      %1189 = vmatpush1.bf16.msra.mxu0 %v993
      %1190 = vmatprep.subr.bf16.mxu0 0
      %1191 = vmatpush1.bf16.msra.mxu0 %v994
      %1192 = vmatprep.subr.bf16.mxu0 0
      %1193 = vmatpush1.bf16.msra.mxu0 %v995
      %1194 = vmatprep.subr.bf16.mxu0 0
      %1195 = vmatpush1.bf16.msra.mxu0 %v996
      %1196 = vmatprep.subr.bf16.mxu0 0
      %1197 = vmatpush1.bf16.msra.mxu0 %v997
      %1198 = vmatprep.subr.bf16.mxu0 0
      %1199 = vmatpush1.bf16.msra.mxu0 %v998
      %1200 = vmatprep.subr.bf16.mxu0 0
      %1201 = vmatpush1.bf16.msra.mxu0 %v999
      %1202 = vmatprep.subr.bf16.mxu0 0
      %1203 = vmatpush1.bf16.msra.mxu0 %v1000
      %1204 = vmatprep.subr.bf16.mxu0 0
      %1205 = vmatpush1.bf16.msra.mxu0 %v1001
      %1206 = vmatprep.subr.bf16.mxu0 0
      %1207 = vmatpush1.bf16.msra.mxu0 %v1002
      %1208 = vmatprep.subr.bf16.mxu0 0
      %1209 = vmatpush1.bf16.msra.mxu0 %v1003
      %1210 = vmatprep.subr.bf16.mxu0 0
      %1211 = vmatpush1.bf16.msra.mxu0 %v1004
      %1212 = vmatprep.subr.bf16.mxu0 0
      %1213 = vmatpush1.bf16.msra.mxu0 %v1005
      %1214 = vmatprep.mubr.bf16.mxu0 %v675
      %1215 = vmatmul.mubr.bf16.gmra.mrb[0].mxu0 %v674
      %v1216 = vpop.f32.mrb[0].mxu0
      %v1217 = vadd.f32 %v1169, %v1216
      %v1218 = vpop.f32.mrb[0].mxu0
      %v1219 = vpop.f32.mrb[0].mxu0
      %v1220 = vadd.f32 %v1172, %v1219
      %v1221 = vpop.f32.mrb[0].mxu0
      %1222 = vmatprep.mubr.bf16.mxu0 %v683
      %1223 = vmatmul.mubr.bf16.gmra.mrb[0].mxu0 %v682
      %v1224 = vpop.f32.mrb[0].mxu0
      %v1225 = vadd.f32 %v1177, %v1224
      %v1226 = vpop.f32.mrb[0].mxu0
      %v1227 = vpop.f32.mrb[0].mxu0
      %v1228 = vpop.f32.mrb[0].mxu0
      %1229 = vdwg.mxu0
      %1230 = vmatprep.subr.bf16.mxu0 0
      %1231 = vmatpush1.bf16.msra.mxu0 %v1006
      %1232 = vmatprep.subr.bf16.mxu0 0
      %1233 = vmatpush1.bf16.msra.mxu0 %v1007
      %1234 = vmatprep.subr.bf16.mxu0 0
      %1235 = vmatpush1.bf16.msra.mxu0 %v1008
      %1236 = vmatprep.subr.bf16.mxu0 0
      %1237 = vmatpush1.bf16.msra.mxu0 %v1009
      %1238 = vmatprep.subr.bf16.mxu0 0
      %1239 = vmatpush1.bf16.msra.mxu0 %v1010
      %1240 = vmatprep.subr.bf16.mxu0 0
      %1241 = vmatpush1.bf16.msra.mxu0 %v1011
      %1242 = vmatprep.subr.bf16.mxu0 0
      %1243 = vmatpush1.bf16.msra.mxu0 %v1012
      %1244 = vmatprep.subr.bf16.mxu0 0
      %1245 = vmatpush1.bf16.msra.mxu0 %v1013
      %1246 = vmatprep.subr.bf16.mxu0 0
      %1247 = vmatpush1.bf16.msra.mxu0 %v1014
      %1248 = vmatprep.subr.bf16.mxu0 0
      %1249 = vmatpush1.bf16.msra.mxu0 %v1015
      %1250 = vmatprep.subr.bf16.mxu0 0
      %1251 = vmatpush1.bf16.msra.mxu0 %v1016
      %1252 = vmatprep.subr.bf16.mxu0 0
      %1253 = vmatpush1.bf16.msra.mxu0 %v1017
      %1254 = vmatprep.subr.bf16.mxu0 0
      %1255 = vmatpush1.bf16.msra.mxu0 %v1018
      %1256 = vmatprep.subr.bf16.mxu0 0
      %1257 = vmatpush1.bf16.msra.mxu0 %v1019
      %1258 = vmatprep.subr.bf16.mxu0 0
      %1259 = vmatpush1.bf16.msra.mxu0 %v1020
      %1260 = vmatprep.subr.bf16.mxu0 0
      %1261 = vmatpush1.bf16.msra.mxu0 %v1021
      %1262 = vmatprep.mubr.bf16.mxu0 %v677
      %1263 = vmatmul.mubr.bf16.gmra.mrb[0].mxu0 %v676
      %v1264 = vpop.f32.mrb[0].mxu0
      %v1265 = vadd.f32 %v1217, %v1264
      %v1266 = vpop.f32.mrb[0].mxu0
      %v1267 = vpop.f32.mrb[0].mxu0
      %v1268 = vadd.f32 %v1220, %v1267
      %v1269 = vpop.f32.mrb[0].mxu0
      %1270 = vmatprep.mubr.bf16.mxu0 %v685
      %1271 = vmatmul.mubr.bf16.gmra.mrb[0].mxu0 %v684
      %v1272 = vpop.f32.mrb[0].mxu0
      %v1273 = vadd.f32 %v1225, %v1272
      %v1274 = vpop.f32.mrb[0].mxu0
      %v1275 = vpop.f32.mrb[0].mxu0
      %v1276 = vpop.f32.mrb[0].mxu0
      %1277 = vdwg.mxu0
      %v1290 = vunpack.c.l.b16 %v354
      %v1291 = vunpack.c.h.b16 %v354
      %v1292 = vunpack.c.l.b16 %v355
      %v1293 = vunpack.c.h.b16 %v355
      %v1294 = vunpack.c.l.b16 %v356
      %v1295 = vunpack.c.h.b16 %v356
      %v1296 = vunpack.c.l.b16 %v357
      %v1297 = vunpack.c.h.b16 %v357
      %v1298 = vunpack.c.l.b16 %v358
      %v1299 = vunpack.c.h.b16 %v358
      %v1300 = vunpack.c.l.b16 %v359
      %v1301 = vunpack.c.h.b16 %v359
      %v1302 = vunpack.c.l.b16 %v360
      %v1303 = vunpack.c.h.b16 %v360
      %v1304 = vunpack.c.l.b16 %v361
      %v1305 = vunpack.c.h.b16 %v361
      %v1306 = vunpack.c.l.b16 %v362
      %v1307 = vunpack.c.h.b16 %v362
      %v1308 = vunpack.c.l.b16 %v363
      %v1309 = vunpack.c.h.b16 %v363
      %v1310 = vunpack.c.l.b16 %v364
      %v1311 = vunpack.c.h.b16 %v364
      %v1312 = vunpack.c.l.b16 %v365
      %v1313 = vunpack.c.h.b16 %v365
      %v1314 = vpack.c.b16 %v1298, %v1290
      %v1315 = vpack.c.b16 %v1299, %v1291
      %v1316 = vpack.c.b16 %v1300, %v1292
      %v1317 = vpack.c.b16 %v1301, %v1293
      %v1318 = vpack.c.b16 %v1302, %v1294
      %v1319 = vpack.c.b16 %v1303, %v1295
      %v1320 = vpack.c.b16 %v1304, %v1296
      %v1321 = vpack.c.b16 %v1305, %v1297
      %v1322 = vpack.c.b16 %v1306, %v1306
      %v1323 = vpack.c.b16 %v1307, %v1307
      %v1324 = vpack.c.b16 %v1308, %v1308
      %v1325 = vpack.c.b16 %v1309, %v1309
      %v1326 = vpack.c.b16 %v1310, %v1310
      %v1327 = vpack.c.b16 %v1311, %v1311
      %v1328 = vpack.c.b16 %v1312, %v1312
      %v1329 = vpack.c.b16 %v1313, %v1313
      %v1474 = vunpack.c.l.b16 %v366
      %v1475 = vunpack.c.l.b16 %v367
      %v1476 = vunpack.c.l.b16 %v368
      %v1477 = vunpack.c.l.b16 %v369
      %v1478 = vunpack.c.l.b16 %v370
      %v1479 = vunpack.c.l.b16 %v371
      %v1480 = vunpack.c.l.b16 %v372
      %v1481 = vunpack.c.l.b16 %v373
      %v1482 = vunpack.c.l.b16 %v374
      %v1483 = vunpack.c.l.b16 %v375
      %v1484 = vunpack.c.l.b16 %v376
      %v1485 = vunpack.c.l.b16 %v377
      %v1486 = vunpack.c.l.b16 %v378
      %v1487 = vunpack.c.l.b16 %v379
      %v1488 = vunpack.c.l.b16 %v380
      %v1489 = vunpack.c.l.b16 %v381
      %v1490 = vunpack.c.l.b16 %v382
      %v1491 = vunpack.c.l.b16 %v383
      %v1492 = vunpack.c.l.b16 %v384
      %v1493 = vunpack.c.l.b16 %v385
      %v1494 = vunpack.c.l.b16 %v386
      %v1495 = vunpack.c.l.b16 %v387
      %v1496 = vunpack.c.l.b16 %v388
      %v1497 = vunpack.c.l.b16 %v389
      %v1498 = vunpack.c.l.b16 %v390
      %v1499 = vunpack.c.l.b16 %v391
      %v1500 = vunpack.c.l.b16 %v392
      %v1501 = vunpack.c.l.b16 %v393
      %v1502 = vunpack.c.l.b16 %v394
      %v1503 = vunpack.c.l.b16 %v395
      %v1504 = vunpack.c.l.b16 %v396
      %v1505 = vunpack.c.l.b16 %v397
      %v1506 = vunpack.c.l.b16 %v398
      %v1507 = vunpack.c.l.b16 %v399
      %v1508 = vunpack.c.l.b16 %v400
      %v1509 = vunpack.c.l.b16 %v401
      %v1510 = vunpack.c.l.b16 %v402
      %v1511 = vunpack.c.l.b16 %v403
      %v1512 = vunpack.c.l.b16 %v404
      %v1513 = vunpack.c.l.b16 %v405
      %v1514 = vunpack.c.l.b16 %v406
      %v1515 = vunpack.c.l.b16 %v407
      %v1516 = vunpack.c.l.b16 %v408
      %v1517 = vunpack.c.l.b16 %v409
      %v1518 = vunpack.c.l.b16 %v410
      %v1519 = vunpack.c.l.b16 %v411
      %v1520 = vunpack.c.l.b16 %v412
      %v1521 = vunpack.c.l.b16 %v413
      %v1522 = vunpack.c.l.b16 %v414
      %v1523 = vunpack.c.l.b16 %v415
      %v1524 = vunpack.c.l.b16 %v416
      %v1525 = vunpack.c.l.b16 %v417
      %v1526 = vunpack.c.l.b16 %v418
      %v1527 = vunpack.c.l.b16 %v419
      %v1528 = vunpack.c.l.b16 %v420
      %v1529 = vunpack.c.l.b16 %v421
      %v1530 = vunpack.c.l.b16 %v422
      %v1531 = vunpack.c.l.b16 %v423
      %v1532 = vunpack.c.l.b16 %v424
      %v1533 = vunpack.c.l.b16 %v425
      %v1534 = vunpack.c.l.b16 %v426
      %v1535 = vunpack.c.l.b16 %v427
      %v1536 = vunpack.c.l.b16 %v428
      %v1537 = vunpack.c.l.b16 %v429
      %v1538 = vunpack.c.l.b16 %v430
      %v1539 = vunpack.c.l.b16 %v431
      %v1540 = vunpack.c.l.b16 %v432
      %v1541 = vunpack.c.l.b16 %v433
      %v1542 = vunpack.c.l.b16 %v434
      %v1543 = vunpack.c.l.b16 %v435
      %v1544 = vunpack.c.l.b16 %v436
      %v1545 = vunpack.c.l.b16 %v437
      %v1546 = vunpack.c.l.b16 %v438
      %v1547 = vunpack.c.l.b16 %v439
      %v1548 = vunpack.c.l.b16 %v440
      %v1549 = vunpack.c.l.b16 %v441
      %v1550 = vunpack.c.l.b16 %v442
      %v1551 = vunpack.c.l.b16 %v443
      %v1552 = vunpack.c.l.b16 %v444
      %v1553 = vunpack.c.l.b16 %v445
      %v1554 = vunpack.c.l.b16 %v446
      %v1555 = vunpack.c.l.b16 %v447
      %v1556 = vunpack.c.l.b16 %v448
      %v1557 = vunpack.c.l.b16 %v449
      %v1558 = vunpack.c.l.b16 %v450
      %v1559 = vunpack.c.l.b16 %v451
      %v1560 = vunpack.c.l.b16 %v452
      %v1561 = vunpack.c.l.b16 %v453
      %v1562 = vunpack.c.l.b16 %v454
      %v1563 = vunpack.c.l.b16 %v455
      %v1564 = vunpack.c.l.b16 %v456
      %v1565 = vunpack.c.l.b16 %v457
      %v1566 = vunpack.c.l.b16 %v458
      %v1567 = vunpack.c.l.b16 %v459
      %v1568 = vunpack.c.l.b16 %v460
      %v1569 = vunpack.c.l.b16 %v461
      %v1570 = vunpack.c.l.b16 %v462
      %v1571 = vunpack.c.l.b16 %v463
      %v1572 = vunpack.c.l.b16 %v464
      %v1573 = vunpack.c.l.b16 %v465
      %v1574 = vunpack.c.l.b16 %v466
      %v1575 = vunpack.c.l.b16 %v467
      %v1576 = vunpack.c.l.b16 %v468
      %v1577 = vunpack.c.l.b16 %v469
      %v1578 = vunpack.c.l.b16 %v470
      %v1579 = vunpack.c.l.b16 %v471
      %v1580 = vunpack.c.l.b16 %v472
      %v1581 = vunpack.c.l.b16 %v473
      %v1582 = vunpack.c.l.b16 %v474
      %v1583 = vunpack.c.l.b16 %v475
      %v1584 = vunpack.c.l.b16 %v476
      %v1585 = vunpack.c.l.b16 %v477
      %v1586 = vunpack.c.l.b16 %v478
      %v1587 = vunpack.c.l.b16 %v479
      %v1588 = vunpack.c.l.b16 %v480
      %v1589 = vunpack.c.l.b16 %v481
      %v1590 = vunpack.c.l.b16 %v482
      %v1591 = vunpack.c.l.b16 %v483
      %v1592 = vunpack.c.l.b16 %v484
      %v1593 = vunpack.c.l.b16 %v485
      %v1594 = vunpack.c.l.b16 %v486
      %v1595 = vunpack.c.l.b16 %v487
      %v1596 = vunpack.c.l.b16 %v488
      %v1597 = vunpack.c.l.b16 %v489
      %v1598 = vunpack.c.l.b16 %v490
      %v1599 = vunpack.c.l.b16 %v491
      %v1600 = vunpack.c.l.b16 %v492
      %v1601 = vunpack.c.l.b16 %v493
      %v1602 = vpack.c.b16 %v1475, %v1474
      %v1603 = vpack.c.b16 %v1477, %v1476
      %v1604 = vpack.c.b16 %v1479, %v1478
      %v1605 = vpack.c.b16 %v1481, %v1480
      %v1606 = vpack.c.b16 %v1483, %v1482
      %v1607 = vpack.c.b16 %v1485, %v1484
      %v1608 = vpack.c.b16 %v1487, %v1486
      %v1609 = vpack.c.b16 %v1489, %v1488
      %v1610 = vpack.c.b16 %v1491, %v1490
      %v1611 = vpack.c.b16 %v1493, %v1492
      %v1612 = vpack.c.b16 %v1495, %v1494
      %v1613 = vpack.c.b16 %v1497, %v1496
      %v1614 = vpack.c.b16 %v1499, %v1498
      %v1615 = vpack.c.b16 %v1501, %v1500
      %v1616 = vpack.c.b16 %v1503, %v1502
      %v1617 = vpack.c.b16 %v1505, %v1504
      %v1618 = vpack.c.b16 %v1507, %v1506
      %v1619 = vpack.c.b16 %v1509, %v1508
      %v1620 = vpack.c.b16 %v1511, %v1510
      %v1621 = vpack.c.b16 %v1513, %v1512
      %v1622 = vpack.c.b16 %v1515, %v1514
      %v1623 = vpack.c.b16 %v1517, %v1516
      %v1624 = vpack.c.b16 %v1519, %v1518
      %v1625 = vpack.c.b16 %v1521, %v1520
      %v1626 = vpack.c.b16 %v1523, %v1522
      %v1627 = vpack.c.b16 %v1525, %v1524
      %v1628 = vpack.c.b16 %v1527, %v1526
      %v1629 = vpack.c.b16 %v1529, %v1528
      %v1630 = vpack.c.b16 %v1531, %v1530
      %v1631 = vpack.c.b16 %v1533, %v1532
      %v1632 = vpack.c.b16 %v1535, %v1534
      %v1633 = vpack.c.b16 %v1537, %v1536
      %v1634 = vpack.c.b16 %v1539, %v1538
      %v1635 = vpack.c.b16 %v1541, %v1540
      %v1636 = vpack.c.b16 %v1543, %v1542
      %v1637 = vpack.c.b16 %v1545, %v1544
      %v1638 = vpack.c.b16 %v1547, %v1546
      %v1639 = vpack.c.b16 %v1549, %v1548
      %v1640 = vpack.c.b16 %v1551, %v1550
      %v1641 = vpack.c.b16 %v1553, %v1552
      %v1642 = vpack.c.b16 %v1555, %v1554
      %v1643 = vpack.c.b16 %v1557, %v1556
      %v1644 = vpack.c.b16 %v1559, %v1558
      %v1645 = vpack.c.b16 %v1561, %v1560
      %v1646 = vpack.c.b16 %v1563, %v1562
      %v1647 = vpack.c.b16 %v1565, %v1564
      %v1648 = vpack.c.b16 %v1567, %v1566
      %v1649 = vpack.c.b16 %v1569, %v1568
      %v1650 = vpack.c.b16 %v1571, %v1570
      %v1651 = vpack.c.b16 %v1573, %v1572
      %v1652 = vpack.c.b16 %v1575, %v1574
      %v1653 = vpack.c.b16 %v1577, %v1576
      %v1654 = vpack.c.b16 %v1579, %v1578
      %v1655 = vpack.c.b16 %v1581, %v1580
      %v1656 = vpack.c.b16 %v1583, %v1582
      %v1657 = vpack.c.b16 %v1585, %v1584
      %v1658 = vpack.c.b16 %v1587, %v1586
      %v1659 = vpack.c.b16 %v1589, %v1588
      %v1660 = vpack.c.b16 %v1591, %v1590
      %v1661 = vpack.c.b16 %v1593, %v1592
      %v1662 = vpack.c.b16 %v1595, %v1594
      %v1663 = vpack.c.b16 %v1597, %v1596
      %v1664 = vpack.c.b16 %v1599, %v1598
      %v1665 = vpack.c.b16 %v1601, %v1600
      %1730 = vmatprep.subr.bf16.mxu0 0
      %1731 = vmatpush1.bf16.msra.mxu0 %v1602
      %1732 = vmatprep.subr.bf16.mxu0 0
      %1733 = vmatpush1.bf16.msra.mxu0 %v1603
      %1734 = vmatprep.subr.bf16.mxu0 0
      %1735 = vmatpush1.bf16.msra.mxu0 %v1604
      %1736 = vmatprep.subr.bf16.mxu0 0
      %1737 = vmatpush1.bf16.msra.mxu0 %v1605
      %1738 = vmatprep.subr.bf16.mxu0 0
      %1739 = vmatpush1.bf16.msra.mxu0 %v1606
      %1740 = vmatprep.subr.bf16.mxu0 0
      %1741 = vmatpush1.bf16.msra.mxu0 %v1607
      %1742 = vmatprep.subr.bf16.mxu0 0
      %1743 = vmatpush1.bf16.msra.mxu0 %v1608
      %1744 = vmatprep.subr.bf16.mxu0 0
      %1745 = vmatpush1.bf16.msra.mxu0 %v1609
      %1746 = vmatprep.subr.bf16.mxu0 0
      %1747 = vmatpush1.bf16.msra.mxu0 %v1610
      %1748 = vmatprep.subr.bf16.mxu0 0
      %1749 = vmatpush1.bf16.msra.mxu0 %v1611
      %1750 = vmatprep.subr.bf16.mxu0 0
      %1751 = vmatpush1.bf16.msra.mxu0 %v1612
      %1752 = vmatprep.subr.bf16.mxu0 0
      %1753 = vmatpush1.bf16.msra.mxu0 %v1613
      %1754 = vmatprep.subr.bf16.mxu0 0
      %1755 = vmatpush1.bf16.msra.mxu0 %v1614
      %1756 = vmatprep.subr.bf16.mxu0 0
      %1757 = vmatpush1.bf16.msra.mxu0 %v1615
      %1758 = vmatprep.subr.bf16.mxu0 0
      %1759 = vmatpush1.bf16.msra.mxu0 %v1616
      %1760 = vmatprep.subr.bf16.mxu0 0
      %1761 = vmatpush1.bf16.msra.mxu0 %v1617
      %1762 = vmatprep.mubr.bf16.mxu0 %v1315
      %1763 = vmatmul.mubr.bf16.gmra.mrb[0].mxu0 %v1314
      %v1764 = vpop.f32.mrb[0].mxu0
      %v1765 = vadd.f32 %v1265, %v1764
      %v1766 = vpop.f32.mrb[0].mxu0
      %v1767 = vpop.f32.mrb[0].mxu0
      %v1768 = vadd.f32 %v1268, %v1767
      %v1769 = vpop.f32.mrb[0].mxu0
      %1770 = vmatprep.mubr.bf16.mxu0 %v1323
      %1771 = vmatmul.mubr.bf16.gmra.mrb[0].mxu0 %v1322
      %v1772 = vpop.f32.mrb[0].mxu0
      %v1773 = vadd.f32 %v1273, %v1772
      %v1774 = vpop.f32.mrb[0].mxu0
      %v1775 = vpop.f32.mrb[0].mxu0
      %v1776 = vpop.f32.mrb[0].mxu0
      %1777 = vdwg.mxu0
      %1778 = vmatprep.subr.bf16.mxu0 0
      %1779 = vmatpush1.bf16.msra.mxu0 %v1618
      %1780 = vmatprep.subr.bf16.mxu0 0
      %1781 = vmatpush1.bf16.msra.mxu0 %v1619
      %1782 = vmatprep.subr.bf16.mxu0 0
      %1783 = vmatpush1.bf16.msra.mxu0 %v1620
      %1784 = vmatprep.subr.bf16.mxu0 0
      %1785 = vmatpush1.bf16.msra.mxu0 %v1621
      %1786 = vmatprep.subr.bf16.mxu0 0
      %1787 = vmatpush1.bf16.msra.mxu0 %v1622
      %1788 = vmatprep.subr.bf16.mxu0 0
      %1789 = vmatpush1.bf16.msra.mxu0 %v1623
      %1790 = vmatprep.subr.bf16.mxu0 0
      %1791 = vmatpush1.bf16.msra.mxu0 %v1624
      %1792 = vmatprep.subr.bf16.mxu0 0
      %1793 = vmatpush1.bf16.msra.mxu0 %v1625
      %1794 = vmatprep.subr.bf16.mxu0 0
      %1795 = vmatpush1.bf16.msra.mxu0 %v1626
      %1796 = vmatprep.subr.bf16.mxu0 0
      %1797 = vmatpush1.bf16.msra.mxu0 %v1627
      %1798 = vmatprep.subr.bf16.mxu0 0
      %1799 = vmatpush1.bf16.msra.mxu0 %v1628
      %1800 = vmatprep.subr.bf16.mxu0 0
      %1801 = vmatpush1.bf16.msra.mxu0 %v1629
      %1802 = vmatprep.subr.bf16.mxu0 0
      %1803 = vmatpush1.bf16.msra.mxu0 %v1630
      %1804 = vmatprep.subr.bf16.mxu0 0
      %1805 = vmatpush1.bf16.msra.mxu0 %v1631
      %1806 = vmatprep.subr.bf16.mxu0 0
      %1807 = vmatpush1.bf16.msra.mxu0 %v1632
      %1808 = vmatprep.subr.bf16.mxu0 0
      %1809 = vmatpush1.bf16.msra.mxu0 %v1633
      %1810 = vmatprep.mubr.bf16.mxu0 %v1317
      %1811 = vmatmul.mubr.bf16.gmra.mrb[0].mxu0 %v1316
      %v1812 = vpop.f32.mrb[0].mxu0
      %v1813 = vadd.f32 %v1765, %v1812
      %v1814 = vpop.f32.mrb[0].mxu0
      %v1815 = vpop.f32.mrb[0].mxu0
      %v1816 = vadd.f32 %v1768, %v1815
      %v1817 = vpop.f32.mrb[0].mxu0
      %1818 = vmatprep.mubr.bf16.mxu0 %v1325
      %1819 = vmatmul.mubr.bf16.gmra.mrb[0].mxu0 %v1324
      %v1820 = vpop.f32.mrb[0].mxu0
      %v1821 = vadd.f32 %v1773, %v1820
      %v1822 = vpop.f32.mrb[0].mxu0
      %v1823 = vpop.f32.mrb[0].mxu0
      %v1824 = vpop.f32.mrb[0].mxu0
      %1825 = vdwg.mxu0
      %1826 = vmatprep.subr.bf16.mxu0 0
      %1827 = vmatpush1.bf16.msra.mxu0 %v1634
      %1828 = vmatprep.subr.bf16.mxu0 0
      %1829 = vmatpush1.bf16.msra.mxu0 %v1635
      %1830 = vmatprep.subr.bf16.mxu0 0
      %1831 = vmatpush1.bf16.msra.mxu0 %v1636
      %1832 = vmatprep.subr.bf16.mxu0 0
      %1833 = vmatpush1.bf16.msra.mxu0 %v1637
      %1834 = vmatprep.subr.bf16.mxu0 0
      %1835 = vmatpush1.bf16.msra.mxu0 %v1638
      %1836 = vmatprep.subr.bf16.mxu0 0
      %1837 = vmatpush1.bf16.msra.mxu0 %v1639
      %1838 = vmatprep.subr.bf16.mxu0 0
      %1839 = vmatpush1.bf16.msra.mxu0 %v1640
      %1840 = vmatprep.subr.bf16.mxu0 0
      %1841 = vmatpush1.bf16.msra.mxu0 %v1641
      %1842 = vmatprep.subr.bf16.mxu0 0
      %1843 = vmatpush1.bf16.msra.mxu0 %v1642
      %1844 = vmatprep.subr.bf16.mxu0 0
      %1845 = vmatpush1.bf16.msra.mxu0 %v1643
      %1846 = vmatprep.subr.bf16.mxu0 0
      %1847 = vmatpush1.bf16.msra.mxu0 %v1644
      %1848 = vmatprep.subr.bf16.mxu0 0
      %1849 = vmatpush1.bf16.msra.mxu0 %v1645
      %1850 = vmatprep.subr.bf16.mxu0 0
      %1851 = vmatpush1.bf16.msra.mxu0 %v1646
      %1852 = vmatprep.subr.bf16.mxu0 0
      %1853 = vmatpush1.bf16.msra.mxu0 %v1647
      %1854 = vmatprep.subr.bf16.mxu0 0
      %1855 = vmatpush1.bf16.msra.mxu0 %v1648
      %1856 = vmatprep.subr.bf16.mxu0 0
      %1857 = vmatpush1.bf16.msra.mxu0 %v1649
      %1858 = vmatprep.mubr.bf16.mxu0 %v1319
      %1859 = vmatmul.mubr.bf16.gmra.mrb[0].mxu0 %v1318
      %v1860 = vpop.f32.mrb[0].mxu0
      %v1861 = vadd.f32 %v1813, %v1860
      %v1862 = vpop.f32.mrb[0].mxu0
      %v1863 = vpop.f32.mrb[0].mxu0
      %v1864 = vadd.f32 %v1816, %v1863
      %v1865 = vpop.f32.mrb[0].mxu0
      %1866 = vmatprep.mubr.bf16.mxu0 %v1327
      %1867 = vmatmul.mubr.bf16.gmra.mrb[0].mxu0 %v1326
      %v1868 = vpop.f32.mrb[0].mxu0
      %v1869 = vadd.f32 %v1821, %v1868
      %v1870 = vpop.f32.mrb[0].mxu0
      %v1871 = vpop.f32.mrb[0].mxu0
      %v1872 = vpop.f32.mrb[0].mxu0
      %1873 = vdwg.mxu0
      %1874 = vmatprep.subr.bf16.mxu0 0
      %1875 = vmatpush1.bf16.msra.mxu0 %v1650
      %1876 = vmatprep.subr.bf16.mxu0 0
      %1877 = vmatpush1.bf16.msra.mxu0 %v1651
      %1878 = vmatprep.subr.bf16.mxu0 0
      %1879 = vmatpush1.bf16.msra.mxu0 %v1652
      %1880 = vmatprep.subr.bf16.mxu0 0
      %1881 = vmatpush1.bf16.msra.mxu0 %v1653
      %1882 = vmatprep.subr.bf16.mxu0 0
      %1883 = vmatpush1.bf16.msra.mxu0 %v1654
      %1884 = vmatprep.subr.bf16.mxu0 0
      %1885 = vmatpush1.bf16.msra.mxu0 %v1655
      %1886 = vmatprep.subr.bf16.mxu0 0
      %1887 = vmatpush1.bf16.msra.mxu0 %v1656
      %1888 = vmatprep.subr.bf16.mxu0 0
      %1889 = vmatpush1.bf16.msra.mxu0 %v1657
      %1890 = vmatprep.subr.bf16.mxu0 0
      %1891 = vmatpush1.bf16.msra.mxu0 %v1658
      %1892 = vmatprep.subr.bf16.mxu0 0
      %1893 = vmatpush1.bf16.msra.mxu0 %v1659
      %1894 = vmatprep.subr.bf16.mxu0 0
      %1895 = vmatpush1.bf16.msra.mxu0 %v1660
      %1896 = vmatprep.subr.bf16.mxu0 0
      %1897 = vmatpush1.bf16.msra.mxu0 %v1661
      %1898 = vmatprep.subr.bf16.mxu0 0
      %1899 = vmatpush1.bf16.msra.mxu0 %v1662
      %1900 = vmatprep.subr.bf16.mxu0 0
      %1901 = vmatpush1.bf16.msra.mxu0 %v1663
      %1902 = vmatprep.subr.bf16.mxu0 0
      %1903 = vmatpush1.bf16.msra.mxu0 %v1664
      %1904 = vmatprep.subr.bf16.mxu0 0
      %1905 = vmatpush1.bf16.msra.mxu0 %v1665
      %1906 = vmatprep.mubr.bf16.mxu0 %v1321
      %1907 = vmatmul.mubr.bf16.gmra.mrb[0].mxu0 %v1320
      %v1908 = vpop.f32.mrb[0].mxu0
      %v1909 = vadd.f32 %v1861, %v1908
      %v1910 = vpop.f32.mrb[0].mxu0
      %v1911 = vpop.f32.mrb[0].mxu0
      %v1912 = vadd.f32 %v1864, %v1911
      %v1913 = vpop.f32.mrb[0].mxu0
      %1914 = vmatprep.mubr.bf16.mxu0 %v1329
      %1915 = vmatmul.mubr.bf16.gmra.mrb[0].mxu0 %v1328
      %v1916 = vpop.f32.mrb[0].mxu0
      %v1917 = vadd.f32 %v1869, %v1916
      %v1918 = vpop.f32.mrb[0].mxu0
      %v1919 = vpop.f32.mrb[0].mxu0
      %v1920 = vpop.f32.mrb[0].mxu0
      %1921 = vdwg.mxu0
      %v1922 = vld [vmem:[%s4] sm:$0x1]
      %v1924 = vlaneseq
      %v1925 = vshrl.u32 %v1924, 7
      %v1926 = vsub.s32 0, %v1925
      %v1927 = vrot.slane %v1922, %v1926
      %v1929 = vadd.f32 %v1909, %v1927
      %v1930 = vadd.f32 %v1912, %v1927
      %v1931 = vadd.f32 %v1917, %v1927
      %v1932 = vmax.f32 %v1929, 0.0
      %v1933 = vmax.f32 %v1930, 0.0
      %v1934 = vmax.f32 %v1931, 0.0
      %v1935 = vld [vmem:[%s5] sm:$0xff]
      %v1936 = vld [vmem:[%s5 + $0x8] sm:$0xff]
      %v1937 = vld [vmem:[%s5 + $0x10] sm:$0xff]
      %v1938 = vld [vmem:[%s5 + $0x18] sm:$0xff]
      %v1939 = vld [vmem:[%s5 + $0x20] sm:$0xff]
      %v1940 = vld [vmem:[%s5 + $0x28] sm:$0xff]
      %v1941 = vld [vmem:[%s5 + $0x30] sm:$0xff]
      %v1942 = vld [vmem:[%s5 + $0x38] sm:$0xff]
      %v1943 = vld [vmem:[%s6] sm:$0x1]
      %v1945 = vlaneseq
      %v1946 = vshrl.u32 %v1945, 7
      %v1947 = vsub.s32 0, %v1946
      %v1948 = vrot.slane %v1943, %v1947
      %vm1950 = vcmask 523264
      %v1952 = vsel %vm1950, %v1932, 0
      %v1955 = vsel %vm1950, %v1933, 0
      %v1958 = vsel %vm1950, %v1934, 0
      %1960 = vmatprep.subr.mxu0 0.0
      %1961 = vmatpush1.msra.mxu0 %v1935
      %1962 = vmatprep.subr.mxu0 0.0
      %1963 = vmatpush1.msra.mxu0 %v1936
      %1964 = vmatprep.subr.mxu0 0.0
      %1965 = vmatpush1.msra.mxu0 %v1937
      %1966 = vmatprep.subr.mxu0 0.0
      %1967 = vmatpush1.msra.mxu0 %v1938
      %1968 = vmatprep.subr.mxu0 0.0
      %1969 = vmatpush1.msra.mxu0 %v1939
      %1970 = vmatprep.subr.mxu0 0.0
      %1971 = vmatpush1.msra.mxu0 %v1940
      %1972 = vmatprep.subr.mxu0 0.0
      %1973 = vmatpush1.msra.mxu0 %v1941
      %1974 = vmatprep.subr.mxu0 0.0
      %1975 = vmatpush1.msra.mxu0 %v1942
      %1976 = vmatprep.subr.mxu0 0.0
      %1977 = vmatpush1.msra.mxu0 0.0
      %1978 = vmatprep.subr.mxu0 0.0
      %1979 = vmatpush1.msra.mxu0 0.0
      %1980 = vmatprep.subr.mxu0 0.0
      %1981 = vmatpush1.msra.mxu0 0.0
      %1982 = vmatprep.subr.mxu0 0.0
      %1983 = vmatpush1.msra.mxu0 0.0
      %1984 = vmatprep.subr.mxu0 0.0
      %1985 = vmatpush1.msra.mxu0 0.0
      %1986 = vmatprep.subr.mxu0 0.0
      %1987 = vmatpush1.msra.mxu0 0.0
      %1988 = vmatprep.subr.mxu0 0.0
      %1989 = vmatpush1.msra.mxu0 0.0
      %1990 = vmatprep.subr.mxu0 0.0
      %1991 = vmatpush1.msra.mxu0 0.0
      %1992 = vmatprep.subr.mxu0 0.0
      %1993 = vmatpush1.msra.mxu0 0.0
      %1994 = vmatprep.subr.mxu0 0.0
      %1995 = vmatpush1.msra.mxu0 0.0
      %1996 = vmatprep.subr.mxu0 0.0
      %1997 = vmatpush1.msra.mxu0 0.0
      %1998 = vmatprep.subr.mxu0 0.0
      %1999 = vmatpush1.msra.mxu0 0.0
      %2000 = vmatprep.subr.mxu0 0.0
      %2001 = vmatpush1.msra.mxu0 0.0
      %2002 = vmatprep.subr.mxu0 0.0
      %2003 = vmatpush1.msra.mxu0 0.0
      %2004 = vmatprep.subr.mxu0 0.0
      %2005 = vmatpush1.msra.mxu0 0.0
      %2006 = vmatprep.subr.mxu0 0.0
      %2007 = vmatpush1.msra.mxu0 0.0
      %2008 = vmatprep.subr.mxu0 0.0
      %2009 = vmatpush1.msra.mxu0 0.0
      %2010 = vmatprep.subr.mxu0 0.0
      %2011 = vmatpush1.msra.mxu0 0.0
      %2012 = vmatprep.subr.mxu0 0.0
      %2013 = vmatpush1.msra.mxu0 0.0
      %2014 = vmatprep.subr.mxu0 0.0
      %2015 = vmatpush1.msra.mxu0 0.0
      %2016 = vmatprep.subr.mxu0 0.0
      %2017 = vmatpush1.msra.mxu0 0.0
      %2018 = vmatprep.subr.mxu0 0.0
      %2019 = vmatpush1.msra.mxu0 0.0
      %2020 = vmatprep.subr.mxu0 0.0
      %2021 = vmatpush1.msra.mxu0 0.0
      %2022 = vmatprep.subr.mxu0 0.0
      %2023 = vmatpush1.msra.mxu0 0.0
      %2024 = vmatprep.mubr.f32.mxu0 0.0
      %2025 = vmatmul.mubr.f32.gmra.mrb[0].mxu0 %v1952
      %v2026 = vpop.f32.mrb[0].mxu0
      %v2027 = vadd.f32 %v1948, %v2026
      %v2028 = vpop.f32.mrb[0].mxu0
      %2029 = vmatprep.mubr.f32.mxu0 0.0
      %2030 = vmatmul.mubr.f32.gmra.mrb[0].mxu0 %v1955
      %v2031 = vpop.f32.mrb[0].mxu0
      %v2032 = vadd.f32 %v1948, %v2031
      %v2033 = vpop.f32.mrb[0].mxu0
      %2034 = vmatprep.mubr.f32.mxu0 0.0
      %2035 = vmatmul.mubr.f32.gmra.mrb[0].mxu0 %v1958
      %v2036 = vpop.f32.mrb[0].mxu0
      %v2037 = vadd.f32 %v1948, %v2036
      %v2038 = vpop.f32.mrb[0].mxu0
      %2039 = vdwg.mxu0
      %v2040 = vmax.f32 %v2027, 0.0
      %v2041 = vmax.f32 %v2032, 0.0
      %v2042 = vmax.f32 %v2037, 0.0
      %v2043 = vld [vmem:[%s7] sm:$0xff]
      %v2044 = vld [vmem:[%s7 + $0x8] sm:$0xff]
      %v2045 = vld [vmem:[%s7 + $0x10] sm:$0xff]
      %v2046 = vld [vmem:[%s7 + $0x18] sm:$0xff]
      %v2047 = vld [vmem:[%s8] sm:$0x1]
      %v2049 = vlaneseq
      %v2050 = vshrl.u32 %v2049, 7
      %v2051 = vsub.s32 0, %v2050
      %v2052 = vrot.slane %v2047, %v2051
      %vm2054 = vcmask 261120
      %v2056 = vsel %vm2054, %v2040, 0
      %v2059 = vsel %vm2054, %v2041, 0
      %v2062 = vsel %vm2054, %v2042, 0
      %2064 = vmatprep.subr.mxu0 0.0
      %2065 = vmatpush1.msra.mxu0 %v2043
      %2066 = vmatprep.subr.mxu0 0.0
      %2067 = vmatpush1.msra.mxu0 %v2044
      %2068 = vmatprep.subr.mxu0 0.0
      %2069 = vmatpush1.msra.mxu0 %v2045
      %2070 = vmatprep.subr.mxu0 0.0
      %2071 = vmatpush1.msra.mxu0 %v2046
      %2072 = vmatprep.subr.mxu0 0.0
      %2073 = vmatpush1.msra.mxu0 0.0
      %2074 = vmatprep.subr.mxu0 0.0
      %2075 = vmatpush1.msra.mxu0 0.0
      %2076 = vmatprep.subr.mxu0 0.0
      %2077 = vmatpush1.msra.mxu0 0.0
      %2078 = vmatprep.subr.mxu0 0.0
      %2079 = vmatpush1.msra.mxu0 0.0
      %2080 = vmatprep.subr.mxu0 0.0
      %2081 = vmatpush1.msra.mxu0 0.0
      %2082 = vmatprep.subr.mxu0 0.0
      %2083 = vmatpush1.msra.mxu0 0.0
      %2084 = vmatprep.subr.mxu0 0.0
      %2085 = vmatpush1.msra.mxu0 0.0
      %2086 = vmatprep.subr.mxu0 0.0
      %2087 = vmatpush1.msra.mxu0 0.0
      %2088 = vmatprep.subr.mxu0 0.0
      %2089 = vmatpush1.msra.mxu0 0.0
      %2090 = vmatprep.subr.mxu0 0.0
      %2091 = vmatpush1.msra.mxu0 0.0
      %2092 = vmatprep.subr.mxu0 0.0
      %2093 = vmatpush1.msra.mxu0 0.0
      %2094 = vmatprep.subr.mxu0 0.0
      %2095 = vmatpush1.msra.mxu0 0.0
      %2096 = vmatprep.subr.mxu0 0.0
      %2097 = vmatpush1.msra.mxu0 0.0
      %2098 = vmatprep.subr.mxu0 0.0
      %2099 = vmatpush1.msra.mxu0 0.0
      %2100 = vmatprep.subr.mxu0 0.0
      %2101 = vmatpush1.msra.mxu0 0.0
      %2102 = vmatprep.subr.mxu0 0.0
      %2103 = vmatpush1.msra.mxu0 0.0
      %2104 = vmatprep.subr.mxu0 0.0
      %2105 = vmatpush1.msra.mxu0 0.0
      %2106 = vmatprep.subr.mxu0 0.0
      %2107 = vmatpush1.msra.mxu0 0.0
      %2108 = vmatprep.subr.mxu0 0.0
      %2109 = vmatpush1.msra.mxu0 0.0
      %2110 = vmatprep.subr.mxu0 0.0
      %2111 = vmatpush1.msra.mxu0 0.0
      %2112 = vmatprep.subr.mxu0 0.0
      %2113 = vmatpush1.msra.mxu0 0.0
      %2114 = vmatprep.subr.mxu0 0.0
      %2115 = vmatpush1.msra.mxu0 0.0
      %2116 = vmatprep.subr.mxu0 0.0
      %2117 = vmatpush1.msra.mxu0 0.0
      %2118 = vmatprep.subr.mxu0 0.0
      %2119 = vmatpush1.msra.mxu0 0.0
      %2120 = vmatprep.subr.mxu0 0.0
      %2121 = vmatpush1.msra.mxu0 0.0
      %2122 = vmatprep.subr.mxu0 0.0
      %2123 = vmatpush1.msra.mxu0 0.0
      %2124 = vmatprep.subr.mxu0 0.0
      %2125 = vmatpush1.msra.mxu0 0.0
      %2126 = vmatprep.subr.mxu0 0.0
      %2127 = vmatpush1.msra.mxu0 0.0
      %2128 = vmatprep.mubr.f32.mxu0 0.0
      %2129 = vmatmul.mubr.f32.gmra.mrb[0].mxu0 %v2056
      %v2130 = vpop.f32.mrb[0].mxu0
      %v2131 = vadd.f32 %v2052, %v2130
      %v2132 = vpop.f32.mrb[0].mxu0
      %2133 = vmatprep.mubr.f32.mxu0 0.0
      %2134 = vmatmul.mubr.f32.gmra.mrb[0].mxu0 %v2059
      %v2135 = vpop.f32.mrb[0].mxu0
      %v2136 = vadd.f32 %v2052, %v2135
      %v2137 = vpop.f32.mrb[0].mxu0
      %2138 = vmatprep.mubr.f32.mxu0 0.0
      %2139 = vmatmul.mubr.f32.gmra.mrb[0].mxu0 %v2062
      %v2140 = vpop.f32.mrb[0].mxu0
      %v2141 = vadd.f32 %v2052, %v2140
      %v2142 = vpop.f32.mrb[0].mxu0
      %2143 = vdwg.mxu0
      %v2144 = vmul.f32 %v2131, %v2131
      %v2145 = vmul.f32 %v2136, %v2136
      %v2146 = vmul.f32 %v2141, %v2141
      %vm2147 = vcmask 31744
      %v2148 = vsel %vm2147, %v2144, 0.0
      %2149 = vadd.xlane.f32.xlu0 %v2148
      %v2150 = vpop.xlane.xlu0 %2149
      %v2151 = vsel %vm2147, %v2145, 0.0
      %2152 = vadd.xlane.f32.xlu0 %v2151
      %v2153 = vpop.xlane.xlu0 %2152
      %vm2154 = vcmask 25600
      %v2155 = vsel %vm2154, %v2146, 0.0
      %2156 = vadd.xlane.f32.xlu0 %v2155
      %v2157 = vpop.xlane.xlu0 %2156
      %v2158 = vrsqrt.pop %v2150
      %v2159 = vmul.f32 %v2150, %v2158
      %vm2160 = vcmp.eq.f32.partialorder %v2150, inf
      %v2161 = vsel %vm2160, %v2150, %v2159
      %vm2162 = vcmp.eq.f32.partialorder %v2150, 0.0
      %v2163 = vand.u32 %v2150, 2147483648
      %v2164 = vsel %vm2162, %v2163, %v2161
      %v2165 = vrsqrt.pop %v2153
      %v2166 = vmul.f32 %v2153, %v2165
      %vm2167 = vcmp.eq.f32.partialorder %v2153, inf
      %v2168 = vsel %vm2167, %v2153, %v2166
      %vm2169 = vcmp.eq.f32.partialorder %v2153, 0.0
      %v2170 = vand.u32 %v2153, 2147483648
      %v2171 = vsel %vm2169, %v2170, %v2168
      %v2172 = vrsqrt.pop %v2157
      %v2173 = vmul.f32 %v2157, %v2172
      %vm2174 = vcmp.eq.f32.partialorder %v2157, inf
      %v2175 = vsel %vm2174, %v2157, %v2173
      %vm2176 = vcmp.eq.f32.partialorder %v2157, 0.0
      %v2177 = vand.u32 %v2157, 2147483648
      %v2178 = vsel %vm2176, %v2177, %v2175
      %vm2179 = vcmask 7168
      %2180 = vst.msk [vmem:[%s352] sm:$0xff] %vm2179, %v2164
      %2181 = vst.msk [vmem:[%s352 + $0x8] sm:$0xff] %vm2179, %v2171
      %vm2182 = vcmask 1024
      %2183 = vst.msk [vmem:[%s352 + $0x10] sm:$0x3] %vm2182, %v2178
      %p2184 = scmp.lt.s32.totalorder %s20, 1
      %s2185 = scalar_select %p2184, %s20, 1
      %s2186 = smul.addr %s2185, 3
      %s2187 = smul.addr %s2186, 8
      %s2188 = scalar_lea.vmem %s9, %s2187
      // Predicated region
      $region57: #{inverse_transform_2d.3} parent=55 // pred_check
        %p2189 = pneg %p237
      $region58: #{inverse_transform_2d.3} parent=55 // pred_check_branch
        %2191 = sbr.rel (%p2189) target = $region60
      $region59: #{inverse_transform_2d.3} parent=55 // pred_region
        _
      $region60: #{inverse_transform_2d.3} parent=55 // pred_fallthru
        _
    $region56: #{inverse_transform_2d.3} parent=5 // pred_fallthru
      _
    %p2192 = scmp.le.s32.totalorder 2, %s15
    // Predicated region
    $region61: #{inverse_transform_2d.3} parent=5 // pred_check
      %p2193 = pneg %p2192
    $region62: #{inverse_transform_2d.3} parent=5 // pred_check_branch
      %2195 = sbr.rel (%p2193) target = $region64
    $region63: #{inverse_transform_2d.3} parent=5 // pred_region
      %s2196 = ssub.s32 %s15, 2
      // Predicated region
      $region65: #{inverse_transform_2d.3} parent=63 // pred_check
        %p2197 = pneg %p243
      $region66: #{inverse_transform_2d.3} parent=63 // pred_check_branch
        %2199 = sbr.rel (%p2197) target = $region68
      $region67: #{inverse_transform_2d.3} parent=63 // pred_region
        %p2200 = scmp.lt.s32.totalorder %s21, 1
        %s2201 = scalar_select %p2200, %s21, 1
        %s2202 = smul.addr %s2201, 3
        %s2203 = smul.addr %s2202, 8
        %s2204 = scalar_lea.vmem %s9, %s2203
      $region68: #{inverse_transform_2d.3} parent=63 // pred_fallthru
        _
    $region64: #{inverse_transform_2d.3} parent=5 // pred_fallthru
      _
  $region6: #{inverse_transform_2d.3} parent=0 // loop_footer
    %s19 = sadd.s32 1, %s15
  $region7: #{inverse_transform_2d.3} parent=0 // loop_footer_branch
    %14 = sbr.rel target = $region3
  $region8: #{inverse_transform_2d.3} parent=0 // loop_exit
    _

// kernel: inverse_transform_2d.2
$region0: #{inverse_transform_2d.2}
  #allocation0 [shape = 'u32[]', space=smem, size = 0x4, offset = 0x4, fixed_abs, tag = 'smem constant byte address 0x4 - core index']
  #allocation1 [shape = 'u32[144,128]{1,0:T(1,128)}', space=vmem, size = 0x12000, scoped, tag = 'internal scratch']
  %s0 = inlined_call_operand.vmem [shape: f32[2,64,16], index: 0, kind: input, shape index: {}]
  %s1 = inlined_call_operand.vmem [shape: f32[2,64,16], index: 1, kind: input, shape index: {}]
  %s2 = inlined_call_operand.vmem [shape: bf16[192,64], index: 2, kind: input, shape index: {}]
  %s3 = inlined_call_operand.vmem [shape: bf16[16,96], index: 3, kind: input, shape index: {}]
  %s4 = inlined_call_operand.vmem [shape: bf16[2,3,6,64,16], index: 4, kind: output, shape index: {0}]
  %s5 = inlined_call_operand.vmem [shape: bf16[2,3,6,64,16], index: 5, kind: output, shape index: {1}]
  %6 = xla_tuple %s4, %s5
  %s7 = sld [smem:[#allocation0]]
  $region57: #{inverse_transform_2d.2} parent=0
    _
  %s9 = ssub.s32 1, %s7
  %s10 = scalar_select 0, %s9, %s7
  loop: start=0, step=1, limit=4
  $region2: #{inverse_transform_2d.2} parent=0 // loop_pre_header
    _
  $region3: #{inverse_transform_2d.2} parent=0 // loop_header
    %s12 = sphi 0, %s16
    %p13 = scmp.ge.s32.totalorder %s12, 4
    %s22 = sphi 0, %s24
    %s25 = sphi 0, %s22
    %s26 = sphi 0, %s25
    %s42 = sphi 0, %s26
    %s48 = sphi 0, %s50
    %s51 = sphi 0, %s48
    %s52 = sphi 0, %s51
    %s68 = sphi 0, %s52
    %s72 = sphi 0, %s72
    %s74 = sphi 0, %s72
    %s75 = sphi 0, %s74
    %s89 = sphi 0, %s75
    %s93 = sphi 0, %s93
    %s95 = sphi 0, %s93
    %s96 = sphi 0, %s95
    %s110 = sphi 0, %s96
    %s116 = sphi 0, %s118
    %s119 = sphi 0, %s116
    %s120 = sphi 0, %s119
    %s136 = sphi 0, %s120
    %s142 = sphi 0, %s144
    %s145 = sphi 0, %s142
    %s146 = sphi 0, %s145
    %s162 = sphi 0, %s146
  $region4: #{inverse_transform_2d.2} parent=0 // loop_header_branch
    %15 = sbr.rel (%p13) target = $region8
  $region5: #{inverse_transform_2d.2} parent=0 // loop_body
    %s17 = ssub.s32 %s12, 1
    %s18 = ssub.s32 %s12, 2
    %s19 = sadd.s32 %s12, 1
    %s20 = ssub.s32 %s12, %s19
    %p21 = scmp.eq.s32.totalorder %s20, 0
    %s23 = sadd.s32 %s22, 1
    %s24 = scalar_select %p21, %s22, %s23
    %p27 = pneg %p21
    %p28 = scmp.eq.s32.totalorder %s12, 1
    %p29 = por %p27, %p28
    %p30 = scmp.ne.s32.totalorder %s22, %s25
    %p31 = scmp.eq.s32.totalorder %s12, 0
    %p32 = por %p30, %p31
    %p33 = scmp.ne.s32.totalorder %s22, %s25
    %p34 = scmp.eq.s32.totalorder %s17, 1
    %p35 = por %p33, %p34
    %p36 = scmp.ne.s32.totalorder %s25, %s26
    %p37 = scmp.eq.s32.totalorder %s17, 0
    %p38 = por %p36, %p37
    %p39 = scmp.ne.s32.totalorder %s25, %s26
    %p40 = scmp.eq.s32.totalorder %s18, 1
    %p41 = por %p39, %p40
    %p43 = scmp.ne.s32.totalorder %s26, %s42
    %p44 = scmp.eq.s32.totalorder %s18, 0
    %p45 = por %p43, %p44
    %s46 = ssub.s32 %s12, %s19
    %p47 = scmp.eq.s32.totalorder %s46, 0
    %s49 = sadd.s32 %s48, 1
    %s50 = scalar_select %p47, %s48, %s49
    %p53 = pneg %p47
    %p54 = scmp.eq.s32.totalorder %s12, 1
    %p55 = por %p53, %p54
    %p56 = scmp.ne.s32.totalorder %s48, %s51
    %p57 = scmp.eq.s32.totalorder %s12, 0
    %p58 = por %p56, %p57
    %p59 = scmp.ne.s32.totalorder %s48, %s51
    %p60 = scmp.eq.s32.totalorder %s17, 1
    %p61 = por %p59, %p60
    %p62 = scmp.ne.s32.totalorder %s51, %s52
    %p63 = scmp.eq.s32.totalorder %s17, 0
    %p64 = por %p62, %p63
    %p65 = scmp.ne.s32.totalorder %s51, %s52
    %p66 = scmp.eq.s32.totalorder %s18, 1
    %p67 = por %p65, %p66
    %p69 = scmp.ne.s32.totalorder %s52, %s68
    %p70 = scmp.eq.s32.totalorder %s18, 0
    %p71 = por %p69, %p70
    %s73 = sadd.s32 %s72, 1
    %p76 = scmp.eq.s32.totalorder %s12, 1
    %p77 = scmp.ne.s32.totalorder %s72, %s74
    %p78 = scmp.eq.s32.totalorder %s12, 0
    %p79 = por %p77, %p78
    %p80 = scmp.ne.s32.totalorder %s72, %s74
    %p81 = scmp.eq.s32.totalorder %s17, 1
    %p82 = por %p80, %p81
    %p83 = scmp.ne.s32.totalorder %s74, %s75
    %p84 = scmp.eq.s32.totalorder %s17, 0
    %p85 = por %p83, %p84
    %p86 = scmp.ne.s32.totalorder %s74, %s75
    %p87 = scmp.eq.s32.totalorder %s18, 1
    %p88 = por %p86, %p87
    %p90 = scmp.ne.s32.totalorder %s75, %s89
    %p91 = scmp.eq.s32.totalorder %s18, 0
    %p92 = por %p90, %p91
    %s94 = sadd.s32 %s93, 1
    %p97 = scmp.eq.s32.totalorder %s12, 1
    %p98 = scmp.ne.s32.totalorder %s93, %s95
    %p99 = scmp.eq.s32.totalorder %s12, 0
    %p100 = por %p98, %p99
    %p101 = scmp.ne.s32.totalorder %s93, %s95
    %p102 = scmp.eq.s32.totalorder %s17, 1
    %p103 = por %p101, %p102
    %p104 = scmp.ne.s32.totalorder %s95, %s96
    %p105 = scmp.eq.s32.totalorder %s17, 0
    %p106 = por %p104, %p105
    %p107 = scmp.ne.s32.totalorder %s95, %s96
    %p108 = scmp.eq.s32.totalorder %s18, 1
    %p109 = por %p107, %p108
    %p111 = scmp.ne.s32.totalorder %s96, %s110
    %p112 = scmp.eq.s32.totalorder %s18, 0
    %p113 = por %p111, %p112
    %s114 = ssub.s32 %s12, %s19
    %p115 = scmp.eq.s32.totalorder %s114, 0
    %s117 = sadd.s32 %s116, 1
    %s118 = scalar_select %p115, %s116, %s117
    %p121 = pneg %p115
    %p122 = scmp.eq.s32.totalorder %s12, 1
    %p123 = por %p121, %p122
    %p124 = scmp.ne.s32.totalorder %s116, %s119
    %p125 = scmp.eq.s32.totalorder %s12, 0
    %p126 = por %p124, %p125
    %p127 = scmp.ne.s32.totalorder %s116, %s119
    %p128 = scmp.eq.s32.totalorder %s17, 1
    %p129 = por %p127, %p128
    %p130 = scmp.ne.s32.totalorder %s119, %s120
    %p131 = scmp.eq.s32.totalorder %s17, 0
    %p132 = por %p130, %p131
    %p133 = scmp.ne.s32.totalorder %s119, %s120
    %p134 = scmp.eq.s32.totalorder %s18, 1
    %p135 = por %p133, %p134
    %p137 = scmp.ne.s32.totalorder %s120, %s136
    %p138 = scmp.eq.s32.totalorder %s18, 0
    %p139 = por %p137, %p138
    %s140 = ssub.s32 %s12, %s19
    %p141 = scmp.eq.s32.totalorder %s140, 0
    %s143 = sadd.s32 %s142, 1
    %s144 = scalar_select %p141, %s142, %s143
    %p147 = pneg %p141
    %p148 = scmp.eq.s32.totalorder %s12, 1
    %p149 = por %p147, %p148
    %p150 = scmp.ne.s32.totalorder %s142, %s145
    %p151 = scmp.eq.s32.totalorder %s12, 0
    %p152 = por %p150, %p151
    %p153 = scmp.ne.s32.totalorder %s142, %s145
    %p154 = scmp.eq.s32.totalorder %s17, 1
    %p155 = por %p153, %p154
    %p156 = scmp.ne.s32.totalorder %s145, %s146
    %p157 = scmp.eq.s32.totalorder %s17, 0
    %p158 = por %p156, %p157
    %p159 = scmp.ne.s32.totalorder %s145, %s146
    %p160 = scmp.eq.s32.totalorder %s18, 1
    %p161 = por %p159, %p160
    %p163 = scmp.ne.s32.totalorder %s146, %s162
    %p164 = scmp.eq.s32.totalorder %s18, 0
    %p165 = por %p163, %p164
    %p166 = scmp.le.s32.totalorder 1, %s12
    %p167 = scmp.lt.s32.totalorder %s12, 3
    %p168 = pnand %p166, %p167
    %p169 = pneg %p168
    // Predicated region
    $region9: #{inverse_transform_2d.2} parent=5 // pred_check
      _
    $region10: #{inverse_transform_2d.2} parent=5 // pred_check_branch
      %171 = sbr.rel (%p168) target = $region12
    $region11: #{inverse_transform_2d.2} parent=5 // pred_region
      %s172 = ssub.s32 %s12, 1
      // Predicated region
      $region13: #{inverse_transform_2d.2} parent=11 // pred_check
        %p173 = pneg %p85
      $region14: #{inverse_transform_2d.2} parent=11 // pred_check_branch
        %175 = sbr.rel (%p173) target = $region16
      $region15: #{inverse_transform_2d.2} parent=11 // pred_region
        _
      $region16: #{inverse_transform_2d.2} parent=11 // pred_fallthru
        _
      // Predicated region
      $region17: #{inverse_transform_2d.2} parent=11 // pred_check
        %p176 = pneg %p106
      $region18: #{inverse_transform_2d.2} parent=11 // pred_check_branch
        %178 = sbr.rel (%p176) target = $region20
      $region19: #{inverse_transform_2d.2} parent=11 // pred_region
        _
      $region20: #{inverse_transform_2d.2} parent=11 // pred_fallthru
        _
    $region12: #{inverse_transform_2d.2} parent=5 // pred_fallthru
      _
    %p179 = scmp.lt.s32.totalorder %s12, 2
    // Predicated region
    $region21: #{inverse_transform_2d.2} parent=5 // pred_check
      %p180 = pneg %p179
    $region22: #{inverse_transform_2d.2} parent=5 // pred_check_branch
      %182 = sbr.rel (%p180) target = $region24
    $region23: #{inverse_transform_2d.2} parent=5 // pred_region
      // Predicated region
      $region25: #{inverse_transform_2d.2} parent=23 // pred_check
        %p183 = pneg %p32
      $region26: #{inverse_transform_2d.2} parent=23 // pred_check_branch
        %185 = sbr.rel (%p183) target = $region28
      $region27: #{inverse_transform_2d.2} parent=23 // pred_region
        %p186 = scmp.lt.s32.totalorder %s12, 1
        %s187 = scalar_select %p186, %s12, 1
        %s188 = smul.addr %s187, 8
        %s189 = smul.addr %s188, 8
        %s190 = scalar_lea.vmem %s0, %s189
      $region28: #{inverse_transform_2d.2} parent=23 // pred_fallthru
        _
      // Predicated region
      $region29: #{inverse_transform_2d.2} parent=23 // pred_check
        %p191 = pneg %p58
      $region30: #{inverse_transform_2d.2} parent=23 // pred_check_branch
        %193 = sbr.rel (%p191) target = $region32
      $region31: #{inverse_transform_2d.2} parent=23 // pred_region
        %p194 = scmp.lt.s32.totalorder %s12, 1
        %s195 = scalar_select %p194, %s12, 1
        %s196 = smul.addr %s195, 8
        %s197 = smul.addr %s196, 8
        %s198 = scalar_lea.vmem %s1, %s197
      $region32: #{inverse_transform_2d.2} parent=23 // pred_fallthru
        _
    $region24: #{inverse_transform_2d.2} parent=5 // pred_fallthru
      _
    %p199 = scmp.le.s32.totalorder 1, %s12
    %p200 = scmp.lt.s32.totalorder %s12, 3
    %p201 = pnand %p199, %p200
    %p202 = pneg %p201
    // Predicated region
    $region33: #{inverse_transform_2d.2} parent=5 // pred_check
      _
    $region34: #{inverse_transform_2d.2} parent=5 // pred_check_branch
      %204 = sbr.rel (%p201) target = $region36
    $region35: #{inverse_transform_2d.2} parent=5 // pred_region
      %s205 = ssub.s32 %s12, 1
      %p206 = scmp.lt.s32.totalorder %s17, 1
      %s207 = scalar_select %p206, %s17, 1
      %s208 = smul.addr %s207, 8
      %s209 = smul.addr %s208, 8
      %s210 = scalar_lea.vmem %s0, %s209
      %p211 = pneg %p38
      %p212 = pneg %p35
      %p213 = scmp.lt.s32.totalorder %s17, 1
      %s214 = scalar_select %p213, %s17, 1
      %s215 = smul.addr %s214, 8
      %s216 = smul.addr %s215, 8
      %s217 = scalar_lea.vmem %s1, %s216
      %p218 = pneg %p64
      %p219 = pneg %p61
      %p220 = pneg %p85
      %p221 = pneg %p82
      %p222 = pneg %p106
      %p223 = pneg %p103
      %p224 = pneg %p132
      %p225 = pneg %p129
      %p226 = scmp.lt.s32.totalorder %s17, 1
      %s227 = scalar_select %p226, %s17, 1
      %s228 = smul.addr %s227, 144
      %s229 = smul.addr %s228, 4
      %s230 = scalar_lea.vmem %s4, %s229
      %p231 = pneg %p158
      %p232 = pneg %p155
      %p233 = scmp.lt.s32.totalorder %s17, 1
      %s234 = scalar_select %p233, %s17, 1
      %s235 = smul.addr %s234, 144
      %s236 = smul.addr %s235, 4
      %s237 = scalar_lea.vmem %s5, %s236
      %p238 = scmp.lt.s32.totalorder %s17, 1
      %s239 = scalar_select %p238, %s17, 1
      %s240 = smul.addr %s239, 8
      %s241 = smul.addr %s240, 8
      %s242 = scalar_lea.vmem %s0, %s241
      %p243 = scmp.lt.s32.totalorder %s17, 1
      %s244 = scalar_select %p243, %s17, 1
      %s245 = smul.addr %s244, 8
      %s246 = smul.addr %s245, 8
      %s247 = scalar_lea.vmem %s1, %s246
      %p248 = scmp.lt.s32.totalorder %s17, 1
      %s249 = scalar_select %p248, %s17, 1
      %s250 = smul.addr %s249, 144
      %s251 = smul.addr %s250, 4
      %s252 = scalar_lea.vmem %s4, %s251
      %p253 = scmp.lt.s32.totalorder %s17, 1
      %s254 = scalar_select %p253, %s17, 1
      %s255 = smul.addr %s254, 144
      %s256 = smul.addr %s255, 4
      %s257 = scalar_lea.vmem %s5, %s256
      %v259 = vld [vmem:[%s242] sm:$0xff]
      %v260 = vld [vmem:[%s242 + $0x8] sm:$0xff]
      %v261 = vld [vmem:[%s242 + $0x10] sm:$0xff]
      %v262 = vld [vmem:[%s242 + $0x18] sm:$0xff]
      %v263 = vld [vmem:[%s242 + $0x20] sm:$0xff]
      %v264 = vld [vmem:[%s242 + $0x28] sm:$0xff]
      %v265 = vld [vmem:[%s242 + $0x30] sm:$0xff]
      %v266 = vld [vmem:[%s242 + $0x38] sm:$0xff]
      %v267 = vmax.f32 %v259, %v261
      %v268 = vmax.f32 %v260, %v262
      %v269 = vmax.f32 %v267, %v263
      %v270 = vmax.f32 %v268, %v264
      %v271 = vmax.f32 %v269, %v265
      %v272 = vmax.f32 %v270, %v266
      %v273 = vsub.f32 %v259, %v271
      %v274 = vsub.f32 %v260, %v272
      %v275 = vmul.f32 %v273, 1.442695
      %v276 = vpow.pop %v275
      %v277 = vmul.f32 %v274, 1.442695
      %v278 = vpow.pop %v277
      %v279 = vsub.f32 %v261, %v271
      %v280 = vsub.f32 %v262, %v272
      %v281 = vmul.f32 %v279, 1.442695
      %v282 = vpow.pop %v281
      %v283 = vmul.f32 %v280, 1.442695
      %v284 = vpow.pop %v283
      %v285 = vadd.f32 %v276, %v282
      %v286 = vadd.f32 %v278, %v284
      %v287 = vsub.f32 %v263, %v271
      %v288 = vsub.f32 %v264, %v272
      %v289 = vmul.f32 %v287, 1.442695
      %v290 = vpow.pop %v289
      %v291 = vmul.f32 %v288, 1.442695
      %v292 = vpow.pop %v291
      %v293 = vadd.f32 %v285, %v290
      %v294 = vadd.f32 %v286, %v292
      %v295 = vsub.f32 %v265, %v271
      %v296 = vsub.f32 %v266, %v272
      %v297 = vmul.f32 %v295, 1.442695
      %v298 = vpow.pop %v297
      %v299 = vmul.f32 %v296, 1.442695
      %v300 = vpow.pop %v299
      %v301 = vadd.f32 %v293, %v298
      %v302 = vadd.f32 %v294, %v300
      %v303 = vlog2.pop %v301
      %v304 = vmul.f32 %v303, 0.6931472
      %v305 = vlog2.pop %v302
      %v306 = vmul.f32 %v305, 0.6931472
      %v307 = vadd.f32 %v271, %v304
      %v308 = vadd.f32 %v272, %v306
      %v309 = vsub.f32 %v259, %v307
      %v310 = vsub.f32 %v260, %v308
      %v311 = vsub.f32 %v261, %v307
      %v312 = vsub.f32 %v262, %v308
      %v313 = vsub.f32 %v263, %v307
      %v314 = vsub.f32 %v264, %v308
      %v315 = vsub.f32 %v265, %v307
      %v316 = vsub.f32 %v266, %v308
      %v317 = vld [vmem:[%s247] sm:$0xff]
      %v318 = vld [vmem:[%s247 + $0x8] sm:$0xff]
      %v319 = vld [vmem:[%s247 + $0x10] sm:$0xff]
      %v320 = vld [vmem:[%s247 + $0x18] sm:$0xff]
      %v321 = vld [vmem:[%s247 + $0x20] sm:$0xff]
      %v322 = vld [vmem:[%s247 + $0x28] sm:$0xff]
      %v323 = vld [vmem:[%s247 + $0x30] sm:$0xff]
      %v324 = vld [vmem:[%s247 + $0x38] sm:$0xff]
      %v325 = vpack.c.bf16 %v310, %v309
      %v326 = vpack.c.bf16 %v312, %v311
      %v327 = vpack.c.bf16 %v314, %v313
      %v328 = vpack.c.bf16 %v316, %v315
      %v329 = vpack.c.bf16 %v318, %v317
      %v330 = vpack.c.bf16 %v320, %v319
      %v331 = vpack.c.bf16 %v322, %v321
      %v332 = vpack.c.bf16 %v324, %v323
      %v333 = vld [vmem:[%s3] sm:$0xf]
      %v334 = vld [vmem:[%s3 + $0x4] sm:$0xf]
      %v337 = vunpack.c.l.b16 %v333
      %v338 = vunpack.c.l.b16 %v334
      %v339 = vpack.c.b16 %v338, %v337
      %vm341 = vcmask 130048
      %v343 = vsel %vm341, %v325, 0
      %v346 = vsel %vm341, %v326, 0
      %v349 = vsel %vm341, %v327, 0
      %v352 = vsel %vm341, %v328, 0
      %v355 = vsel %vm341, %v329, 0
      %v358 = vsel %vm341, %v330, 0
      %v361 = vsel %vm341, %v331, 0
      %v364 = vsel %vm341, %v332, 0
      %366 = vmatprep.subr.bf16.mxu0 0
      %367 = vmatpush1.bf16.msra.mxu0 %v339
      %368 = vmatprep.subr.bf16.mxu0 0
      %369 = vmatpush1.bf16.msra.mxu0 0
      %370 = vmatprep.subr.bf16.mxu0 0
      %371 = vmatpush1.bf16.msra.mxu0 0
      %372 = vmatprep.subr.bf16.mxu0 0
      %373 = vmatpush1.bf16.msra.mxu0 0
      %374 = vmatprep.subr.bf16.mxu0 0
      %375 = vmatpush1.bf16.msra.mxu0 0
      %376 = vmatprep.subr.bf16.mxu0 0
      %377 = vmatpush1.bf16.msra.mxu0 0
      %378 = vmatprep.subr.bf16.mxu0 0
      %379 = vmatpush1.bf16.msra.mxu0 0
      %380 = vmatprep.subr.bf16.mxu0 0
      %381 = vmatpush1.bf16.msra.mxu0 0
      %382 = vmatprep.subr.bf16.mxu0 0
      %383 = vmatpush1.bf16.msra.mxu0 0
      %384 = vmatprep.subr.bf16.mxu0 0
      %385 = vmatpush1.bf16.msra.mxu0 0
      %386 = vmatprep.subr.bf16.mxu0 0
      %387 = vmatpush1.bf16.msra.mxu0 0
      %388 = vmatprep.subr.bf16.mxu0 0
      %389 = vmatpush1.bf16.msra.mxu0 0
      %390 = vmatprep.subr.bf16.mxu0 0
      %391 = vmatpush1.bf16.msra.mxu0 0
      %392 = vmatprep.subr.bf16.mxu0 0
      %393 = vmatpush1.bf16.msra.mxu0 0
      %394 = vmatprep.subr.bf16.mxu0 0
      %395 = vmatpush1.bf16.msra.mxu0 0
      %396 = vmatprep.subr.bf16.mxu0 0
      %397 = vmatpush1.bf16.msra.mxu0 0
      %398 = vmatprep.mubr.bf16.mxu0 0
      %399 = vmatmul.mubr.bf16.gmra.mrb[0].mxu0 %v343
      %v400 = vpop.f32.mrb[0].mxu0
      %v401 = vadd.f32 0.0, %v400
      %v402 = vpop.f32.mrb[0].mxu0
      %v403 = vpop.f32.mrb[0].mxu0
      %v404 = vadd.f32 0.0, %v403
      %v405 = vpop.f32.mrb[0].mxu0
      %406 = vmatprep.mubr.bf16.mxu0 0
      %407 = vmatmul.mubr.bf16.gmra.mrb[0].mxu0 %v346
      %v408 = vpop.f32.mrb[0].mxu0
      %v409 = vadd.f32 0.0, %v408
      %v410 = vpop.f32.mrb[0].mxu0
      %v411 = vpop.f32.mrb[0].mxu0
      %v412 = vadd.f32 0.0, %v411
      %v413 = vpop.f32.mrb[0].mxu0
      %414 = vmatprep.mubr.bf16.mxu0 0
      %415 = vmatmul.mubr.bf16.gmra.mrb[0].mxu0 %v349
      %v416 = vpop.f32.mrb[0].mxu0
      %v417 = vadd.f32 0.0, %v416
      %v418 = vpop.f32.mrb[0].mxu0
      %v419 = vpop.f32.mrb[0].mxu0
      %v420 = vadd.f32 0.0, %v419
      %v421 = vpop.f32.mrb[0].mxu0
      %422 = vmatprep.mubr.bf16.mxu0 0
      %423 = vmatmul.mubr.bf16.gmra.mrb[0].mxu0 %v352
      %v424 = vpop.f32.mrb[0].mxu0
      %v425 = vadd.f32 0.0, %v424
      %v426 = vpop.f32.mrb[0].mxu0
      %v427 = vpop.f32.mrb[0].mxu0
      %v428 = vadd.f32 0.0, %v427
      %v429 = vpop.f32.mrb[0].mxu0
      %430 = vmatprep.mubr.bf16.mxu0 0
      %431 = vmatmul.mubr.bf16.gmra.mrb[0].mxu0 %v355
      %v432 = vpop.f32.mrb[0].mxu0
      %v433 = vadd.f32 0.0, %v432
      %v434 = vpop.f32.mrb[0].mxu0
      %v435 = vpop.f32.mrb[0].mxu0
      %v436 = vadd.f32 0.0, %v435
      %v437 = vpop.f32.mrb[0].mxu0
      %438 = vmatprep.mubr.bf16.mxu0 0
      %439 = vmatmul.mubr.bf16.gmra.mrb[0].mxu0 %v358
      %v440 = vpop.f32.mrb[0].mxu0
      %v441 = vadd.f32 0.0, %v440
      %v442 = vpop.f32.mrb[0].mxu0
      %v443 = vpop.f32.mrb[0].mxu0
      %v444 = vadd.f32 0.0, %v443
      %v445 = vpop.f32.mrb[0].mxu0
      %446 = vmatprep.mubr.bf16.mxu0 0
      %447 = vmatmul.mubr.bf16.gmra.mrb[0].mxu0 %v361
      %v448 = vpop.f32.mrb[0].mxu0
      %v449 = vadd.f32 0.0, %v448
      %v450 = vpop.f32.mrb[0].mxu0
      %v451 = vpop.f32.mrb[0].mxu0
      %v452 = vadd.f32 0.0, %v451
      %v453 = vpop.f32.mrb[0].mxu0
      %454 = vmatprep.mubr.bf16.mxu0 0
      %455 = vmatmul.mubr.bf16.gmra.mrb[0].mxu0 %v364
      %v456 = vpop.f32.mrb[0].mxu0
      %v457 = vadd.f32 0.0, %v456
      %v458 = vpop.f32.mrb[0].mxu0
      %v459 = vpop.f32.mrb[0].mxu0
      %v460 = vadd.f32 0.0, %v459
      %v461 = vpop.f32.mrb[0].mxu0
      %462 = vdwg.mxu0
      %v463 = vpack.c.bf16 %v404, %v401
      %v464 = vpack.c.bf16 %v412, %v409
      %v465 = vpack.c.bf16 %v420, %v417
      %v466 = vpack.c.bf16 %v428, %v425
      %v467 = vpack.c.bf16 %v436, %v433
      %v468 = vpack.c.bf16 %v444, %v441
      %v469 = vpack.c.bf16 %v452, %v449
      %v470 = vpack.c.bf16 %v460, %v457
      %v471 = vld [vmem:[%s2] sm:$0xf]
      %v472 = vld [vmem:[%s2 + $0x4] sm:$0xf]
      %v473 = vld [vmem:[%s2 + $0x8] sm:$0xf]
      %v474 = vld [vmem:[%s2 + $0xc] sm:$0xf]
      %v475 = vld [vmem:[%s2 + $0x10] sm:$0xf]
      %v476 = vld [vmem:[%s2 + $0x14] sm:$0xf]
      %v477 = vld [vmem:[%s2 + $0x18] sm:$0xf]
      %v478 = vld [vmem:[%s2 + $0x1c] sm:$0xf]
      %v479 = vld [vmem:[%s2 + $0x20] sm:$0xf]
      %v480 = vld [vmem:[%s2 + $0x24] sm:$0xf]
      %v481 = vld [vmem:[%s2 + $0x28] sm:$0xf]
      %v482 = vld [vmem:[%s2 + $0x2c] sm:$0xf]
      %v483 = vld [vmem:[%s2 + $0x30] sm:$0xf]
      %v484 = vld [vmem:[%s2 + $0x34] sm:$0xf]
      %v485 = vld [vmem:[%s2 + $0x38] sm:$0xf]
      %v486 = vld [vmem:[%s2 + $0x3c] sm:$0xf]
      %v487 = vld [vmem:[%s2 + $0x40] sm:$0xf]
      %v488 = vld [vmem:[%s2 + $0x44] sm:$0xf]
      %v489 = vld [vmem:[%s2 + $0x48] sm:$0xf]
      %v490 = vld [vmem:[%s2 + $0x4c] sm:$0xf]
      %v491 = vld [vmem:[%s2 + $0x50] sm:$0xf]
      %v492 = vld [vmem:[%s2 + $0x54] sm:$0xf]
      %v493 = vld [vmem:[%s2 + $0x58] sm:$0xf]
      %v494 = vld [vmem:[%s2 + $0x5c] sm:$0xf]
      %v519 = vunpack.c.l.b16 %v471
      %v520 = vunpack.c.l.b16 %v472
      %v521 = vunpack.c.l.b16 %v473
      %v522 = vunpack.c.l.b16 %v474
      %v523 = vunpack.c.l.b16 %v475
      %v524 = vunpack.c.l.b16 %v476
      %v525 = vunpack.c.l.b16 %v477
      %v526 = vunpack.c.l.b16 %v478
      %v527 = vunpack.c.l.b16 %v479
      %v528 = vunpack.c.l.b16 %v480
      %v529 = vunpack.c.l.b16 %v481
      %v530 = vunpack.c.l.b16 %v482
      %v531 = vunpack.c.l.b16 %v483
      %v532 = vunpack.c.l.b16 %v484
      %v533 = vunpack.c.l.b16 %v485
      %v534 = vunpack.c.l.b16 %v486
      %v535 = vunpack.c.l.b16 %v487
      %v536 = vunpack.c.l.b16 %v488
      %v537 = vunpack.c.l.b16 %v489
      %v538 = vunpack.c.l.b16 %v490
      %v539 = vunpack.c.l.b16 %v491
      %v540 = vunpack.c.l.b16 %v492
      %v541 = vunpack.c.l.b16 %v493
      %v542 = vunpack.c.l.b16 %v494
      %v543 = vpack.c.b16 %v520, %v519
      %v544 = vpack.c.b16 %v522, %v521
      %v545 = vpack.c.b16 %v524, %v523
      %v546 = vpack.c.b16 %v526, %v525
      %v547 = vpack.c.b16 %v528, %v527
      %v548 = vpack.c.b16 %v530, %v529
      %v549 = vpack.c.b16 %v532, %v531
      %v550 = vpack.c.b16 %v534, %v533
      %v551 = vpack.c.b16 %v536, %v535
      %v552 = vpack.c.b16 %v538, %v537
      %v553 = vpack.c.b16 %v540, %v539
      %v554 = vpack.c.b16 %v542, %v541
      %vm555 = vcmask 523264
      %v557 = vsel %vm555, %v543, 0
      %v560 = vsel %vm555, %v544, 0
      %v563 = vsel %vm555, %v545, 0
      %v566 = vsel %vm555, %v546, 0
      %v569 = vsel %vm555, %v547, 0
      %v572 = vsel %vm555, %v548, 0
      %v575 = vsel %vm555, %v549, 0
      %v578 = vsel %vm555, %v550, 0
      %v581 = vsel %vm555, %v551, 0
      %v584 = vsel %vm555, %v552, 0
      %v587 = vsel %vm555, %v553, 0
      %v590 = vsel %vm555, %v554, 0
      %592 = vmatprep.subr.bf16.mxu0 0
      %593 = vmatpush1.bf16.msra.mxu0 %v463
      %594 = vmatprep.subr.bf16.mxu0 0
      %595 = vmatpush1.bf16.msra.mxu0 %v464
      %596 = vmatprep.subr.bf16.mxu0 0
      %597 = vmatpush1.bf16.msra.mxu0 %v465
      %598 = vmatprep.subr.bf16.mxu0 0
      %599 = vmatpush1.bf16.msra.mxu0 %v466
      %600 = vmatprep.subr.bf16.mxu0 0
      %601 = vmatpush1.bf16.msra.mxu0 0
      %602 = vmatprep.subr.bf16.mxu0 0
      %603 = vmatpush1.bf16.msra.mxu0 0
      %604 = vmatprep.subr.bf16.mxu0 0
      %605 = vmatpush1.bf16.msra.mxu0 0
      %606 = vmatprep.subr.bf16.mxu0 0
      %607 = vmatpush1.bf16.msra.mxu0 0
      %608 = vmatprep.subr.bf16.mxu0 0
      %609 = vmatpush1.bf16.msra.mxu0 0
      %610 = vmatprep.subr.bf16.mxu0 0
      %611 = vmatpush1.bf16.msra.mxu0 0
      %612 = vmatprep.subr.bf16.mxu0 0
      %613 = vmatpush1.bf16.msra.mxu0 0
      %614 = vmatprep.subr.bf16.mxu0 0
      %615 = vmatpush1.bf16.msra.mxu0 0
      %616 = vmatprep.subr.bf16.mxu0 0
      %617 = vmatpush1.bf16.msra.mxu0 0
      %618 = vmatprep.subr.bf16.mxu0 0
      %619 = vmatpush1.bf16.msra.mxu0 0
      %620 = vmatprep.subr.bf16.mxu0 0
      %621 = vmatpush1.bf16.msra.mxu0 0
      %622 = vmatprep.subr.bf16.mxu0 0
      %623 = vmatpush1.bf16.msra.mxu0 0
      %624 = vmatprep.mubr.bf16.mxu0 0
      %625 = vmatmul.mubr.bf16.gmra.mrb[0].mxu0 %v557
      %v626 = vpop.f32.mrb[0].mxu0
      %v627 = vadd.f32 0.0, %v626
      %v628 = vpop.f32.mrb[0].mxu0
      %v629 = vpop.f32.mrb[0].mxu0
      %v630 = vadd.f32 0.0, %v629
      %v631 = vpop.f32.mrb[0].mxu0
      %632 = vmatprep.mubr.bf16.mxu0 0
      %633 = vmatmul.mubr.bf16.gmra.mrb[0].mxu0 %v560
      %v634 = vpop.f32.mrb[0].mxu0
      %v635 = vadd.f32 0.0, %v634
      %v636 = vpop.f32.mrb[0].mxu0
      %v637 = vpop.f32.mrb[0].mxu0
      %v638 = vadd.f32 0.0, %v637
      %v639 = vpop.f32.mrb[0].mxu0
      %640 = vmatprep.mubr.bf16.mxu0 0
      %641 = vmatmul.mubr.bf16.gmra.mrb[0].mxu0 %v563
      %v642 = vpop.f32.mrb[0].mxu0
      %v643 = vadd.f32 0.0, %v642
      %v644 = vpop.f32.mrb[0].mxu0
      %v645 = vpop.f32.mrb[0].mxu0
      %v646 = vadd.f32 0.0, %v645
      %v647 = vpop.f32.mrb[0].mxu0
      %648 = vmatprep.mubr.bf16.mxu0 0
      %649 = vmatmul.mubr.bf16.gmra.mrb[0].mxu0 %v566
      %v650 = vpop.f32.mrb[0].mxu0
      %v651 = vadd.f32 0.0, %v650
      %v652 = vpop.f32.mrb[0].mxu0
      %v653 = vpop.f32.mrb[0].mxu0
      %v654 = vadd.f32 0.0, %v653
      %v655 = vpop.f32.mrb[0].mxu0
      %656 = vmatprep.mubr.bf16.mxu0 0
      %657 = vmatmul.mubr.bf16.gmra.mrb[0].mxu0 %v569
      %v658 = vpop.f32.mrb[0].mxu0
      %v659 = vadd.f32 0.0, %v658
      %v660 = vpop.f32.mrb[0].mxu0
      %v661 = vpop.f32.mrb[0].mxu0
      %v662 = vadd.f32 0.0, %v661
      %v663 = vpop.f32.mrb[0].mxu0
      %664 = vmatprep.mubr.bf16.mxu0 0
      %665 = vmatmul.mubr.bf16.gmra.mrb[0].mxu0 %v572
      %v666 = vpop.f32.mrb[0].mxu0
      %v667 = vadd.f32 0.0, %v666
      %v668 = vpop.f32.mrb[0].mxu0
      %v669 = vpop.f32.mrb[0].mxu0
      %v670 = vadd.f32 0.0, %v669
      %v671 = vpop.f32.mrb[0].mxu0
      %672 = vmatprep.mubr.bf16.mxu0 0
      %673 = vmatmul.mubr.bf16.gmra.mrb[0].mxu0 %v575
      %v674 = vpop.f32.mrb[0].mxu0
      %v675 = vadd.f32 0.0, %v674
      %v676 = vpop.f32.mrb[0].mxu0
      %v677 = vpop.f32.mrb[0].mxu0
      %v678 = vadd.f32 0.0, %v677
      %v679 = vpop.f32.mrb[0].mxu0
      %680 = vmatprep.mubr.bf16.mxu0 0
      %681 = vmatmul.mubr.bf16.gmra.mrb[0].mxu0 %v578
      %v682 = vpop.f32.mrb[0].mxu0
      %v683 = vadd.f32 0.0, %v682
      %v684 = vpop.f32.mrb[0].mxu0
      %v685 = vpop.f32.mrb[0].mxu0
      %v686 = vadd.f32 0.0, %v685
      %v687 = vpop.f32.mrb[0].mxu0
      %688 = vmatprep.mubr.bf16.mxu0 0
      %689 = vmatmul.mubr.bf16.gmra.mrb[0].mxu0 %v581
      %v690 = vpop.f32.mrb[0].mxu0
      %v691 = vadd.f32 0.0, %v690
      %v692 = vpop.f32.mrb[0].mxu0
      %v693 = vpop.f32.mrb[0].mxu0
      %v694 = vadd.f32 0.0, %v693
      %v695 = vpop.f32.mrb[0].mxu0
      %696 = vmatprep.mubr.bf16.mxu0 0
      %697 = vmatmul.mubr.bf16.gmra.mrb[0].mxu0 %v584
      %v698 = vpop.f32.mrb[0].mxu0
      %v699 = vadd.f32 0.0, %v698
      %v700 = vpop.f32.mrb[0].mxu0
      %v701 = vpop.f32.mrb[0].mxu0
      %v702 = vadd.f32 0.0, %v701
      %v703 = vpop.f32.mrb[0].mxu0
      %704 = vmatprep.mubr.bf16.mxu0 0
      %705 = vmatmul.mubr.bf16.gmra.mrb[0].mxu0 %v587
      %v706 = vpop.f32.mrb[0].mxu0
      %v707 = vadd.f32 0.0, %v706
      %v708 = vpop.f32.mrb[0].mxu0
      %v709 = vpop.f32.mrb[0].mxu0
      %v710 = vadd.f32 0.0, %v709
      %v711 = vpop.f32.mrb[0].mxu0
      %712 = vmatprep.mubr.bf16.mxu0 0
      %713 = vmatmul.mubr.bf16.gmra.mrb[0].mxu0 %v590
      %v714 = vpop.f32.mrb[0].mxu0
      %v715 = vadd.f32 0.0, %v714
      %v716 = vpop.f32.mrb[0].mxu0
      %v717 = vpop.f32.mrb[0].mxu0
      %v718 = vadd.f32 0.0, %v717
      %v719 = vpop.f32.mrb[0].mxu0
      %720 = vdwg.mxu0
      %721 = vmatprep.subr.bf16.mxu0 0
      %722 = vmatpush1.bf16.msra.mxu0 %v467
      %723 = vmatprep.subr.bf16.mxu0 0
      %724 = vmatpush1.bf16.msra.mxu0 %v468
      %725 = vmatprep.subr.bf16.mxu0 0
      %726 = vmatpush1.bf16.msra.mxu0 %v469
      %727 = vmatprep.subr.bf16.mxu0 0
      %728 = vmatpush1.bf16.msra.mxu0 %v470
      %729 = vmatprep.subr.bf16.mxu0 0
      %730 = vmatpush1.bf16.msra.mxu0 0
      %731 = vmatprep.subr.bf16.mxu0 0
      %732 = vmatpush1.bf16.msra.mxu0 0
      %733 = vmatprep.subr.bf16.mxu0 0
      %734 = vmatpush1.bf16.msra.mxu0 0
      %735 = vmatprep.subr.bf16.mxu0 0
      %736 = vmatpush1.bf16.msra.mxu0 0
      %737 = vmatprep.subr.bf16.mxu0 0
      %738 = vmatpush1.bf16.msra.mxu0 0
      %739 = vmatprep.subr.bf16.mxu0 0
      %740 = vmatpush1.bf16.msra.mxu0 0
      %741 = vmatprep.subr.bf16.mxu0 0
      %742 = vmatpush1.bf16.msra.mxu0 0
      %743 = vmatprep.subr.bf16.mxu0 0
      %744 = vmatpush1.bf16.msra.mxu0 0
      %745 = vmatprep.subr.bf16.mxu0 0
      %746 = vmatpush1.bf16.msra.mxu0 0
      %747 = vmatprep.subr.bf16.mxu0 0
      %748 = vmatpush1.bf16.msra.mxu0 0
      %749 = vmatprep.subr.bf16.mxu0 0
      %750 = vmatpush1.bf16.msra.mxu0 0
      %751 = vmatprep.subr.bf16.mxu0 0
      %752 = vmatpush1.bf16.msra.mxu0 0
      %753 = vmatprep.mubr.bf16.mxu0 0
      %754 = vmatmul.mubr.bf16.gmra.mrb[0].mxu0 %v557
      %v755 = vpop.f32.mrb[0].mxu0
      %v756 = vadd.f32 0.0, %v755
      %v757 = vpop.f32.mrb[0].mxu0
      %v758 = vpop.f32.mrb[0].mxu0
      %v759 = vadd.f32 0.0, %v758
      %v760 = vpop.f32.mrb[0].mxu0
      %761 = vmatprep.mubr.bf16.mxu0 0
      %762 = vmatmul.mubr.bf16.gmra.mrb[0].mxu0 %v560
      %v763 = vpop.f32.mrb[0].mxu0
      %v764 = vadd.f32 0.0, %v763
      %v765 = vpop.f32.mrb[0].mxu0
      %v766 = vpop.f32.mrb[0].mxu0
      %v767 = vadd.f32 0.0, %v766
      %v768 = vpop.f32.mrb[0].mxu0
      %769 = vmatprep.mubr.bf16.mxu0 0
      %770 = vmatmul.mubr.bf16.gmra.mrb[0].mxu0 %v563
      %v771 = vpop.f32.mrb[0].mxu0
      %v772 = vadd.f32 0.0, %v771
      %v773 = vpop.f32.mrb[0].mxu0
      %v774 = vpop.f32.mrb[0].mxu0
      %v775 = vadd.f32 0.0, %v774
      %v776 = vpop.f32.mrb[0].mxu0
      %777 = vmatprep.mubr.bf16.mxu0 0
      %778 = vmatmul.mubr.bf16.gmra.mrb[0].mxu0 %v566
      %v779 = vpop.f32.mrb[0].mxu0
      %v780 = vadd.f32 0.0, %v779
      %v781 = vpop.f32.mrb[0].mxu0
      %v782 = vpop.f32.mrb[0].mxu0
      %v783 = vadd.f32 0.0, %v782
      %v784 = vpop.f32.mrb[0].mxu0
      %785 = vmatprep.mubr.bf16.mxu0 0
      %786 = vmatmul.mubr.bf16.gmra.mrb[0].mxu0 %v569
      %v787 = vpop.f32.mrb[0].mxu0
      %v788 = vadd.f32 0.0, %v787
      %v789 = vpop.f32.mrb[0].mxu0
      %v790 = vpop.f32.mrb[0].mxu0
      %v791 = vadd.f32 0.0, %v790
      %v792 = vpop.f32.mrb[0].mxu0
      %793 = vmatprep.mubr.bf16.mxu0 0
      %794 = vmatmul.mubr.bf16.gmra.mrb[0].mxu0 %v572
      %v795 = vpop.f32.mrb[0].mxu0
      %v796 = vadd.f32 0.0, %v795
      %v797 = vpop.f32.mrb[0].mxu0
      %v798 = vpop.f32.mrb[0].mxu0
      %v799 = vadd.f32 0.0, %v798
      %v800 = vpop.f32.mrb[0].mxu0
      %801 = vmatprep.mubr.bf16.mxu0 0
      %802 = vmatmul.mubr.bf16.gmra.mrb[0].mxu0 %v575
      %v803 = vpop.f32.mrb[0].mxu0
      %v804 = vadd.f32 0.0, %v803
      %v805 = vpop.f32.mrb[0].mxu0
      %v806 = vpop.f32.mrb[0].mxu0
      %v807 = vadd.f32 0.0, %v806
      %v808 = vpop.f32.mrb[0].mxu0
      %809 = vmatprep.mubr.bf16.mxu0 0
      %810 = vmatmul.mubr.bf16.gmra.mrb[0].mxu0 %v578
      %v811 = vpop.f32.mrb[0].mxu0
      %v812 = vadd.f32 0.0, %v811
      %v813 = vpop.f32.mrb[0].mxu0
      %v814 = vpop.f32.mrb[0].mxu0
      %v815 = vadd.f32 0.0, %v814
      %v816 = vpop.f32.mrb[0].mxu0
      %817 = vmatprep.mubr.bf16.mxu0 0
      %818 = vmatmul.mubr.bf16.gmra.mrb[0].mxu0 %v581
      %v819 = vpop.f32.mrb[0].mxu0
      %v820 = vadd.f32 0.0, %v819
      %v821 = vpop.f32.mrb[0].mxu0
      %v822 = vpop.f32.mrb[0].mxu0
      %v823 = vadd.f32 0.0, %v822
      %v824 = vpop.f32.mrb[0].mxu0
      %825 = vmatprep.mubr.bf16.mxu0 0
      %826 = vmatmul.mubr.bf16.gmra.mrb[0].mxu0 %v584
      %v827 = vpop.f32.mrb[0].mxu0
      %v828 = vadd.f32 0.0, %v827
      %v829 = vpop.f32.mrb[0].mxu0
      %v830 = vpop.f32.mrb[0].mxu0
      %v831 = vadd.f32 0.0, %v830
      %v832 = vpop.f32.mrb[0].mxu0
      %833 = vmatprep.mubr.bf16.mxu0 0
      %834 = vmatmul.mubr.bf16.gmra.mrb[0].mxu0 %v587
      %v835 = vpop.f32.mrb[0].mxu0
      %v836 = vadd.f32 0.0, %v835
      %v837 = vpop.f32.mrb[0].mxu0
      %v838 = vpop.f32.mrb[0].mxu0
      %v839 = vadd.f32 0.0, %v838
      %v840 = vpop.f32.mrb[0].mxu0
      %841 = vmatprep.mubr.bf16.mxu0 0
      %842 = vmatmul.mubr.bf16.gmra.mrb[0].mxu0 %v590
      %v843 = vpop.f32.mrb[0].mxu0
      %v844 = vadd.f32 0.0, %v843
      %v845 = vpop.f32.mrb[0].mxu0
      %v846 = vpop.f32.mrb[0].mxu0
      %v847 = vadd.f32 0.0, %v846
      %v848 = vpop.f32.mrb[0].mxu0
      %849 = vdwg.mxu0
      %v850 = vpack.c.bf16 %v630, %v627
      %v851 = vpack.c.bf16 %v638, %v635
      %v852 = vpack.c.bf16 %v646, %v643
      %v853 = vpack.c.bf16 %v654, %v651
      %v854 = vpack.c.bf16 %v662, %v659
      %v855 = vpack.c.bf16 %v670, %v667
      %v856 = vpack.c.bf16 %v678, %v675
      %v857 = vpack.c.bf16 %v686, %v683
      %v858 = vpack.c.bf16 %v694, %v691
      %v859 = vpack.c.bf16 %v702, %v699
      %v860 = vpack.c.bf16 %v710, %v707
      %v861 = vpack.c.bf16 %v718, %v715
      %v862 = vpack.c.bf16 %v759, %v756
      %v863 = vpack.c.bf16 %v767, %v764
      %v864 = vpack.c.bf16 %v775, %v772
      %v865 = vpack.c.bf16 %v783, %v780
      %v866 = vpack.c.bf16 %v791, %v788
      %v867 = vpack.c.bf16 %v799, %v796
      %v868 = vpack.c.bf16 %v807, %v804
      %v869 = vpack.c.bf16 %v815, %v812
      %v870 = vpack.c.bf16 %v823, %v820
      %v871 = vpack.c.bf16 %v831, %v828
      %v872 = vpack.c.bf16 %v839, %v836
      %v873 = vpack.c.bf16 %v847, %v844
      %v878 = vunpack.c.l.b16 %v850
      %v879 = vunpack.c.h.b16 %v850
      %v880 = vunpack.c.l.b16 %v851
      %v881 = vunpack.c.h.b16 %v851
      %v882 = vunpack.c.l.b16 %v852
      %v883 = vunpack.c.h.b16 %v852
      %v884 = vunpack.c.l.b16 %v853
      %v885 = vunpack.c.h.b16 %v853
      %v886 = vpack.c.b16 %v878, %v878
      %v887 = vpack.c.b16 %v879, %v879
      %v888 = vpack.c.b16 %v880, %v880
      %v889 = vpack.c.b16 %v881, %v881
      %v890 = vpack.c.b16 %v882, %v882
      %v891 = vpack.c.b16 %v883, %v883
      %v892 = vpack.c.b16 %v884, %v884
      %v893 = vpack.c.b16 %v885, %v885
      %vm902 = vcmask 125952
      %903 = vst.msk [vmem:[%s252] sm:$0xf] %vm902, %v886
      %904 = vst.msk [vmem:[%s252 + $0x4] sm:$0xf] %vm902, %v887
      %905 = vst.msk [vmem:[%s252 + $0x8] sm:$0xf] %vm902, %v888
      %906 = vst.msk [vmem:[%s252 + $0xc] sm:$0xf] %vm902, %v889
      %907 = vst.msk [vmem:[%s252 + $0x10] sm:$0xf] %vm902, %v890
      %908 = vst.msk [vmem:[%s252 + $0x14] sm:$0xf] %vm902, %v891
      %909 = vst.msk [vmem:[%s252 + $0x18] sm:$0xf] %vm902, %v892
      %910 = vst.msk [vmem:[%s252 + $0x1c] sm:$0xf] %vm902, %v893
      %v915 = vunpack.c.l.b16 %v862
      %v916 = vunpack.c.h.b16 %v862
      %v917 = vunpack.c.l.b16 %v863
      %v918 = vunpack.c.h.b16 %v863
      %v919 = vunpack.c.l.b16 %v864
      %v920 = vunpack.c.h.b16 %v864
      %v921 = vunpack.c.l.b16 %v865
      %v922 = vunpack.c.h.b16 %v865
      %v923 = vpack.c.b16 %v915, %v915
      %v924 = vpack.c.b16 %v916, %v916
      %v925 = vpack.c.b16 %v917, %v917
      %v926 = vpack.c.b16 %v918, %v918
      %v927 = vpack.c.b16 %v919, %v919
      %v928 = vpack.c.b16 %v920, %v920
      %v929 = vpack.c.b16 %v921, %v921
      %v930 = vpack.c.b16 %v922, %v922
      %939 = vst.msk [vmem:[%s257] sm:$0xf] %vm902, %v923
      %940 = vst.msk [vmem:[%s257 + $0x4] sm:$0xf] %vm902, %v924
      %941 = vst.msk [vmem:[%s257 + $0x8] sm:$0xf] %vm902, %v925
      %942 = vst.msk [vmem:[%s257 + $0xc] sm:$0xf] %vm902, %v926
      %943 = vst.msk [vmem:[%s257 + $0x10] sm:$0xf] %vm902, %v927
      %944 = vst.msk [vmem:[%s257 + $0x14] sm:$0xf] %vm902, %v928
      %945 = vst.msk [vmem:[%s257 + $0x18] sm:$0xf] %vm902, %v929
      %946 = vst.msk [vmem:[%s257 + $0x1c] sm:$0xf] %vm902, %v930
      %v951 = vunpack.c.l.b16 %v854
      %v952 = vunpack.c.h.b16 %v854
      %v953 = vunpack.c.l.b16 %v855
      %v954 = vunpack.c.h.b16 %v855
      %v955 = vunpack.c.l.b16 %v856
      %v956 = vunpack.c.h.b16 %v856
      %v957 = vunpack.c.l.b16 %v857
      %v958 = vunpack.c.h.b16 %v857
      %v959 = vpack.c.b16 %v951, %v951
      %v960 = vpack.c.b16 %v952, %v952
      %v961 = vpack.c.b16 %v953, %v953
      %v962 = vpack.c.b16 %v954, %v954
      %v963 = vpack.c.b16 %v955, %v955
      %v964 = vpack.c.b16 %v956, %v956
      %v965 = vpack.c.b16 %v957, %v957
      %v966 = vpack.c.b16 %v958, %v958
      %s975 = scalar_lea.vmem %s252, 192
      %976 = vst.msk [vmem:[%s975] sm:$0xf] %vm902, %v959
      %977 = vst.msk [vmem:[%s975 + $0x4] sm:$0xf] %vm902, %v960
      %978 = vst.msk [vmem:[%s975 + $0x8] sm:$0xf] %vm902, %v961
      %979 = vst.msk [vmem:[%s975 + $0xc] sm:$0xf] %vm902, %v962
      %980 = vst.msk [vmem:[%s975 + $0x10] sm:$0xf] %vm902, %v963
      %981 = vst.msk [vmem:[%s975 + $0x14] sm:$0xf] %vm902, %v964
      %982 = vst.msk [vmem:[%s975 + $0x18] sm:$0xf] %vm902, %v965
      %983 = vst.msk [vmem:[%s975 + $0x1c] sm:$0xf] %vm902, %v966
      %v988 = vunpack.c.l.b16 %v866
      %v989 = vunpack.c.h.b16 %v866
      %v990 = vunpack.c.l.b16 %v867
      %v991 = vunpack.c.h.b16 %v867
      %v992 = vunpack.c.l.b16 %v868
      %v993 = vunpack.c.h.b16 %v868
      %v994 = vunpack.c.l.b16 %v869
      %v995 = vunpack.c.h.b16 %v869
      %v996 = vpack.c.b16 %v988, %v988
      %v997 = vpack.c.b16 %v989, %v989
      %v998 = vpack.c.b16 %v990, %v990
      %v999 = vpack.c.b16 %v991, %v991
      %v1000 = vpack.c.b16 %v992, %v992
      %v1001 = vpack.c.b16 %v993, %v993
      %v1002 = vpack.c.b16 %v994, %v994
      %v1003 = vpack.c.b16 %v995, %v995
      %s1012 = scalar_lea.vmem %s257, 192
      %1013 = vst.msk [vmem:[%s1012] sm:$0xf] %vm902, %v996
      %1014 = vst.msk [vmem:[%s1012 + $0x4] sm:$0xf] %vm902, %v997
      %1015 = vst.msk [vmem:[%s1012 + $0x8] sm:$0xf] %vm902, %v998
      %1016 = vst.msk [vmem:[%s1012 + $0xc] sm:$0xf] %vm902, %v999
      %1017 = vst.msk [vmem:[%s1012 + $0x10] sm:$0xf] %vm902, %v1000
      %1018 = vst.msk [vmem:[%s1012 + $0x14] sm:$0xf] %vm902, %v1001
      %1019 = vst.msk [vmem:[%s1012 + $0x18] sm:$0xf] %vm902, %v1002
      %1020 = vst.msk [vmem:[%s1012 + $0x1c] sm:$0xf] %vm902, %v1003
      %v1025 = vunpack.c.l.b16 %v858
      %v1026 = vunpack.c.h.b16 %v858
      %v1027 = vunpack.c.l.b16 %v859
      %v1028 = vunpack.c.h.b16 %v859
      %v1029 = vunpack.c.l.b16 %v860
      %v1030 = vunpack.c.h.b16 %v860
      %v1031 = vunpack.c.l.b16 %v861
      %v1032 = vunpack.c.h.b16 %v861
      %v1033 = vpack.c.b16 %v1025, %v1025
      %v1034 = vpack.c.b16 %v1026, %v1026
      %v1035 = vpack.c.b16 %v1027, %v1027
      %v1036 = vpack.c.b16 %v1028, %v1028
      %v1037 = vpack.c.b16 %v1029, %v1029
      %v1038 = vpack.c.b16 %v1030, %v1030
      %v1039 = vpack.c.b16 %v1031, %v1031
      %v1040 = vpack.c.b16 %v1032, %v1032
      %s1049 = scalar_lea.vmem %s252, 384
      %1050 = vst.msk [vmem:[%s1049] sm:$0xf] %vm902, %v1033
      %1051 = vst.msk [vmem:[%s1049 + $0x4] sm:$0xf] %vm902, %v1034
      %1052 = vst.msk [vmem:[%s1049 + $0x8] sm:$0xf] %vm902, %v1035
      %1053 = vst.msk [vmem:[%s1049 + $0xc] sm:$0xf] %vm902, %v1036
      %1054 = vst.msk [vmem:[%s1049 + $0x10] sm:$0xf] %vm902, %v1037
      %1055 = vst.msk [vmem:[%s1049 + $0x14] sm:$0xf] %vm902, %v1038
      %1056 = vst.msk [vmem:[%s1049 + $0x18] sm:$0xf] %vm902, %v1039
      %1057 = vst.msk [vmem:[%s1049 + $0x1c] sm:$0xf] %vm902, %v1040
      %v1062 = vunpack.c.l.b16 %v870
      %v1063 = vunpack.c.h.b16 %v870
      %v1064 = vunpack.c.l.b16 %v871
      %v1065 = vunpack.c.h.b16 %v871
      %v1066 = vunpack.c.l.b16 %v872
      %v1067 = vunpack.c.h.b16 %v872
      %v1068 = vunpack.c.l.b16 %v873
      %v1069 = vunpack.c.h.b16 %v873
      %v1070 = vpack.c.b16 %v1062, %v1062
      %v1071 = vpack.c.b16 %v1063, %v1063
      %v1072 = vpack.c.b16 %v1064, %v1064
      %v1073 = vpack.c.b16 %v1065, %v1065
      %v1074 = vpack.c.b16 %v1066, %v1066
      %v1075 = vpack.c.b16 %v1067, %v1067
      %v1076 = vpack.c.b16 %v1068, %v1068
      %v1077 = vpack.c.b16 %v1069, %v1069
      %s1086 = scalar_lea.vmem %s257, 384
      %1087 = vst.msk [vmem:[%s1086] sm:$0xf] %vm902, %v1070
      %1088 = vst.msk [vmem:[%s1086 + $0x4] sm:$0xf] %vm902, %v1071
      %1089 = vst.msk [vmem:[%s1086 + $0x8] sm:$0xf] %vm902, %v1072
      %1090 = vst.msk [vmem:[%s1086 + $0xc] sm:$0xf] %vm902, %v1073
      %1091 = vst.msk [vmem:[%s1086 + $0x10] sm:$0xf] %vm902, %v1074
      %1092 = vst.msk [vmem:[%s1086 + $0x14] sm:$0xf] %vm902, %v1075
      %1093 = vst.msk [vmem:[%s1086 + $0x18] sm:$0xf] %vm902, %v1076
      %1094 = vst.msk [vmem:[%s1086 + $0x1c] sm:$0xf] %vm902, %v1077
      %1095 = vrot.lane.b32.xlu0 %v886, 112
      %v1096 = vpop.permute.xlu0 %1095
      %1097 = vrot.lane.b32.xlu0 %v887, 112
      %v1098 = vpop.permute.xlu0 %1097
      %1099 = vrot.lane.b32.xlu0 %v888, 112
      %v1100 = vpop.permute.xlu0 %1099
      %1101 = vrot.lane.b32.xlu0 %v889, 112
      %v1102 = vpop.permute.xlu0 %1101
      %1103 = vrot.lane.b32.xlu0 %v890, 112
      %v1104 = vpop.permute.xlu0 %1103
      %1105 = vrot.lane.b32.xlu0 %v891, 112
      %v1106 = vpop.permute.xlu0 %1105
      %1107 = vrot.lane.b32.xlu0 %v892, 112
      %v1108 = vpop.permute.xlu0 %1107
      %1109 = vrot.lane.b32.xlu0 %v893, 112
      %v1110 = vpop.permute.xlu0 %1109
      %s1119 = scalar_lea.vmem %s252, 32
      %1120 = vst.msk [vmem:[%s1119] sm:$0xf] %vm902, %v1096
      %1121 = vst.msk [vmem:[%s1119 + $0x4] sm:$0xf] %vm902, %v1098
      %1122 = vst.msk [vmem:[%s1119 + $0x8] sm:$0xf] %vm902, %v1100
      %1123 = vst.msk [vmem:[%s1119 + $0xc] sm:$0xf] %vm902, %v1102
      %1124 = vst.msk [vmem:[%s1119 + $0x10] sm:$0xf] %vm902, %v1104
      %1125 = vst.msk [vmem:[%s1119 + $0x14] sm:$0xf] %vm902, %v1106
      %1126 = vst.msk [vmem:[%s1119 + $0x18] sm:$0xf] %vm902, %v1108
      %1127 = vst.msk [vmem:[%s1119 + $0x1c] sm:$0xf] %vm902, %v1110
      %1128 = vrot.lane.b32.xlu0 %v923, 112
      %v1129 = vpop.permute.xlu0 %1128
      %1130 = vrot.lane.b32.xlu0 %v924, 112
      %v1131 = vpop.permute.xlu0 %1130
      %1132 = vrot.lane.b32.xlu0 %v925, 112
      %v1133 = vpop.permute.xlu0 %1132
      %1134 = vrot.lane.b32.xlu0 %v926, 112
      %v1135 = vpop.permute.xlu0 %1134
      %1136 = vrot.lane.b32.xlu0 %v927, 112
      %v1137 = vpop.permute.xlu0 %1136
      %1138 = vrot.lane.b32.xlu0 %v928, 112
      %v1139 = vpop.permute.xlu0 %1138
      %1140 = vrot.lane.b32.xlu0 %v929, 112
      %v1141 = vpop.permute.xlu0 %1140
      %1142 = vrot.lane.b32.xlu0 %v930, 112
      %v1143 = vpop.permute.xlu0 %1142
      %s1152 = scalar_lea.vmem %s257, 32
      %1153 = vst.msk [vmem:[%s1152] sm:$0xf] %vm902, %v1129
      %1154 = vst.msk [vmem:[%s1152 + $0x4] sm:$0xf] %vm902, %v1131
      %1155 = vst.msk [vmem:[%s1152 + $0x8] sm:$0xf] %vm902, %v1133
      %1156 = vst.msk [vmem:[%s1152 + $0xc] sm:$0xf] %vm902, %v1135
      %1157 = vst.msk [vmem:[%s1152 + $0x10] sm:$0xf] %vm902, %v1137
      %1158 = vst.msk [vmem:[%s1152 + $0x14] sm:$0xf] %vm902, %v1139
      %1159 = vst.msk [vmem:[%s1152 + $0x18] sm:$0xf] %vm902, %v1141
      %1160 = vst.msk [vmem:[%s1152 + $0x1c] sm:$0xf] %vm902, %v1143
      %1161 = vrot.lane.b32.xlu0 %v959, 112
      %v1162 = vpop.permute.xlu0 %1161
      %1163 = vrot.lane.b32.xlu0 %v960, 112
      %v1164 = vpop.permute.xlu0 %1163
      %1165 = vrot.lane.b32.xlu0 %v961, 112
      %v1166 = vpop.permute.xlu0 %1165
      %1167 = vrot.lane.b32.xlu0 %v962, 112
      %v1168 = vpop.permute.xlu0 %1167
      %1169 = vrot.lane.b32.xlu0 %v963, 112
      %v1170 = vpop.permute.xlu0 %1169
      %1171 = vrot.lane.b32.xlu0 %v964, 112
      %v1172 = vpop.permute.xlu0 %1171
      %1173 = vrot.lane.b32.xlu0 %v965, 112
      %v1174 = vpop.permute.xlu0 %1173
      %1175 = vrot.lane.b32.xlu0 %v966, 112
      %v1176 = vpop.permute.xlu0 %1175
      %s1185 = scalar_lea.vmem %s252, 224
      %1186 = vst.msk [vmem:[%s1185] sm:$0xf] %vm902, %v1162
      %1187 = vst.msk [vmem:[%s1185 + $0x4] sm:$0xf] %vm902, %v1164
      %1188 = vst.msk [vmem:[%s1185 + $0x8] sm:$0xf] %vm902, %v1166
      %1189 = vst.msk [vmem:[%s1185 + $0xc] sm:$0xf] %vm902, %v1168
      %1190 = vst.msk [vmem:[%s1185 + $0x10] sm:$0xf] %vm902, %v1170
      %1191 = vst.msk [vmem:[%s1185 + $0x14] sm:$0xf] %vm902, %v1172
      %1192 = vst.msk [vmem:[%s1185 + $0x18] sm:$0xf] %vm902, %v1174
      %1193 = vst.msk [vmem:[%s1185 + $0x1c] sm:$0xf] %vm902, %v1176
      %1194 = vrot.lane.b32.xlu0 %v996, 112
      %v1195 = vpop.permute.xlu0 %1194
      %1196 = vrot.lane.b32.xlu0 %v997, 112
      %v1197 = vpop.permute.xlu0 %1196
      %1198 = vrot.lane.b32.xlu0 %v998, 112
      %v1199 = vpop.permute.xlu0 %1198
      %1200 = vrot.lane.b32.xlu0 %v999, 112
      %v1201 = vpop.permute.xlu0 %1200
      %1202 = vrot.lane.b32.xlu0 %v1000, 112
      %v1203 = vpop.permute.xlu0 %1202
      %1204 = vrot.lane.b32.xlu0 %v1001, 112
      %v1205 = vpop.permute.xlu0 %1204
      %1206 = vrot.lane.b32.xlu0 %v1002, 112
      %v1207 = vpop.permute.xlu0 %1206
      %1208 = vrot.lane.b32.xlu0 %v1003, 112
      %v1209 = vpop.permute.xlu0 %1208
      %s1218 = scalar_lea.vmem %s257, 224
      %1219 = vst.msk [vmem:[%s1218] sm:$0xf] %vm902, %v1195
      %1220 = vst.msk [vmem:[%s1218 + $0x4] sm:$0xf] %vm902, %v1197
      %1221 = vst.msk [vmem:[%s1218 + $0x8] sm:$0xf] %vm902, %v1199
      %1222 = vst.msk [vmem:[%s1218 + $0xc] sm:$0xf] %vm902, %v1201
      %1223 = vst.msk [vmem:[%s1218 + $0x10] sm:$0xf] %vm902, %v1203
      %1224 = vst.msk [vmem:[%s1218 + $0x14] sm:$0xf] %vm902, %v1205
      %1225 = vst.msk [vmem:[%s1218 + $0x18] sm:$0xf] %vm902, %v1207
      %1226 = vst.msk [vmem:[%s1218 + $0x1c] sm:$0xf] %vm902, %v1209
      %1227 = vrot.lane.b32.xlu0 %v1033, 112
      %v1228 = vpop.permute.xlu0 %1227
      %1229 = vrot.lane.b32.xlu0 %v1034, 112
      %v1230 = vpop.permute.xlu0 %1229
      %1231 = vrot.lane.b32.xlu0 %v1035, 112
      %v1232 = vpop.permute.xlu0 %1231
      %1233 = vrot.lane.b32.xlu0 %v1036, 112
      %v1234 = vpop.permute.xlu0 %1233
      %1235 = vrot.lane.b32.xlu0 %v1037, 112
      %v1236 = vpop.permute.xlu0 %1235
      %1237 = vrot.lane.b32.xlu0 %v1038, 112
      %v1238 = vpop.permute.xlu0 %1237
      %1239 = vrot.lane.b32.xlu0 %v1039, 112
      %v1240 = vpop.permute.xlu0 %1239
      %1241 = vrot.lane.b32.xlu0 %v1040, 112
      %v1242 = vpop.permute.xlu0 %1241
      %s1251 = scalar_lea.vmem %s252, 416
      %1252 = vst.msk [vmem:[%s1251] sm:$0xf] %vm902, %v1228
      %1253 = vst.msk [vmem:[%s1251 + $0x4] sm:$0xf] %vm902, %v1230
      %1254 = vst.msk [vmem:[%s1251 + $0x8] sm:$0xf] %vm902, %v1232
      %1255 = vst.msk [vmem:[%s1251 + $0xc] sm:$0xf] %vm902, %v1234
      %1256 = vst.msk [vmem:[%s1251 + $0x10] sm:$0xf] %vm902, %v1236
      %1257 = vst.msk [vmem:[%s1251 + $0x14] sm:$0xf] %vm902, %v1238
      %1258 = vst.msk [vmem:[%s1251 + $0x18] sm:$0xf] %vm902, %v1240
      %1259 = vst.msk [vmem:[%s1251 + $0x1c] sm:$0xf] %vm902, %v1242
      %1260 = vrot.lane.b32.xlu0 %v1070, 112
      %v1261 = vpop.permute.xlu0 %1260
      %1262 = vrot.lane.b32.xlu0 %v1071, 112
      %v1263 = vpop.permute.xlu0 %1262
      %1264 = vrot.lane.b32.xlu0 %v1072, 112
      %v1265 = vpop.permute.xlu0 %1264
      %1266 = vrot.lane.b32.xlu0 %v1073, 112
      %v1267 = vpop.permute.xlu0 %1266
      %1268 = vrot.lane.b32.xlu0 %v1074, 112
      %v1269 = vpop.permute.xlu0 %1268
      %1270 = vrot.lane.b32.xlu0 %v1075, 112
      %v1271 = vpop.permute.xlu0 %1270
      %1272 = vrot.lane.b32.xlu0 %v1076, 112
      %v1273 = vpop.permute.xlu0 %1272
      %1274 = vrot.lane.b32.xlu0 %v1077, 112
      %v1275 = vpop.permute.xlu0 %1274
      %s1284 = scalar_lea.vmem %s257, 416
      %1285 = vst.msk [vmem:[%s1284] sm:$0xf] %vm902, %v1261
      %1286 = vst.msk [vmem:[%s1284 + $0x4] sm:$0xf] %vm902, %v1263
      %1287 = vst.msk [vmem:[%s1284 + $0x8] sm:$0xf] %vm902, %v1265
      %1288 = vst.msk [vmem:[%s1284 + $0xc] sm:$0xf] %vm902, %v1267
      %1289 = vst.msk [vmem:[%s1284 + $0x10] sm:$0xf] %vm902, %v1269
      %1290 = vst.msk [vmem:[%s1284 + $0x14] sm:$0xf] %vm902, %v1271
      %1291 = vst.msk [vmem:[%s1284 + $0x18] sm:$0xf] %vm902, %v1273
      %1292 = vst.msk [vmem:[%s1284 + $0x1c] sm:$0xf] %vm902, %v1275
      %1293 = vrot.lane.b32.xlu0 %v886, 96
      %v1294 = vpop.permute.xlu0 %1293
      %1295 = vrot.lane.b32.xlu0 %v887, 96
      %v1296 = vpop.permute.xlu0 %1295
      %1297 = vrot.lane.b32.xlu0 %v888, 96
      %v1298 = vpop.permute.xlu0 %1297
      %1299 = vrot.lane.b32.xlu0 %v889, 96
      %v1300 = vpop.permute.xlu0 %1299
      %1301 = vrot.lane.b32.xlu0 %v890, 96
      %v1302 = vpop.permute.xlu0 %1301
      %1303 = vrot.lane.b32.xlu0 %v891, 96
      %v1304 = vpop.permute.xlu0 %1303
      %1305 = vrot.lane.b32.xlu0 %v892, 96
      %v1306 = vpop.permute.xlu0 %1305
      %1307 = vrot.lane.b32.xlu0 %v893, 96
      %v1308 = vpop.permute.xlu0 %1307
      %s1317 = scalar_lea.vmem %s252, 64
      %1318 = vst.msk [vmem:[%s1317] sm:$0xf] %vm902, %v1294
      %1319 = vst.msk [vmem:[%s1317 + $0x4] sm:$0xf] %vm902, %v1296
      %1320 = vst.msk [vmem:[%s1317 + $0x8] sm:$0xf] %vm902, %v1298
      %1321 = vst.msk [vmem:[%s1317 + $0xc] sm:$0xf] %vm902, %v1300
      %1322 = vst.msk [vmem:[%s1317 + $0x10] sm:$0xf] %vm902, %v1302
      %1323 = vst.msk [vmem:[%s1317 + $0x14] sm:$0xf] %vm902, %v1304
      %1324 = vst.msk [vmem:[%s1317 + $0x18] sm:$0xf] %vm902, %v1306
      %1325 = vst.msk [vmem:[%s1317 + $0x1c] sm:$0xf] %vm902, %v1308
      %1326 = vrot.lane.b32.xlu0 %v923, 96
      %v1327 = vpop.permute.xlu0 %1326
      %1328 = vrot.lane.b32.xlu0 %v924, 96
      %v1329 = vpop.permute.xlu0 %1328
      %1330 = vrot.lane.b32.xlu0 %v925, 96
      %v1331 = vpop.permute.xlu0 %1330
      %1332 = vrot.lane.b32.xlu0 %v926, 96
      %v1333 = vpop.permute.xlu0 %1332
      %1334 = vrot.lane.b32.xlu0 %v927, 96
      %v1335 = vpop.permute.xlu0 %1334
      %1336 = vrot.lane.b32.xlu0 %v928, 96
      %v1337 = vpop.permute.xlu0 %1336
      %1338 = vrot.lane.b32.xlu0 %v929, 96
      %v1339 = vpop.permute.xlu0 %1338
      %1340 = vrot.lane.b32.xlu0 %v930, 96
      %v1341 = vpop.permute.xlu0 %1340
      %s1350 = scalar_lea.vmem %s257, 64
      %1351 = vst.msk [vmem:[%s1350] sm:$0xf] %vm902, %v1327
      %1352 = vst.msk [vmem:[%s1350 + $0x4] sm:$0xf] %vm902, %v1329
      %1353 = vst.msk [vmem:[%s1350 + $0x8] sm:$0xf] %vm902, %v1331
      %1354 = vst.msk [vmem:[%s1350 + $0xc] sm:$0xf] %vm902, %v1333
      %1355 = vst.msk [vmem:[%s1350 + $0x10] sm:$0xf] %vm902, %v1335
      %1356 = vst.msk [vmem:[%s1350 + $0x14] sm:$0xf] %vm902, %v1337
      %1357 = vst.msk [vmem:[%s1350 + $0x18] sm:$0xf] %vm902, %v1339
      %1358 = vst.msk [vmem:[%s1350 + $0x1c] sm:$0xf] %vm902, %v1341
      %1359 = vrot.lane.b32.xlu0 %v959, 96
      %v1360 = vpop.permute.xlu0 %1359
      %1361 = vrot.lane.b32.xlu0 %v960, 96
      %v1362 = vpop.permute.xlu0 %1361
      %1363 = vrot.lane.b32.xlu0 %v961, 96
      %v1364 = vpop.permute.xlu0 %1363
      %1365 = vrot.lane.b32.xlu0 %v962, 96
      %v1366 = vpop.permute.xlu0 %1365
      %1367 = vrot.lane.b32.xlu0 %v963, 96
      %v1368 = vpop.permute.xlu0 %1367
      %1369 = vrot.lane.b32.xlu0 %v964, 96
      %v1370 = vpop.permute.xlu0 %1369
      %1371 = vrot.lane.b32.xlu0 %v965, 96
      %v1372 = vpop.permute.xlu0 %1371
      %1373 = vrot.lane.b32.xlu0 %v966, 96
      %v1374 = vpop.permute.xlu0 %1373
      %s1383 = scalar_lea.vmem %s252, 256
      %1384 = vst.msk [vmem:[%s1383] sm:$0xf] %vm902, %v1360
      %1385 = vst.msk [vmem:[%s1383 + $0x4] sm:$0xf] %vm902, %v1362
      %1386 = vst.msk [vmem:[%s1383 + $0x8] sm:$0xf] %vm902, %v1364
      %1387 = vst.msk [vmem:[%s1383 + $0xc] sm:$0xf] %vm902, %v1366
      %1388 = vst.msk [vmem:[%s1383 + $0x10] sm:$0xf] %vm902, %v1368
      %1389 = vst.msk [vmem:[%s1383 + $0x14] sm:$0xf] %vm902, %v1370
      %1390 = vst.msk [vmem:[%s1383 + $0x18] sm:$0xf] %vm902, %v1372
      %1391 = vst.msk [vmem:[%s1383 + $0x1c] sm:$0xf] %vm902, %v1374
      %1392 = vrot.lane.b32.xlu0 %v996, 96
      %v1393 = vpop.permute.xlu0 %1392
      %1394 = vrot.lane.b32.xlu0 %v997, 96
      %v1395 = vpop.permute.xlu0 %1394
      %1396 = vrot.lane.b32.xlu0 %v998, 96
      %v1397 = vpop.permute.xlu0 %1396
      %1398 = vrot.lane.b32.xlu0 %v999, 96
      %v1399 = vpop.permute.xlu0 %1398
      %1400 = vrot.lane.b32.xlu0 %v1000, 96
      %v1401 = vpop.permute.xlu0 %1400
      %1402 = vrot.lane.b32.xlu0 %v1001, 96
      %v1403 = vpop.permute.xlu0 %1402
      %1404 = vrot.lane.b32.xlu0 %v1002, 96
      %v1405 = vpop.permute.xlu0 %1404
      %1406 = vrot.lane.b32.xlu0 %v1003, 96
      %v1407 = vpop.permute.xlu0 %1406
      %s1416 = scalar_lea.vmem %s257, 256
      %1417 = vst.msk [vmem:[%s1416] sm:$0xf] %vm902, %v1393
      %1418 = vst.msk [vmem:[%s1416 + $0x4] sm:$0xf] %vm902, %v1395
      %1419 = vst.msk [vmem:[%s1416 + $0x8] sm:$0xf] %vm902, %v1397
      %1420 = vst.msk [vmem:[%s1416 + $0xc] sm:$0xf] %vm902, %v1399
      %1421 = vst.msk [vmem:[%s1416 + $0x10] sm:$0xf] %vm902, %v1401
      %1422 = vst.msk [vmem:[%s1416 + $0x14] sm:$0xf] %vm902, %v1403
      %1423 = vst.msk [vmem:[%s1416 + $0x18] sm:$0xf] %vm902, %v1405
      %1424 = vst.msk [vmem:[%s1416 + $0x1c] sm:$0xf] %vm902, %v1407
      %1425 = vrot.lane.b32.xlu0 %v1033, 96
      %v1426 = vpop.permute.xlu0 %1425
      %1427 = vrot.lane.b32.xlu0 %v1034, 96
      %v1428 = vpop.permute.xlu0 %1427
      %1429 = vrot.lane.b32.xlu0 %v1035, 96
      %v1430 = vpop.permute.xlu0 %1429
      %1431 = vrot.lane.b32.xlu0 %v1036, 96
      %v1432 = vpop.permute.xlu0 %1431
      %1433 = vrot.lane.b32.xlu0 %v1037, 96
      %v1434 = vpop.permute.xlu0 %1433
      %1435 = vrot.lane.b32.xlu0 %v1038, 96
      %v1436 = vpop.permute.xlu0 %1435
      %1437 = vrot.lane.b32.xlu0 %v1039, 96
      %v1438 = vpop.permute.xlu0 %1437
      %1439 = vrot.lane.b32.xlu0 %v1040, 96
      %v1440 = vpop.permute.xlu0 %1439
      %s1449 = scalar_lea.vmem %s252, 448
      %1450 = vst.msk [vmem:[%s1449] sm:$0xf] %vm902, %v1426
      %1451 = vst.msk [vmem:[%s1449 + $0x4] sm:$0xf] %vm902, %v1428
      %1452 = vst.msk [vmem:[%s1449 + $0x8] sm:$0xf] %vm902, %v1430
      %1453 = vst.msk [vmem:[%s1449 + $0xc] sm:$0xf] %vm902, %v1432
      %1454 = vst.msk [vmem:[%s1449 + $0x10] sm:$0xf] %vm902, %v1434
      %1455 = vst.msk [vmem:[%s1449 + $0x14] sm:$0xf] %vm902, %v1436
      %1456 = vst.msk [vmem:[%s1449 + $0x18] sm:$0xf] %vm902, %v1438
      %1457 = vst.msk [vmem:[%s1449 + $0x1c] sm:$0xf] %vm902, %v1440
      %1458 = vrot.lane.b32.xlu0 %v1070, 96
      %v1459 = vpop.permute.xlu0 %1458
      %1460 = vrot.lane.b32.xlu0 %v1071, 96
      %v1461 = vpop.permute.xlu0 %1460
      %1462 = vrot.lane.b32.xlu0 %v1072, 96
      %v1463 = vpop.permute.xlu0 %1462
      %1464 = vrot.lane.b32.xlu0 %v1073, 96
      %v1465 = vpop.permute.xlu0 %1464
      %1466 = vrot.lane.b32.xlu0 %v1074, 96
      %v1467 = vpop.permute.xlu0 %1466
      %1468 = vrot.lane.b32.xlu0 %v1075, 96
      %v1469 = vpop.permute.xlu0 %1468
      %1470 = vrot.lane.b32.xlu0 %v1076, 96
      %v1471 = vpop.permute.xlu0 %1470
      %1472 = vrot.lane.b32.xlu0 %v1077, 96
      %v1473 = vpop.permute.xlu0 %1472
      %s1482 = scalar_lea.vmem %s257, 448
      %1483 = vst.msk [vmem:[%s1482] sm:$0xf] %vm902, %v1459
      %1484 = vst.msk [vmem:[%s1482 + $0x4] sm:$0xf] %vm902, %v1461
      %1485 = vst.msk [vmem:[%s1482 + $0x8] sm:$0xf] %vm902, %v1463
      %1486 = vst.msk [vmem:[%s1482 + $0xc] sm:$0xf] %vm902, %v1465
      %1487 = vst.msk [vmem:[%s1482 + $0x10] sm:$0xf] %vm902, %v1467
      %1488 = vst.msk [vmem:[%s1482 + $0x14] sm:$0xf] %vm902, %v1469
      %1489 = vst.msk [vmem:[%s1482 + $0x18] sm:$0xf] %vm902, %v1471
      %1490 = vst.msk [vmem:[%s1482 + $0x1c] sm:$0xf] %vm902, %v1473
      %1491 = vrot.lane.b32.xlu0 %v886, 80
      %v1492 = vpop.permute.xlu0 %1491
      %1493 = vrot.lane.b32.xlu0 %v887, 80
      %v1494 = vpop.permute.xlu0 %1493
      %1495 = vrot.lane.b32.xlu0 %v888, 80
      %v1496 = vpop.permute.xlu0 %1495
      %1497 = vrot.lane.b32.xlu0 %v889, 80
      %v1498 = vpop.permute.xlu0 %1497
      %1499 = vrot.lane.b32.xlu0 %v890, 80
      %v1500 = vpop.permute.xlu0 %1499
      %1501 = vrot.lane.b32.xlu0 %v891, 80
      %v1502 = vpop.permute.xlu0 %1501
      %1503 = vrot.lane.b32.xlu0 %v892, 80
      %v1504 = vpop.permute.xlu0 %1503
      %1505 = vrot.lane.b32.xlu0 %v893, 80
      %v1506 = vpop.permute.xlu0 %1505
      %s1515 = scalar_lea.vmem %s252, 96
      %1516 = vst.msk [vmem:[%s1515] sm:$0xf] %vm902, %v1492
      %1517 = vst.msk [vmem:[%s1515 + $0x4] sm:$0xf] %vm902, %v1494
      %1518 = vst.msk [vmem:[%s1515 + $0x8] sm:$0xf] %vm902, %v1496
      %1519 = vst.msk [vmem:[%s1515 + $0xc] sm:$0xf] %vm902, %v1498
      %1520 = vst.msk [vmem:[%s1515 + $0x10] sm:$0xf] %vm902, %v1500
      %1521 = vst.msk [vmem:[%s1515 + $0x14] sm:$0xf] %vm902, %v1502
      %1522 = vst.msk [vmem:[%s1515 + $0x18] sm:$0xf] %vm902, %v1504
      %1523 = vst.msk [vmem:[%s1515 + $0x1c] sm:$0xf] %vm902, %v1506
      %1524 = vrot.lane.b32.xlu0 %v923, 80
      %v1525 = vpop.permute.xlu0 %1524
      %1526 = vrot.lane.b32.xlu0 %v924, 80
      %v1527 = vpop.permute.xlu0 %1526
      %1528 = vrot.lane.b32.xlu0 %v925, 80
      %v1529 = vpop.permute.xlu0 %1528
      %1530 = vrot.lane.b32.xlu0 %v926, 80
      %v1531 = vpop.permute.xlu0 %1530
      %1532 = vrot.lane.b32.xlu0 %v927, 80
      %v1533 = vpop.permute.xlu0 %1532
      %1534 = vrot.lane.b32.xlu0 %v928, 80
      %v1535 = vpop.permute.xlu0 %1534
      %1536 = vrot.lane.b32.xlu0 %v929, 80
      %v1537 = vpop.permute.xlu0 %1536
      %1538 = vrot.lane.b32.xlu0 %v930, 80
      %v1539 = vpop.permute.xlu0 %1538
      %s1548 = scalar_lea.vmem %s257, 96
      %1549 = vst.msk [vmem:[%s1548] sm:$0xf] %vm902, %v1525
      %1550 = vst.msk [vmem:[%s1548 + $0x4] sm:$0xf] %vm902, %v1527
      %1551 = vst.msk [vmem:[%s1548 + $0x8] sm:$0xf] %vm902, %v1529
      %1552 = vst.msk [vmem:[%s1548 + $0xc] sm:$0xf] %vm902, %v1531
      %1553 = vst.msk [vmem:[%s1548 + $0x10] sm:$0xf] %vm902, %v1533
      %1554 = vst.msk [vmem:[%s1548 + $0x14] sm:$0xf] %vm902, %v1535
      %1555 = vst.msk [vmem:[%s1548 + $0x18] sm:$0xf] %vm902, %v1537
      %1556 = vst.msk [vmem:[%s1548 + $0x1c] sm:$0xf] %vm902, %v1539
      %1557 = vrot.lane.b32.xlu0 %v959, 80
      %v1558 = vpop.permute.xlu0 %1557
      %1559 = vrot.lane.b32.xlu0 %v960, 80
      %v1560 = vpop.permute.xlu0 %1559
      %1561 = vrot.lane.b32.xlu0 %v961, 80
      %v1562 = vpop.permute.xlu0 %1561
      %1563 = vrot.lane.b32.xlu0 %v962, 80
      %v1564 = vpop.permute.xlu0 %1563
      %1565 = vrot.lane.b32.xlu0 %v963, 80
      %v1566 = vpop.permute.xlu0 %1565
      %1567 = vrot.lane.b32.xlu0 %v964, 80
      %v1568 = vpop.permute.xlu0 %1567
      %1569 = vrot.lane.b32.xlu0 %v965, 80
      %v1570 = vpop.permute.xlu0 %1569
      %1571 = vrot.lane.b32.xlu0 %v966, 80
      %v1572 = vpop.permute.xlu0 %1571
      %s1581 = scalar_lea.vmem %s252, 288
      %1582 = vst.msk [vmem:[%s1581] sm:$0xf] %vm902, %v1558
      %1583 = vst.msk [vmem:[%s1581 + $0x4] sm:$0xf] %vm902, %v1560
      %1584 = vst.msk [vmem:[%s1581 + $0x8] sm:$0xf] %vm902, %v1562
      %1585 = vst.msk [vmem:[%s1581 + $0xc] sm:$0xf] %vm902, %v1564
      %1586 = vst.msk [vmem:[%s1581 + $0x10] sm:$0xf] %vm902, %v1566
      %1587 = vst.msk [vmem:[%s1581 + $0x14] sm:$0xf] %vm902, %v1568
      %1588 = vst.msk [vmem:[%s1581 + $0x18] sm:$0xf] %vm902, %v1570
      %1589 = vst.msk [vmem:[%s1581 + $0x1c] sm:$0xf] %vm902, %v1572
      %1590 = vrot.lane.b32.xlu0 %v996, 80
      %v1591 = vpop.permute.xlu0 %1590
      %1592 = vrot.lane.b32.xlu0 %v997, 80
      %v1593 = vpop.permute.xlu0 %1592
      %1594 = vrot.lane.b32.xlu0 %v998, 80
      %v1595 = vpop.permute.xlu0 %1594
      %1596 = vrot.lane.b32.xlu0 %v999, 80
      %v1597 = vpop.permute.xlu0 %1596
      %1598 = vrot.lane.b32.xlu0 %v1000, 80
      %v1599 = vpop.permute.xlu0 %1598
      %1600 = vrot.lane.b32.xlu0 %v1001, 80
      %v1601 = vpop.permute.xlu0 %1600
      %1602 = vrot.lane.b32.xlu0 %v1002, 80
      %v1603 = vpop.permute.xlu0 %1602
      %1604 = vrot.lane.b32.xlu0 %v1003, 80
      %v1605 = vpop.permute.xlu0 %1604
      %s1614 = scalar_lea.vmem %s257, 288
      %1615 = vst.msk [vmem:[%s1614] sm:$0xf] %vm902, %v1591
      %1616 = vst.msk [vmem:[%s1614 + $0x4] sm:$0xf] %vm902, %v1593
      %1617 = vst.msk [vmem:[%s1614 + $0x8] sm:$0xf] %vm902, %v1595
      %1618 = vst.msk [vmem:[%s1614 + $0xc] sm:$0xf] %vm902, %v1597
      %1619 = vst.msk [vmem:[%s1614 + $0x10] sm:$0xf] %vm902, %v1599
      %1620 = vst.msk [vmem:[%s1614 + $0x14] sm:$0xf] %vm902, %v1601
      %1621 = vst.msk [vmem:[%s1614 + $0x18] sm:$0xf] %vm902, %v1603
      %1622 = vst.msk [vmem:[%s1614 + $0x1c] sm:$0xf] %vm902, %v1605
      %1623 = vrot.lane.b32.xlu0 %v1033, 80
      %v1624 = vpop.permute.xlu0 %1623
      %1625 = vrot.lane.b32.xlu0 %v1034, 80
      %v1626 = vpop.permute.xlu0 %1625
      %1627 = vrot.lane.b32.xlu0 %v1035, 80
      %v1628 = vpop.permute.xlu0 %1627
      %1629 = vrot.lane.b32.xlu0 %v1036, 80
      %v1630 = vpop.permute.xlu0 %1629
      %1631 = vrot.lane.b32.xlu0 %v1037, 80
      %v1632 = vpop.permute.xlu0 %1631
      %1633 = vrot.lane.b32.xlu0 %v1038, 80
      %v1634 = vpop.permute.xlu0 %1633
      %1635 = vrot.lane.b32.xlu0 %v1039, 80
      %v1636 = vpop.permute.xlu0 %1635
      %1637 = vrot.lane.b32.xlu0 %v1040, 80
      %v1638 = vpop.permute.xlu0 %1637
      %s1647 = scalar_lea.vmem %s252, 480
      %1648 = vst.msk [vmem:[%s1647] sm:$0xf] %vm902, %v1624
      %1649 = vst.msk [vmem:[%s1647 + $0x4] sm:$0xf] %vm902, %v1626
      %1650 = vst.msk [vmem:[%s1647 + $0x8] sm:$0xf] %vm902, %v1628
      %1651 = vst.msk [vmem:[%s1647 + $0xc] sm:$0xf] %vm902, %v1630
      %1652 = vst.msk [vmem:[%s1647 + $0x10] sm:$0xf] %vm902, %v1632
      %1653 = vst.msk [vmem:[%s1647 + $0x14] sm:$0xf] %vm902, %v1634
      %1654 = vst.msk [vmem:[%s1647 + $0x18] sm:$0xf] %vm902, %v1636
      %1655 = vst.msk [vmem:[%s1647 + $0x1c] sm:$0xf] %vm902, %v1638
      %1656 = vrot.lane.b32.xlu0 %v1070, 80
      %v1657 = vpop.permute.xlu0 %1656
      %1658 = vrot.lane.b32.xlu0 %v1071, 80
      %v1659 = vpop.permute.xlu0 %1658
      %1660 = vrot.lane.b32.xlu0 %v1072, 80
      %v1661 = vpop.permute.xlu0 %1660
      %1662 = vrot.lane.b32.xlu0 %v1073, 80
      %v1663 = vpop.permute.xlu0 %1662
      %1664 = vrot.lane.b32.xlu0 %v1074, 80
      %v1665 = vpop.permute.xlu0 %1664
      %1666 = vrot.lane.b32.xlu0 %v1075, 80
      %v1667 = vpop.permute.xlu0 %1666
      %1668 = vrot.lane.b32.xlu0 %v1076, 80
      %v1669 = vpop.permute.xlu0 %1668
      %1670 = vrot.lane.b32.xlu0 %v1077, 80
      %v1671 = vpop.permute.xlu0 %1670
      %s1680 = scalar_lea.vmem %s257, 480
      %1681 = vst.msk [vmem:[%s1680] sm:$0xf] %vm902, %v1657
      %1682 = vst.msk [vmem:[%s1680 + $0x4] sm:$0xf] %vm902, %v1659
      %1683 = vst.msk [vmem:[%s1680 + $0x8] sm:$0xf] %vm902, %v1661
      %1684 = vst.msk [vmem:[%s1680 + $0xc] sm:$0xf] %vm902, %v1663
      %1685 = vst.msk [vmem:[%s1680 + $0x10] sm:$0xf] %vm902, %v1665
      %1686 = vst.msk [vmem:[%s1680 + $0x14] sm:$0xf] %vm902, %v1667
      %1687 = vst.msk [vmem:[%s1680 + $0x18] sm:$0xf] %vm902, %v1669
      %1688 = vst.msk [vmem:[%s1680 + $0x1c] sm:$0xf] %vm902, %v1671
      %1689 = vrot.lane.b32.xlu0 %v886, 64
      %v1690 = vpop.permute.xlu0 %1689
      %1691 = vrot.lane.b32.xlu0 %v887, 64
      %v1692 = vpop.permute.xlu0 %1691
      %1693 = vrot.lane.b32.xlu0 %v888, 64
      %v1694 = vpop.permute.xlu0 %1693
      %1695 = vrot.lane.b32.xlu0 %v889, 64
      %v1696 = vpop.permute.xlu0 %1695
      %1697 = vrot.lane.b32.xlu0 %v890, 64
      %v1698 = vpop.permute.xlu0 %1697
      %1699 = vrot.lane.b32.xlu0 %v891, 64
      %v1700 = vpop.permute.xlu0 %1699
      %1701 = vrot.lane.b32.xlu0 %v892, 64
      %v1702 = vpop.permute.xlu0 %1701
      %1703 = vrot.lane.b32.xlu0 %v893, 64
      %v1704 = vpop.permute.xlu0 %1703
      %s1713 = scalar_lea.vmem %s252, 128
      %1714 = vst.msk [vmem:[%s1713] sm:$0xf] %vm902, %v1690
      %1715 = vst.msk [vmem:[%s1713 + $0x4] sm:$0xf] %vm902, %v1692
      %1716 = vst.msk [vmem:[%s1713 + $0x8] sm:$0xf] %vm902, %v1694
      %1717 = vst.msk [vmem:[%s1713 + $0xc] sm:$0xf] %vm902, %v1696
      %1718 = vst.msk [vmem:[%s1713 + $0x10] sm:$0xf] %vm902, %v1698
      %1719 = vst.msk [vmem:[%s1713 + $0x14] sm:$0xf] %vm902, %v1700
      %1720 = vst.msk [vmem:[%s1713 + $0x18] sm:$0xf] %vm902, %v1702
      %1721 = vst.msk [vmem:[%s1713 + $0x1c] sm:$0xf] %vm902, %v1704
      %1722 = vrot.lane.b32.xlu0 %v923, 64
      %v1723 = vpop.permute.xlu0 %1722
      %1724 = vrot.lane.b32.xlu0 %v924, 64
      %v1725 = vpop.permute.xlu0 %1724
      %1726 = vrot.lane.b32.xlu0 %v925, 64
      %v1727 = vpop.permute.xlu0 %1726
      %1728 = vrot.lane.b32.xlu0 %v926, 64
      %v1729 = vpop.permute.xlu0 %1728
      %1730 = vrot.lane.b32.xlu0 %v927, 64
      %v1731 = vpop.permute.xlu0 %1730
      %1732 = vrot.lane.b32.xlu0 %v928, 64
      %v1733 = vpop.permute.xlu0 %1732
      %1734 = vrot.lane.b32.xlu0 %v929, 64
      %v1735 = vpop.permute.xlu0 %1734
      %1736 = vrot.lane.b32.xlu0 %v930, 64
      %v1737 = vpop.permute.xlu0 %1736
      %s1746 = scalar_lea.vmem %s257, 128
      %1747 = vst.msk [vmem:[%s1746] sm:$0xf] %vm902, %v1723
      %1748 = vst.msk [vmem:[%s1746 + $0x4] sm:$0xf] %vm902, %v1725
      %1749 = vst.msk [vmem:[%s1746 + $0x8] sm:$0xf] %vm902, %v1727
      %1750 = vst.msk [vmem:[%s1746 + $0xc] sm:$0xf] %vm902, %v1729
      %1751 = vst.msk [vmem:[%s1746 + $0x10] sm:$0xf] %vm902, %v1731
      %1752 = vst.msk [vmem:[%s1746 + $0x14] sm:$0xf] %vm902, %v1733
      %1753 = vst.msk [vmem:[%s1746 + $0x18] sm:$0xf] %vm902, %v1735
      %1754 = vst.msk [vmem:[%s1746 + $0x1c] sm:$0xf] %vm902, %v1737
      %1755 = vrot.lane.b32.xlu0 %v959, 64
      %v1756 = vpop.permute.xlu0 %1755
      %1757 = vrot.lane.b32.xlu0 %v960, 64
      %v1758 = vpop.permute.xlu0 %1757
      %1759 = vrot.lane.b32.xlu0 %v961, 64
      %v1760 = vpop.permute.xlu0 %1759
      %1761 = vrot.lane.b32.xlu0 %v962, 64
      %v1762 = vpop.permute.xlu0 %1761
      %1763 = vrot.lane.b32.xlu0 %v963, 64
      %v1764 = vpop.permute.xlu0 %1763
      %1765 = vrot.lane.b32.xlu0 %v964, 64
      %v1766 = vpop.permute.xlu0 %1765
      %1767 = vrot.lane.b32.xlu0 %v965, 64
      %v1768 = vpop.permute.xlu0 %1767
      %1769 = vrot.lane.b32.xlu0 %v966, 64
      %v1770 = vpop.permute.xlu0 %1769
      %s1779 = scalar_lea.vmem %s252, 320
      %1780 = vst.msk [vmem:[%s1779] sm:$0xf] %vm902, %v1756
      %1781 = vst.msk [vmem:[%s1779 + $0x4] sm:$0xf] %vm902, %v1758
      %1782 = vst.msk [vmem:[%s1779 + $0x8] sm:$0xf] %vm902, %v1760
      %1783 = vst.msk [vmem:[%s1779 + $0xc] sm:$0xf] %vm902, %v1762
      %1784 = vst.msk [vmem:[%s1779 + $0x10] sm:$0xf] %vm902, %v1764
      %1785 = vst.msk [vmem:[%s1779 + $0x14] sm:$0xf] %vm902, %v1766
      %1786 = vst.msk [vmem:[%s1779 + $0x18] sm:$0xf] %vm902, %v1768
      %1787 = vst.msk [vmem:[%s1779 + $0x1c] sm:$0xf] %vm902, %v1770
      %1788 = vrot.lane.b32.xlu0 %v996, 64
      %v1789 = vpop.permute.xlu0 %1788
      %1790 = vrot.lane.b32.xlu0 %v997, 64
      %v1791 = vpop.permute.xlu0 %1790
      %1792 = vrot.lane.b32.xlu0 %v998, 64
      %v1793 = vpop.permute.xlu0 %1792
      %1794 = vrot.lane.b32.xlu0 %v999, 64
      %v1795 = vpop.permute.xlu0 %1794
      %1796 = vrot.lane.b32.xlu0 %v1000, 64
      %v1797 = vpop.permute.xlu0 %1796
      %1798 = vrot.lane.b32.xlu0 %v1001, 64
      %v1799 = vpop.permute.xlu0 %1798
      %1800 = vrot.lane.b32.xlu0 %v1002, 64
      %v1801 = vpop.permute.xlu0 %1800
      %1802 = vrot.lane.b32.xlu0 %v1003, 64
      %v1803 = vpop.permute.xlu0 %1802
      %s1812 = scalar_lea.vmem %s257, 320
      %1813 = vst.msk [vmem:[%s1812] sm:$0xf] %vm902, %v1789
      %1814 = vst.msk [vmem:[%s1812 + $0x4] sm:$0xf] %vm902, %v1791
      %1815 = vst.msk [vmem:[%s1812 + $0x8] sm:$0xf] %vm902, %v1793
      %1816 = vst.msk [vmem:[%s1812 + $0xc] sm:$0xf] %vm902, %v1795
      %1817 = vst.msk [vmem:[%s1812 + $0x10] sm:$0xf] %vm902, %v1797
      %1818 = vst.msk [vmem:[%s1812 + $0x14] sm:$0xf] %vm902, %v1799
      %1819 = vst.msk [vmem:[%s1812 + $0x18] sm:$0xf] %vm902, %v1801
      %1820 = vst.msk [vmem:[%s1812 + $0x1c] sm:$0xf] %vm902, %v1803
      %1821 = vrot.lane.b32.xlu0 %v1033, 64
      %v1822 = vpop.permute.xlu0 %1821
      %1823 = vrot.lane.b32.xlu0 %v1034, 64
      %v1824 = vpop.permute.xlu0 %1823
      %1825 = vrot.lane.b32.xlu0 %v1035, 64
      %v1826 = vpop.permute.xlu0 %1825
      %1827 = vrot.lane.b32.xlu0 %v1036, 64
      %v1828 = vpop.permute.xlu0 %1827
      %1829 = vrot.lane.b32.xlu0 %v1037, 64
      %v1830 = vpop.permute.xlu0 %1829
      %1831 = vrot.lane.b32.xlu0 %v1038, 64
      %v1832 = vpop.permute.xlu0 %1831
      %1833 = vrot.lane.b32.xlu0 %v1039, 64
      %v1834 = vpop.permute.xlu0 %1833
      %1835 = vrot.lane.b32.xlu0 %v1040, 64
      %v1836 = vpop.permute.xlu0 %1835
      %s1845 = scalar_lea.vmem %s252, 512
      %1846 = vst.msk [vmem:[%s1845] sm:$0xf] %vm902, %v1822
      %1847 = vst.msk [vmem:[%s1845 + $0x4] sm:$0xf] %vm902, %v1824
      %1848 = vst.msk [vmem:[%s1845 + $0x8] sm:$0xf] %vm902, %v1826
      %1849 = vst.msk [vmem:[%s1845 + $0xc] sm:$0xf] %vm902, %v1828
      %1850 = vst.msk [vmem:[%s1845 + $0x10] sm:$0xf] %vm902, %v1830
      %1851 = vst.msk [vmem:[%s1845 + $0x14] sm:$0xf] %vm902, %v1832
      %1852 = vst.msk [vmem:[%s1845 + $0x18] sm:$0xf] %vm902, %v1834
      %1853 = vst.msk [vmem:[%s1845 + $0x1c] sm:$0xf] %vm902, %v1836
      %1854 = vrot.lane.b32.xlu0 %v1070, 64
      %v1855 = vpop.permute.xlu0 %1854
      %1856 = vrot.lane.b32.xlu0 %v1071, 64
      %v1857 = vpop.permute.xlu0 %1856
      %1858 = vrot.lane.b32.xlu0 %v1072, 64
      %v1859 = vpop.permute.xlu0 %1858
      %1860 = vrot.lane.b32.xlu0 %v1073, 64
      %v1861 = vpop.permute.xlu0 %1860
      %1862 = vrot.lane.b32.xlu0 %v1074, 64
      %v1863 = vpop.permute.xlu0 %1862
      %1864 = vrot.lane.b32.xlu0 %v1075, 64
      %v1865 = vpop.permute.xlu0 %1864
      %1866 = vrot.lane.b32.xlu0 %v1076, 64
      %v1867 = vpop.permute.xlu0 %1866
      %1868 = vrot.lane.b32.xlu0 %v1077, 64
      %v1869 = vpop.permute.xlu0 %1868
      %s1878 = scalar_lea.vmem %s257, 512
      %1879 = vst.msk [vmem:[%s1878] sm:$0xf] %vm902, %v1855
      %1880 = vst.msk [vmem:[%s1878 + $0x4] sm:$0xf] %vm902, %v1857
      %1881 = vst.msk [vmem:[%s1878 + $0x8] sm:$0xf] %vm902, %v1859
      %1882 = vst.msk [vmem:[%s1878 + $0xc] sm:$0xf] %vm902, %v1861
      %1883 = vst.msk [vmem:[%s1878 + $0x10] sm:$0xf] %vm902, %v1863
      %1884 = vst.msk [vmem:[%s1878 + $0x14] sm:$0xf] %vm902, %v1865
      %1885 = vst.msk [vmem:[%s1878 + $0x18] sm:$0xf] %vm902, %v1867
      %1886 = vst.msk [vmem:[%s1878 + $0x1c] sm:$0xf] %vm902, %v1869
      %1887 = vrot.lane.b32.xlu0 %v886, 48
      %v1888 = vpop.permute.xlu0 %1887
      %1889 = vrot.lane.b32.xlu0 %v887, 48
      %v1890 = vpop.permute.xlu0 %1889
      %1891 = vrot.lane.b32.xlu0 %v888, 48
      %v1892 = vpop.permute.xlu0 %1891
      %1893 = vrot.lane.b32.xlu0 %v889, 48
      %v1894 = vpop.permute.xlu0 %1893
      %1895 = vrot.lane.b32.xlu0 %v890, 48
      %v1896 = vpop.permute.xlu0 %1895
      %1897 = vrot.lane.b32.xlu0 %v891, 48
      %v1898 = vpop.permute.xlu0 %1897
      %1899 = vrot.lane.b32.xlu0 %v892, 48
      %v1900 = vpop.permute.xlu0 %1899
      %1901 = vrot.lane.b32.xlu0 %v893, 48
      %v1902 = vpop.permute.xlu0 %1901
      %s1911 = scalar_lea.vmem %s252, 160
      %1912 = vst.msk [vmem:[%s1911] sm:$0xf] %vm902, %v1888
      %1913 = vst.msk [vmem:[%s1911 + $0x4] sm:$0xf] %vm902, %v1890
      %1914 = vst.msk [vmem:[%s1911 + $0x8] sm:$0xf] %vm902, %v1892
      %1915 = vst.msk [vmem:[%s1911 + $0xc] sm:$0xf] %vm902, %v1894
      %1916 = vst.msk [vmem:[%s1911 + $0x10] sm:$0xf] %vm902, %v1896
      %1917 = vst.msk [vmem:[%s1911 + $0x14] sm:$0xf] %vm902, %v1898
      %1918 = vst.msk [vmem:[%s1911 + $0x18] sm:$0xf] %vm902, %v1900
      %1919 = vst.msk [vmem:[%s1911 + $0x1c] sm:$0xf] %vm902, %v1902
      %1920 = vrot.lane.b32.xlu0 %v923, 48
      %v1921 = vpop.permute.xlu0 %1920
      %1922 = vrot.lane.b32.xlu0 %v924, 48
      %v1923 = vpop.permute.xlu0 %1922
      %1924 = vrot.lane.b32.xlu0 %v925, 48
      %v1925 = vpop.permute.xlu0 %1924
      %1926 = vrot.lane.b32.xlu0 %v926, 48
      %v1927 = vpop.permute.xlu0 %1926
      %1928 = vrot.lane.b32.xlu0 %v927, 48
      %v1929 = vpop.permute.xlu0 %1928
      %1930 = vrot.lane.b32.xlu0 %v928, 48
      %v1931 = vpop.permute.xlu0 %1930
      %1932 = vrot.lane.b32.xlu0 %v929, 48
      %v1933 = vpop.permute.xlu0 %1932
      %1934 = vrot.lane.b32.xlu0 %v930, 48
      %v1935 = vpop.permute.xlu0 %1934
      %s1944 = scalar_lea.vmem %s257, 160
      %1945 = vst.msk [vmem:[%s1944] sm:$0xf] %vm902, %v1921
      %1946 = vst.msk [vmem:[%s1944 + $0x4] sm:$0xf] %vm902, %v1923
      %1947 = vst.msk [vmem:[%s1944 + $0x8] sm:$0xf] %vm902, %v1925
      %1948 = vst.msk [vmem:[%s1944 + $0xc] sm:$0xf] %vm902, %v1927
      %1949 = vst.msk [vmem:[%s1944 + $0x10] sm:$0xf] %vm902, %v1929
      %1950 = vst.msk [vmem:[%s1944 + $0x14] sm:$0xf] %vm902, %v1931
      %1951 = vst.msk [vmem:[%s1944 + $0x18] sm:$0xf] %vm902, %v1933
      %1952 = vst.msk [vmem:[%s1944 + $0x1c] sm:$0xf] %vm902, %v1935
      %1953 = vrot.lane.b32.xlu0 %v959, 48
      %v1954 = vpop.permute.xlu0 %1953
      %1955 = vrot.lane.b32.xlu0 %v960, 48
      %v1956 = vpop.permute.xlu0 %1955
      %1957 = vrot.lane.b32.xlu0 %v961, 48
      %v1958 = vpop.permute.xlu0 %1957
      %1959 = vrot.lane.b32.xlu0 %v962, 48
      %v1960 = vpop.permute.xlu0 %1959
      %1961 = vrot.lane.b32.xlu0 %v963, 48
      %v1962 = vpop.permute.xlu0 %1961
      %1963 = vrot.lane.b32.xlu0 %v964, 48
      %v1964 = vpop.permute.xlu0 %1963
      %1965 = vrot.lane.b32.xlu0 %v965, 48
      %v1966 = vpop.permute.xlu0 %1965
      %1967 = vrot.lane.b32.xlu0 %v966, 48
      %v1968 = vpop.permute.xlu0 %1967
      %s1977 = scalar_lea.vmem %s252, 352
      %1978 = vst.msk [vmem:[%s1977] sm:$0xf] %vm902, %v1954
      %1979 = vst.msk [vmem:[%s1977 + $0x4] sm:$0xf] %vm902, %v1956
      %1980 = vst.msk [vmem:[%s1977 + $0x8] sm:$0xf] %vm902, %v1958
      %1981 = vst.msk [vmem:[%s1977 + $0xc] sm:$0xf] %vm902, %v1960
      %1982 = vst.msk [vmem:[%s1977 + $0x10] sm:$0xf] %vm902, %v1962
      %1983 = vst.msk [vmem:[%s1977 + $0x14] sm:$0xf] %vm902, %v1964
      %1984 = vst.msk [vmem:[%s1977 + $0x18] sm:$0xf] %vm902, %v1966
      %1985 = vst.msk [vmem:[%s1977 + $0x1c] sm:$0xf] %vm902, %v1968
      %1986 = vrot.lane.b32.xlu0 %v996, 48
      %v1987 = vpop.permute.xlu0 %1986
      %1988 = vrot.lane.b32.xlu0 %v997, 48
      %v1989 = vpop.permute.xlu0 %1988
      %1990 = vrot.lane.b32.xlu0 %v998, 48
      %v1991 = vpop.permute.xlu0 %1990
      %1992 = vrot.lane.b32.xlu0 %v999, 48
      %v1993 = vpop.permute.xlu0 %1992
      %1994 = vrot.lane.b32.xlu0 %v1000, 48
      %v1995 = vpop.permute.xlu0 %1994
      %1996 = vrot.lane.b32.xlu0 %v1001, 48
      %v1997 = vpop.permute.xlu0 %1996
      %1998 = vrot.lane.b32.xlu0 %v1002, 48
      %v1999 = vpop.permute.xlu0 %1998
      %2000 = vrot.lane.b32.xlu0 %v1003, 48
      %v2001 = vpop.permute.xlu0 %2000
      %s2010 = scalar_lea.vmem %s257, 352
      %2011 = vst.msk [vmem:[%s2010] sm:$0xf] %vm902, %v1987
      %2012 = vst.msk [vmem:[%s2010 + $0x4] sm:$0xf] %vm902, %v1989
      %2013 = vst.msk [vmem:[%s2010 + $0x8] sm:$0xf] %vm902, %v1991
      %2014 = vst.msk [vmem:[%s2010 + $0xc] sm:$0xf] %vm902, %v1993
      %2015 = vst.msk [vmem:[%s2010 + $0x10] sm:$0xf] %vm902, %v1995
      %2016 = vst.msk [vmem:[%s2010 + $0x14] sm:$0xf] %vm902, %v1997
      %2017 = vst.msk [vmem:[%s2010 + $0x18] sm:$0xf] %vm902, %v1999
      %2018 = vst.msk [vmem:[%s2010 + $0x1c] sm:$0xf] %vm902, %v2001
      %2019 = vrot.lane.b32.xlu0 %v1033, 48
      %v2020 = vpop.permute.xlu0 %2019
      %2021 = vrot.lane.b32.xlu0 %v1034, 48
      %v2022 = vpop.permute.xlu0 %2021
      %2023 = vrot.lane.b32.xlu0 %v1035, 48
      %v2024 = vpop.permute.xlu0 %2023
      %2025 = vrot.lane.b32.xlu0 %v1036, 48
      %v2026 = vpop.permute.xlu0 %2025
      %2027 = vrot.lane.b32.xlu0 %v1037, 48
      %v2028 = vpop.permute.xlu0 %2027
      %2029 = vrot.lane.b32.xlu0 %v1038, 48
      %v2030 = vpop.permute.xlu0 %2029
      %2031 = vrot.lane.b32.xlu0 %v1039, 48
      %v2032 = vpop.permute.xlu0 %2031
      %2033 = vrot.lane.b32.xlu0 %v1040, 48
      %v2034 = vpop.permute.xlu0 %2033
      %s2043 = scalar_lea.vmem %s252, 544
      %2044 = vst.msk [vmem:[%s2043] sm:$0xf] %vm902, %v2020
      %2045 = vst.msk [vmem:[%s2043 + $0x4] sm:$0xf] %vm902, %v2022
      %2046 = vst.msk [vmem:[%s2043 + $0x8] sm:$0xf] %vm902, %v2024
      %2047 = vst.msk [vmem:[%s2043 + $0xc] sm:$0xf] %vm902, %v2026
      %2048 = vst.msk [vmem:[%s2043 + $0x10] sm:$0xf] %vm902, %v2028
      %2049 = vst.msk [vmem:[%s2043 + $0x14] sm:$0xf] %vm902, %v2030
      %2050 = vst.msk [vmem:[%s2043 + $0x18] sm:$0xf] %vm902, %v2032
      %2051 = vst.msk [vmem:[%s2043 + $0x1c] sm:$0xf] %vm902, %v2034
      %2052 = vrot.lane.b32.xlu0 %v1070, 48
      %v2053 = vpop.permute.xlu0 %2052
      %2054 = vrot.lane.b32.xlu0 %v1071, 48
      %v2055 = vpop.permute.xlu0 %2054
      %2056 = vrot.lane.b32.xlu0 %v1072, 48
      %v2057 = vpop.permute.xlu0 %2056
      %2058 = vrot.lane.b32.xlu0 %v1073, 48
      %v2059 = vpop.permute.xlu0 %2058
      %2060 = vrot.lane.b32.xlu0 %v1074, 48
      %v2061 = vpop.permute.xlu0 %2060
      %2062 = vrot.lane.b32.xlu0 %v1075, 48
      %v2063 = vpop.permute.xlu0 %2062
      %2064 = vrot.lane.b32.xlu0 %v1076, 48
      %v2065 = vpop.permute.xlu0 %2064
      %2066 = vrot.lane.b32.xlu0 %v1077, 48
      %v2067 = vpop.permute.xlu0 %2066
      %s2076 = scalar_lea.vmem %s257, 544
      %2077 = vst.msk [vmem:[%s2076] sm:$0xf] %vm902, %v2053
      %2078 = vst.msk [vmem:[%s2076 + $0x4] sm:$0xf] %vm902, %v2055
      %2079 = vst.msk [vmem:[%s2076 + $0x8] sm:$0xf] %vm902, %v2057
      %2080 = vst.msk [vmem:[%s2076 + $0xc] sm:$0xf] %vm902, %v2059
      %2081 = vst.msk [vmem:[%s2076 + $0x10] sm:$0xf] %vm902, %v2061
      %2082 = vst.msk [vmem:[%s2076 + $0x14] sm:$0xf] %vm902, %v2063
      %2083 = vst.msk [vmem:[%s2076 + $0x18] sm:$0xf] %vm902, %v2065
      %2084 = vst.msk [vmem:[%s2076 + $0x1c] sm:$0xf] %vm902, %v2067
      %p2085 = scmp.lt.s32.totalorder %s17, 1
      %s2086 = scalar_select %p2085, %s17, 1
      %s2087 = smul.addr %s2086, 144
      %s2088 = smul.addr %s2087, 4
      %s2089 = scalar_lea.vmem %s4, %s2088
      %p2090 = scmp.lt.s32.totalorder %s17, 1
      %s2091 = scalar_select %p2090, %s17, 1
      %s2092 = smul.addr %s2091, 144
      %s2093 = smul.addr %s2092, 4
      %s2094 = scalar_lea.vmem %s5, %s2093
      // Predicated region
      $region37: #{inverse_transform_2d.2} parent=35 // pred_check
        %p2095 = pneg %p129
      $region38: #{inverse_transform_2d.2} parent=35 // pred_check_branch
        %2097 = sbr.rel (%p2095) target = $region40
      $region39: #{inverse_transform_2d.2} parent=35 // pred_region
        _
      $region40: #{inverse_transform_2d.2} parent=35 // pred_fallthru
        _
      // Predicated region
      $region41: #{inverse_transform_2d.2} parent=35 // pred_check
        %p2098 = pneg %p155
      $region42: #{inverse_transform_2d.2} parent=35 // pred_check_branch
        %2100 = sbr.rel (%p2098) target = $region44
      $region43: #{inverse_transform_2d.2} parent=35 // pred_region
        _
      $region44: #{inverse_transform_2d.2} parent=35 // pred_fallthru
        _
    $region36: #{inverse_transform_2d.2} parent=5 // pred_fallthru
      _
    %p2101 = scmp.le.s32.totalorder 2, %s12
    // Predicated region
    $region45: #{inverse_transform_2d.2} parent=5 // pred_check
      %p2102 = pneg %p2101
    $region46: #{inverse_transform_2d.2} parent=5 // pred_check_branch
      %2104 = sbr.rel (%p2102) target = $region48
    $region47: #{inverse_transform_2d.2} parent=5 // pred_region
      %s2105 = ssub.s32 %s12, 2
      // Predicated region
      $region49: #{inverse_transform_2d.2} parent=47 // pred_check
        %p2106 = pneg %p135
      $region50: #{inverse_transform_2d.2} parent=47 // pred_check_branch
        %2108 = sbr.rel (%p2106) target = $region52
      $region51: #{inverse_transform_2d.2} parent=47 // pred_region
        %p2109 = scmp.lt.s32.totalorder %s18, 1
        %s2110 = scalar_select %p2109, %s18, 1
        %s2111 = smul.addr %s2110, 144
        %s2112 = smul.addr %s2111, 4
        %s2113 = scalar_lea.vmem %s4, %s2112
      $region52: #{inverse_transform_2d.2} parent=47 // pred_fallthru
        _
      // Predicated region
      $region53: #{inverse_transform_2d.2} parent=47 // pred_check
        %p2114 = pneg %p161
      $region54: #{inverse_transform_2d.2} parent=47 // pred_check_branch
        %2116 = sbr.rel (%p2114) target = $region56
      $region55: #{inverse_transform_2d.2} parent=47 // pred_region
        %p2117 = scmp.lt.s32.totalorder %s18, 1
        %s2118 = scalar_select %p2117, %s18, 1
        %s2119 = smul.addr %s2118, 144
        %s2120 = smul.addr %s2119, 4
        %s2121 = scalar_lea.vmem %s5, %s2120
      $region56: #{inverse_transform_2d.2} parent=47 // pred_fallthru
        _
    $region48: #{inverse_transform_2d.2} parent=5 // pred_fallthru
      _
  $region6: #{inverse_transform_2d.2} parent=0 // loop_footer
    %s16 = sadd.s32 1, %s12
  $region7: #{inverse_transform_2d.2} parent=0 // loop_footer_branch
    %11 = sbr.rel target = $region3
  $region8: #{inverse_transform_2d.2} parent=0 // loop_exit
    _

</llo_original>
